<compile_context>
chip_gen: v7x
topology: tpu7x:2x2x1
jax: 0.10.0
libtpu: 0.0.40
codegen_flags: <defaults>
</compile_context>

<pallas_src>
import functools
import math

import jax
import jax.numpy as jnp
from jax.experimental import pallas as pl
from jax.experimental.pallas import tpu as pltpu

LANE = 128
BN_EPS = 1e-5


def _round_up(a, b):
    return (a + b - 1) // b * b


def _choose_th(H, W, TN, budget_bytes=128 * 1024):
    """Row-strip height: keep the f32 accumulator <= ~128 KiB (stays in vregs),
    make it divide H exactly (stats correctness), prefer >= 2 strips so the
    pipeline / dual TensorCores have work to overlap."""
    max_rows = max(1, budget_bytes // max(1, W * TN * 4))
    th = min(H, max_rows)
    while H % th:
        th -= 1
    if th == H and H >= 2:
        half = H // 2
        while H % half:
            half -= 1
        th = half
    return th


# ---------------------------------------------------------------------------
# Pallas kernel 1: dilated 3x3 conv on the kw-pre-stacked operand.
# 3 deep matmuls (K = 3*cin_p) per strip, f32 accumulation in vregs, bf16
# output, fused BN batch statistics (sum, sum^2) in f32.
# ---------------------------------------------------------------------------
def _conv3x3_stats_kernel(xs_ref, w_ref, y_ref, stats_ref, *, TH, W, dil, k3cin, TN):
    # xs_ref:    (1, H+2*dil, W, 3*cin_p) bf16, full per-image (constant along strips)
    # w_ref:     (3, 3*cin_p, TN)         bf16, kh-major, (kw,cin) folded into K
    # y_ref:     (1, TH, W, TN)           bf16 output strip
    # stats_ref: (1, 1, 2, TN)            f32  [sum, sum_sq] over this strip
    s = pl.program_id(1)
    row0 = pl.multiple_of(s * TH, TH)

    # Bounded accumulator (<= ~128 KiB f32) held in vregs across the 3 taps.
    acc = jnp.zeros((TH * W, TN), jnp.float32)
    for kh in range(3):                       # fully unrolled, static
        # Contiguous major-axis (row) slice: no lane/sublane compaction copy.
        lhs = xs_ref[0, pl.ds(row0 + kh * dil, TH), :, :].reshape(TH * W, k3cin)
        acc = acc + jnp.dot(lhs, w_ref[kh], preferred_element_type=jnp.float32)

    # bf16 output halves the inter-kernel HBM traffic; stats stay f32.
    y_ref[0] = acc.reshape(TH, W, TN).astype(y_ref.dtype)
    stats_ref[0, 0, 0:1, :] = jnp.sum(acc, axis=0, keepdims=True)
    stats_ref[0, 0, 1:2, :] = jnp.sum(acc * acc, axis=0, keepdims=True)


def conv3x3_stats(xs, w, *, H, W, dil):
    """xs: (N, H+2*dil, W, 3*cin_p) bf16 kw-stacked, spatially padded operand.
       w:  (3, 3*cin_p, cout_p)     bf16 kh-major weights (bias folded into BN).
       Returns:
         y     (N, H, W, cout_p)  bf16 conv output
         stats (N, S, 2, cout_p)  f32 per-(image, strip) [sum, sum_sq]
    """
    N, Hs, _, k3cin = xs.shape
    _, _, cout_p = w.shape

    TN = 256 if cout_p % 256 == 0 else 128    # MXU output width (v6e/v7x); 128 ok on v5e
    TH = _choose_th(H, W, TN)
    S = H // TH
    J = cout_p // TN

    kern = functools.partial(_conv3x3_stats_kernel,
                             TH=TH, W=W, dil=dil, k3cin=k3cin, TN=TN)

    # Explicit VMEM sizing (double-buffered blocks) + headroom, clamped to the
    # v7x 64 MiB physical budget.
    est = 2 * (Hs * W * k3cin * 2          # xs block (bf16)
               + 3 * k3cin * TN * 2        # weight tile (bf16)
               + TH * W * TN * 2           # y strip (bf16)
               + 2 * TN * 4)               # stats
    vmem_limit = int(min(64 * 1024 * 1024, max(est + (2 << 20), 4 << 20)))

    flops = 2 * N * H * W * 3 * k3cin * cout_p
    bytes_accessed = (xs.size * 2 + w.size * 2
                      + N * H * W * cout_p * 2 + N * S * 2 * cout_p * 4)

    y, stats = pl.pallas_call(
        kern,
        out_shape=(jax.ShapeDtypeStruct((N, H, W, cout_p), jnp.bfloat16),
                   jax.ShapeDtypeStruct((N, S, 2, cout_p), jnp.float32)),
        grid=(N, S, J),
        in_specs=[
            # Full per-image operand stays VMEM-resident (constant along s, j).
            pl.BlockSpec((1, Hs, W, k3cin), lambda n, s, j: (n, 0, 0, 0)),
            pl.BlockSpec((3, k3cin, TN), lambda n, s, j: (0, 0, j)),
        ],
        out_specs=(
            pl.BlockSpec((1, TH, W, TN), lambda n, s, j: (n, s, 0, j)),
            pl.BlockSpec((1, 1, 2, TN), lambda n, s, j: (n, s, 0, j)),
        ),
        compiler_params=pltpu.CompilerParams(
            dimension_semantics=("parallel", "parallel", "parallel"),
            vmem_limit_bytes=vmem_limit),
        cost_estimate=pl.CostEstimate(flops=flops, transcendentals=0,
                                      bytes_accessed=int(bytes_accessed)),
    )(xs, w)
    return y, stats


# ---------------------------------------------------------------------------
# Pallas kernel 2: fused BN affine + ReLU + spatial zero-pad + kw-stack.
# Reads the raw bf16 conv output once and writes the next conv's kw-stacked
# operand once (bf16); epilogue math in f32.
# ---------------------------------------------------------------------------
def _bn_relu_stack_kernel(y_ref, s_ref, t_ref, o_ref, *, H, W, C, dil):
    # y_ref: (1, H, W, C) bf16 ; s_ref/t_ref: (1, C) f32
    # o_ref: (1, H+2*dil, W, 3*C) bf16
    sc = s_ref[...].reshape(1, 1, C)
    sh = t_ref[...].reshape(1, 1, C)
    act = jnp.maximum(y_ref[0].astype(jnp.float32) * sc + sh, 0.0).astype(o_ref.dtype)

    # kw column shifts with explicit zero fill (static slices + concat).
    # TODO(synk): these sublane-offset slices could use pltpu.roll + iota mask
    # to move the shuffle onto the XLU slot instead of a compaction copy.
    zcol = jnp.zeros((H, dil, C), o_ref.dtype)
    left = jnp.concatenate([zcol, act[:, :W - dil, :]], axis=1)    # kw=0: col c-d
    mid = act                                                      # kw=1: col c
    right = jnp.concatenate([act[:, dil:, :], zcol], axis=1)       # kw=2: col c+d
    stacked = jnp.concatenate([left, mid, right], axis=-1)         # (H, W, 3C)

    zrow = jnp.zeros((dil, W, 3 * C), o_ref.dtype)
    o_ref[0, 0:dil] = zrow                      # top spatial zero padding
    o_ref[0, dil:H + dil] = stacked
    o_ref[0, H + dil:H + 2 * dil] = zrow        # bottom spatial zero padding


def bn_relu_stack_pad(y, scale, shift, *, dil):
    """y: (N, H, W, C) bf16; scale/shift: (C,) f32 ->
       (N, H+2*dil, W, 3*C) bf16 kw-stacked, padded operand for the next conv."""
    N, H, W, C = y.shape
    Hs = H + 2 * dil
    kern = functools.partial(_bn_relu_stack_kernel, H=H, W=W, C=C, dil=dil)
    # TODO(synk): for large images this kernel should also be row-strip tiled
    # (needs halo-aware output offsets); whole-image blocks are fine here.
    return pl.pallas_call(
        kern,
        out_shape=jax.ShapeDtypeStruct((N, Hs, W, 3 * C), jnp.bfloat16),
        grid=(N,),
        in_specs=[
            pl.BlockSpec((1, H, W, C), lambda n: (n, 0, 0, 0)),
            pl.BlockSpec((1, C), lambda n: (0, 0)),
            pl.BlockSpec((1, C), lambda n: (0, 0)),
        ],
        out_specs=pl.BlockSpec((1, Hs, W, 3 * C), lambda n: (n, 0, 0, 0)),
        compiler_params=pltpu.CompilerParams(dimension_semantics=("parallel",)),
    )(y, scale.reshape(1, C), shift.reshape(1, C))


# ---------------------------------------------------------------------------
# Pallas kernel 3: final BN affine + ReLU (lane-dense, 512-1024 row tiles,
# f32 epilogue math, f32 output).
# ---------------------------------------------------------------------------
def _affine_relu_kernel(x_ref, s_ref, t_ref, o_ref):
    x = x_ref[...].astype(jnp.float32)
    y = x * s_ref[...] + t_ref[...]
    o_ref[...] = jnp.maximum(y, 0.0).astype(o_ref.dtype)


def affine_relu(x, scale, shift, out_dtype):
    """x: (M, Cp) bf16/f32, scale/shift: (Cp,) f32 -> relu(x*scale + shift)."""
    M, Cp = x.shape
    Mp = _round_up(max(M, 8), 8)
    xp = x if Mp == M else jnp.pad(x, ((0, Mp - M), (0, 0)))

    TM = Mp
    for cand in (1024, 512, 256, 128, 64, 32, 16, 8):
        if Mp % cand == 0:
            TM = cand
            break

    out = pl.pallas_call(
        _affine_relu_kernel,
        out_shape=jax.ShapeDtypeStruct((Mp, Cp), out_dtype),
        grid=(Mp // TM,),
        in_specs=[
            pl.BlockSpec((TM, Cp), lambda i: (i, 0)),
            pl.BlockSpec((1, Cp), lambda i: (0, 0)),
            pl.BlockSpec((1, Cp), lambda i: (0, 0)),
        ],
        out_specs=pl.BlockSpec((TM, Cp), lambda i: (i, 0)),
        compiler_params=pltpu.CompilerParams(
            dimension_semantics=("parallel",)),
    )(xp, scale.reshape(1, Cp), shift.reshape(1, Cp))
    return out if Mp == M else out[:M]


# ---------------------------------------------------------------------------
# glue: kw stacking for the external input, BN scale/shift, weight layout
# ---------------------------------------------------------------------------
def kw_stack_pad(x, dil):
    """(N, H, W, C) -> (N, H+2d, W, 3C):  out[n,r,c,kw*C+ch] = x_pad[n,r,c+kw*d,ch]."""
    N, H, W, C = x.shape
    xp = jnp.pad(x, ((0, 0), (dil, dil), (dil, dil), (0, 0)))
    return jnp.concatenate([xp[:, :, kw * dil:kw * dil + W, :] for kw in range(3)],
                           axis=-1)


def bn_scale_shift(stats, gamma_p, beta_p, count, eps=BN_EPS):
    """stats: (N, S, 2, Cp) per-(image, strip) [sum, sum_sq] -> scale/shift.

    gamma/beta are zero-padded beyond the real channels, so padded lanes get
    scale = shift = 0 and stay exactly zero through affine + ReLU."""
    s = jnp.sum(stats, axis=(0, 1))                       # (2, Cp)
    mean = s[0] / count
    var = jnp.maximum(s[1] / count - mean * mean, 0.0)    # biased, like PyTorch
    scale = gamma_p * jax.lax.rsqrt(var + eps)
    shift = beta_p - mean * scale
    return scale, shift


def prep_weight(w_oihw, cin_p, cout_p):
    """PyTorch (Cout, Cin, 3, 3) -> kh-major (3, 3*cin_p, cout_p) bf16 with the
    (kw, cin) pair folded into the contraction dim (matches kw-stacked operand)."""
    cout, cin, kh, kw = w_oihw.shape
    w = jnp.transpose(w_oihw, (2, 3, 1, 0))               # (KH, KW, Cin, Cout)
    w = jnp.pad(w, ((0, 0), (0, 0), (0, cin_p - cin), (0, cout_p - cout)))
    return w.reshape(kh, kw * cin_p, cout_p).astype(jnp.bfloat16)


# ---------------------------------------------------------------------------
# parameter init (PyTorch Conv2d-like fan_in bounds, BN gamma=1 beta=0)
# ---------------------------------------------------------------------------
def conv_init(key, cout, cin, k):
    k1, k2 = jax.random.split(key)
    bound = 1.0 / math.sqrt(cin * k * k)
    w = jax.random.uniform(k1, (cout, cin, k, k), jnp.float32, -bound, bound)
    # Bias kept only for state-dict parity; never used in compute because the
    # training-mode BatchNorm that follows cancels it: BN(x + b) == BN(x).
    b = jax.random.uniform(k2, (cout,), jnp.float32, -bound, bound)
    return {"w": w, "b": b}


def init_double_conv2(key, in_ch, out_ch):
    k1, k2 = jax.random.split(key)
    bn = lambda c: {"gamma": jnp.ones((c,), jnp.float32),
                    "beta": jnp.zeros((c,), jnp.float32)}
    return {
        "conv1": conv_init(k1, out_ch, in_ch, 3), "bn1": bn(out_ch),
        "conv2": conv_init(k2, out_ch, out_ch, 3), "bn2": bn(out_ch),
    }


# ---------------------------------------------------------------------------
# forward
# ---------------------------------------------------------------------------
def double_conv2_forward(params, x_nchw):
    N, cin, H, W = x_nchw.shape
    cout = params["bn1"]["gamma"].shape[0]
    # TODO(synk): for stages with <~32 real channels the 128-lane padding wastes
    # MXU work; a W-on-lanes layout would be better for those tiny stages.
    cin_p = _round_up(cin, LANE)
    cout_p = _round_up(cout, LANE)
    M = N * H * W

    gamma1 = jnp.pad(params["bn1"]["gamma"], (0, cout_p - cout))
    beta1 = jnp.pad(params["bn1"]["beta"], (0, cout_p - cout))
    gamma2 = jnp.pad(params["bn2"]["gamma"], (0, cout_p - cout))
    beta2 = jnp.pad(params["bn2"]["beta"], (0, cout_p - cout))

    # NCHW -> NHWC bf16, pad channels to the 128-lane width (done once, input prep).
    x = jnp.transpose(x_nchw, (0, 2, 3, 1)).astype(jnp.bfloat16)
    x = jnp.pad(x, ((0, 0), (0, 0), (0, 0), (0, cin_p - cin)))

    # --- conv1: 3x3, padding=2, dilation=2 (+ fused BN1 batch stats) --------
    xs1 = kw_stack_pad(x, dil=2)                             # (N, H+4, W, 3*cin_p)
    w1 = prep_weight(params["conv1"]["w"], cin_p, cout_p)
    y1, st1 = conv3x3_stats(xs1, w1, H=H, W=W, dil=2)        # bf16 y1, f32 stats
    scale1, shift1 = bn_scale_shift(st1, gamma1, beta1, M)

    # --- fused BN1 affine + ReLU + pad + kw-stack -> conv2 operand ----------
    xs2 = bn_relu_stack_pad(y1, scale1, shift1, dil=3)       # (N, H+6, W, 3*cout_p)

    # --- conv2: 3x3, padding=3, dilation=3 (+ fused BN2 batch stats) --------
    w2 = prep_weight(params["conv2"]["w"], cout_p, cout_p)
    y2, st2 = conv3x3_stats(xs2, w2, H=H, W=W, dil=3)
    scale2, shift2 = bn_scale_shift(st2, gamma2, beta2, M)

    # --- final BN2 affine + ReLU (f32 output) --------------------------------
    a2 = affine_relu(y2.reshape(M, cout_p), scale2, shift2, jnp.float32)

    # Un-pad the channels once, at the very end, and go back to NCHW.
    a2 = a2.reshape(N, H, W, cout_p)[:, :, :, :cout]
    return jnp.transpose(a2, (0, 3, 1, 2))


# ---------------------------------------------------------------------------
if __name__ == "__main__":
    in_ch, out_ch = 4, 8
    N, H, W = 2, 16, 16

    key = jax.random.PRNGKey(0)
    k_params, k_x = jax.random.split(key)
    params = init_double_conv2(k_params, in_ch, out_ch)
    x = jax.random.normal(k_x, (N, in_ch, H, W), jnp.float32)

    fwd = jax.jit(double_conv2_forward)
    out = fwd(params, x)
    jax.block_until_ready(out)

    assert out.shape == (N, out_ch, H, W), out.shape
    assert bool(jnp.all(jnp.isfinite(out)))
    print("KERNEL_OK")
</pallas_src>

<mosaic_0001>
module attributes {stable_mosaic.version = 11 : i64} {
  func.func @_conv3x3_stats_kernel(%arg0: i32, %arg1: i32, %arg2: i32, %arg3: memref<1x20x16x384xbf16, #tpu.memory_space<vmem>>, %arg4: memref<3x384x128xbf16, #tpu.memory_space<vmem>>, %arg5: memref<1x8x16x128xbf16, #tpu.memory_space<vmem>>, %arg6: memref<1x1x2x128xf32, #tpu.memory_space<vmem>>) attributes {dimension_semantics = [#tpu.dimension_semantics<parallel>, #tpu.dimension_semantics<parallel>, #tpu.dimension_semantics<parallel>], iteration_bounds = array<i64: 2, 2, 1>, scalar_prefetch = 0 : i64, scratch_operands = 0 : i64, tpu.core_type = #tpu.core_type<tc>, window_params = [{transform_indices = @transform_0, window_bounds = array<i64: 1, 20, 16, 384>}, {transform_indices = @transform_1, window_bounds = array<i64: 3, 384, 128>}, {transform_indices = @transform_2, window_bounds = array<i64: 1, 8, 16, 128>}, {transform_indices = @transform_3, window_bounds = array<i64: 1, 1, 2, 128>}]} {
    %c8_i32 = arith.constant 8 : i32
    %0 = arith.muli %arg1, %c8_i32 : i32
    %1 = tpu.assume_multiple %0, 8 : i32
    %cst = arith.constant 0.000000e+00 : f32
    %2 = vector.broadcast %cst : f32 to vector<128x128xf32>
    %c0_i32 = arith.constant 0 : i32
    %3 = arith.addi %1, %c0_i32 : i32
    %c0 = arith.constant 0 : index
    %4 = arith.index_cast %3 : i32 to index
    %c0_0 = arith.constant 0 : index
    %c0_1 = arith.constant 0 : index
    %5 = vector.load %arg3[%c0, %4, %c0_0, %c0_1] : memref<1x20x16x384xbf16, #tpu.memory_space<vmem>>, vector<1x8x16x384xbf16>
    %6 = vector.shape_cast %5 : vector<1x8x16x384xbf16> to vector<8x16x384xbf16>
    %7 = vector.shape_cast %6 : vector<8x16x384xbf16> to vector<128x384xbf16>
    %c0_2 = arith.constant 0 : index
    %c0_3 = arith.constant 0 : index
    %c0_4 = arith.constant 0 : index
    %8 = vector.load %arg4[%c0_2, %c0_3, %c0_4] : memref<3x384x128xbf16, #tpu.memory_space<vmem>>, vector<1x384x128xbf16>
    %9 = vector.shape_cast %8 : vector<1x384x128xbf16> to vector<384x128xbf16>
    %cst_5 = arith.constant dense<0.000000e+00> : vector<128x128xf32>
    %10 = tpu.matmul %7, %9, %cst_5 {dimension_numbers = #tpu.dot_dimension_numbers<[1], [0], [0], [1], [0, 0, 1, 1], [], []>} : vector<128x384xbf16>, vector<384x128xbf16>, vector<128x128xf32> -> vector<128x128xf32>
    %11 = arith.addf %2, %10 : vector<128x128xf32>
    %c2_i32 = arith.constant 2 : i32
    %12 = arith.addi %1, %c2_i32 : i32
    %c0_6 = arith.constant 0 : index
    %13 = arith.index_cast %12 : i32 to index
    %c0_7 = arith.constant 0 : index
    %c0_8 = arith.constant 0 : index
    %14 = vector.load %arg3[%c0_6, %13, %c0_7, %c0_8] : memref<1x20x16x384xbf16, #tpu.memory_space<vmem>>, vector<1x8x16x384xbf16>
    %15 = vector.shape_cast %14 : vector<1x8x16x384xbf16> to vector<8x16x384xbf16>
    %16 = vector.shape_cast %15 : vector<8x16x384xbf16> to vector<128x384xbf16>
    %c1 = arith.constant 1 : index
    %c0_9 = arith.constant 0 : index
    %c0_10 = arith.constant 0 : index
    %17 = vector.load %arg4[%c1, %c0_9, %c0_10] : memref<3x384x128xbf16, #tpu.memory_space<vmem>>, vector<1x384x128xbf16>
    %18 = vector.shape_cast %17 : vector<1x384x128xbf16> to vector<384x128xbf16>
    %cst_11 = arith.constant dense<0.000000e+00> : vector<128x128xf32>
    %19 = tpu.matmul %16, %18, %cst_11 {dimension_numbers = #tpu.dot_dimension_numbers<[1], [0], [0], [1], [0, 0, 1, 1], [], []>} : vector<128x384xbf16>, vector<384x128xbf16>, vector<128x128xf32> -> vector<128x128xf32>
    %20 = arith.addf %11, %19 : vector<128x128xf32>
    %c4_i32 = arith.constant 4 : i32
    %21 = arith.addi %1, %c4_i32 : i32
    %c0_12 = arith.constant 0 : index
    %22 = arith.index_cast %21 : i32 to index
    %c0_13 = arith.constant 0 : index
    %c0_14 = arith.constant 0 : index
    %23 = vector.load %arg3[%c0_12, %22, %c0_13, %c0_14] : memref<1x20x16x384xbf16, #tpu.memory_space<vmem>>, vector<1x8x16x384xbf16>
    %24 = vector.shape_cast %23 : vector<1x8x16x384xbf16> to vector<8x16x384xbf16>
    %25 = vector.shape_cast %24 : vector<8x16x384xbf16> to vector<128x384xbf16>
    %c2 = arith.constant 2 : index
    %c0_15 = arith.constant 0 : index
    %c0_16 = arith.constant 0 : index
    %26 = vector.load %arg4[%c2, %c0_15, %c0_16] : memref<3x384x128xbf16, #tpu.memory_space<vmem>>, vector<1x384x128xbf16>
    %27 = vector.shape_cast %26 : vector<1x384x128xbf16> to vector<384x128xbf16>
    %cst_17 = arith.constant dense<0.000000e+00> : vector<128x128xf32>
    %28 = tpu.matmul %25, %27, %cst_17 {dimension_numbers = #tpu.dot_dimension_numbers<[1], [0], [0], [1], [0, 0, 1, 1], [], []>} : vector<128x384xbf16>, vector<384x128xbf16>, vector<128x128xf32> -> vector<128x128xf32>
    %29 = arith.addf %20, %28 : vector<128x128xf32>
    %30 = vector.shape_cast %29 : vector<128x128xf32> to vector<8x16x128xf32>
    %31 = arith.truncf %30 : vector<8x16x128xf32> to vector<8x16x128xbf16>
    %c0_18 = arith.constant 0 : index
    %c0_19 = arith.constant 0 : index
    %c0_20 = arith.constant 0 : index
    %c0_21 = arith.constant 0 : index
    %32 = vector.load %arg5[%c0_18, %c0_19, %c0_20, %c0_21] : memref<1x8x16x128xbf16, #tpu.memory_space<vmem>>, vector<1x8x16x128xbf16>
    %33 = vector.shape_cast %32 : vector<1x8x16x128xbf16> to vector<8x16x128xbf16>
    %34 = vector.shape_cast %31 : vector<8x16x128xbf16> to vector<1x8x16x128xbf16>
    tpu.vector_store %arg5[%c0_18, %c0_19, %c0_20, %c0_21], %34 {strides = array<i32>} : memref<1x8x16x128xbf16, #tpu.memory_space<vmem>>, vector<1x8x16x128xbf16>,
    %cst_22 = arith.constant dense<0.000000e+00> : vector<128xf32>
    %35 = vector.multi_reduction <add>, %29, %cst_22 [0] : vector<128x128xf32> to vector<128xf32>
    %36 = vector.shape_cast %35 : vector<128xf32> to vector<1x128xf32>
    %c0_23 = arith.constant 0 : index
    %c0_24 = arith.constant 0 : index
    %c0_25 = arith.constant 0 : index
    %c0_26 = arith.constant 0 : index
    %37 = vector.load %arg6[%c0_23, %c0_24, %c0_25, %c0_26] : memref<1x1x2x128xf32, #tpu.memory_space<vmem>>, vector<1x1x1x128xf32>
    %38 = vector.shape_cast %37 : vector<1x1x1x128xf32> to vector<1x128xf32>
    %39 = vector.shape_cast %36 : vector<1x128xf32> to vector<1x1x1x128xf32>
    tpu.vector_store %arg6[%c0_23, %c0_24, %c0_25, %c0_26], %39 {strides = array<i32>} : memref<1x1x2x128xf32, #tpu.memory_space<vmem>>, vector<1x1x1x128xf32>,
    %40 = arith.mulf %29, %29 : vector<128x128xf32>
    %cst_27 = arith.constant dense<0.000000e+00> : vector<128xf32>
    %41 = vector.multi_reduction <add>, %40, %cst_27 [0] : vector<128x128xf32> to vector<128xf32>
    %42 = vector.shape_cast %41 : vector<128xf32> to vector<1x128xf32>
    %c0_28 = arith.constant 0 : index
    %c0_29 = arith.constant 0 : index
    %c1_30 = arith.constant 1 : index
    %c0_31 = arith.constant 0 : index
    %43 = vector.load %arg6[%c0_28, %c0_29, %c1_30, %c0_31] : memref<1x1x2x128xf32, #tpu.memory_space<vmem>>, vector<1x1x1x128xf32>
    %44 = vector.shape_cast %43 : vector<1x1x1x128xf32> to vector<1x128xf32>
    %45 = vector.shape_cast %42 : vector<1x128xf32> to vector<1x1x1x128xf32>
    tpu.vector_store %arg6[%c0_28, %c0_29, %c1_30, %c0_31], %45 {strides = array<i32>} : memref<1x1x2x128xf32, #tpu.memory_space<vmem>>, vector<1x1x1x128xf32>,
    return
  }
  func.func @transform_0(%arg0: i32, %arg1: i32, %arg2: i32) -> (i32, i32, i32, i32) {
    %c0_i32 = arith.constant 0 : i32
    %c0_i32_0 = arith.constant 0 : i32
    %c0_i32_1 = arith.constant 0 : i32
    %c0_i32_2 = arith.constant 0 : i32
    return %arg0, %c0_i32, %c0_i32_0, %c0_i32_1 : i32, i32, i32, i32
  }
  func.func @transform_1(%arg0: i32, %arg1: i32, %arg2: i32) -> (i32, i32, i32) {
    %c0_i32 = arith.constant 0 : i32
    %c0_i32_0 = arith.constant 0 : i32
    %c0_i32_1 = arith.constant 0 : i32
    return %c0_i32, %c0_i32_0, %arg2 : i32, i32, i32
  }
  func.func @transform_2(%arg0: i32, %arg1: i32, %arg2: i32) -> (i32, i32, i32, i32) {
    %c0_i32 = arith.constant 0 : i32
    %c0_i32_0 = arith.constant 0 : i32
    return %arg0, %arg1, %c0_i32, %arg2 : i32, i32, i32, i32
  }
  func.func @transform_3(%arg0: i32, %arg1: i32, %arg2: i32) -> (i32, i32, i32, i32) {
    %c0_i32 = arith.constant 0 : i32
    %c0_i32_0 = arith.constant 0 : i32
    return %arg0, %arg1, %c0_i32, %arg2 : i32, i32, i32, i32
  }
}

module attributes {stable_mosaic.version = 11 : i64} {
  func.func @_bn_relu_stack_kernel(%arg0: i32, %arg1: memref<1x16x16x128xbf16, #tpu.memory_space<vmem>>, %arg2: memref<1x128xf32, #tpu.memory_space<vmem>>, %arg3: memref<1x128xf32, #tpu.memory_space<vmem>>, %arg4: memref<1x22x16x384xbf16, #tpu.memory_space<vmem>>) attributes {dimension_semantics = [#tpu.dimension_semantics<parallel>], iteration_bounds = array<i64: 2>, scalar_prefetch = 0 : i64, scratch_operands = 0 : i64, tpu.core_type = #tpu.core_type<tc>, window_params = [{transform_indices = @transform_0, window_bounds = array<i64: 1, 16, 16, 128>}, {pipeline_mode = #tpu.pipeline_mode<synchronous>, transform_indices = @transform_1, window_bounds = array<i64: 1, 128>}, {pipeline_mode = #tpu.pipeline_mode<synchronous>, transform_indices = @transform_2, window_bounds = array<i64: 1, 128>}, {transform_indices = @transform_3, window_bounds = array<i64: 1, 22, 16, 384>}]} {
    %c0 = arith.constant 0 : index
    %c0_0 = arith.constant 0 : index
    %0 = vector.load %arg2[%c0, %c0_0] : memref<1x128xf32, #tpu.memory_space<vmem>>, vector<1x128xf32>
    %1 = vector.shape_cast %0 : vector<1x128xf32> to vector<1x1x128xf32>
    %c0_1 = arith.constant 0 : index
    %c0_2 = arith.constant 0 : index
    %2 = vector.load %arg3[%c0_1, %c0_2] : memref<1x128xf32, #tpu.memory_space<vmem>>, vector<1x128xf32>
    %3 = vector.shape_cast %2 : vector<1x128xf32> to vector<1x1x128xf32>
    %c0_3 = arith.constant 0 : index
    %c0_4 = arith.constant 0 : index
    %c0_5 = arith.constant 0 : index
    %c0_6 = arith.constant 0 : index
    %4 = vector.load %arg1[%c0_3, %c0_4, %c0_5, %c0_6] : memref<1x16x16x128xbf16, #tpu.memory_space<vmem>>, vector<1x16x16x128xbf16>
    %5 = vector.shape_cast %4 : vector<1x16x16x128xbf16> to vector<16x16x128xbf16>
    %6 = arith.extf %5 : vector<16x16x128xbf16> to vector<16x16x128xf32>
    %7 = vector.broadcast %1 : vector<1x1x128xf32> to vector<16x16x128xf32>
    %8 = arith.mulf %6, %7 : vector<16x16x128xf32>
    %9 = vector.broadcast %3 : vector<1x1x128xf32> to vector<16x16x128xf32>
    %10 = arith.addf %8, %9 : vector<16x16x128xf32>
    %cst = arith.constant 0.000000e+00 : f32
    %11 = vector.broadcast %cst : f32 to vector<16x16x128xf32>
    %12 = arith.maximumf %10, %11 : vector<16x16x128xf32>
    %13 = arith.truncf %12 : vector<16x16x128xf32> to vector<16x16x128xbf16>
    %cst_7 = arith.constant 0.000000e+00 : bf16
    %14 = vector.broadcast %cst_7 : bf16 to vector<16x3x128xbf16>
    %15 = vector.extract_strided_slice %13 {offsets = [0, 0, 0], sizes = [16, 13, 128], strides = [1, 1, 1]} : vector<16x16x128xbf16> to vector<16x13x128xbf16>
    %16 = tpu.concatenate %14, %15 in 1 : vector<16x3x128xbf16>, vector<16x13x128xbf16> -> vector<16x16x128xbf16>
    %17 = vector.extract_strided_slice %13 {offsets = [0, 3, 0], sizes = [16, 13, 128], strides = [1, 1, 1]} : vector<16x16x128xbf16> to vector<16x13x128xbf16>
    %18 = tpu.concatenate %17, %14 in 1 : vector<16x13x128xbf16>, vector<16x3x128xbf16> -> vector<16x16x128xbf16>
    %19 = tpu.concatenate %16, %13, %18 in 2 : vector<16x16x128xbf16>, vector<16x16x128xbf16>, vector<16x16x128xbf16> -> vector<16x16x384xbf16>
    %cst_8 = arith.constant 0.000000e+00 : bf16
    %20 = vector.broadcast %cst_8 : bf16 to vector<3x16x384xbf16>
    %c0_9 = arith.constant 0 : index
    %c0_10 = arith.constant 0 : index
    %c0_11 = arith.constant 0 : index
    %c0_12 = arith.constant 0 : index
    %21 = vector.load %arg4[%c0_9, %c0_10, %c0_11, %c0_12] : memref<1x22x16x384xbf16, #tpu.memory_space<vmem>>, vector<1x3x16x384xbf16>
    %22 = vector.shape_cast %21 : vector<1x3x16x384xbf16> to vector<3x16x384xbf16>
    %23 = vector.shape_cast %20 : vector<3x16x384xbf16> to vector<1x3x16x384xbf16>
    tpu.vector_store %arg4[%c0_9, %c0_10, %c0_11, %c0_12], %23 {strides = array<i32>} : memref<1x22x16x384xbf16, #tpu.memory_space<vmem>>, vector<1x3x16x384xbf16>,
    %c0_13 = arith.constant 0 : index
    %c3 = arith.constant 3 : index
    %c0_14 = arith.constant 0 : index
    %c0_15 = arith.constant 0 : index
    %24 = vector.load %arg4[%c0_13, %c3, %c0_14, %c0_15] : memref<1x22x16x384xbf16, #tpu.memory_space<vmem>>, vector<1x16x16x384xbf16>
    %25 = vector.shape_cast %24 : vector<1x16x16x384xbf16> to vector<16x16x384xbf16>
    %26 = vector.shape_cast %19 : vector<16x16x384xbf16> to vector<1x16x16x384xbf16>
    tpu.vector_store %arg4[%c0_13, %c3, %c0_14, %c0_15], %26 {strides = array<i32>} : memref<1x22x16x384xbf16, #tpu.memory_space<vmem>>, vector<1x16x16x384xbf16>,
    %c0_16 = arith.constant 0 : index
    %c19 = arith.constant 19 : index
    %c0_17 = arith.constant 0 : index
    %c0_18 = arith.constant 0 : index
    %27 = vector.load %arg4[%c0_16, %c19, %c0_17, %c0_18] : memref<1x22x16x384xbf16, #tpu.memory_space<vmem>>, vector<1x3x16x384xbf16>
    %28 = vector.shape_cast %27 : vector<1x3x16x384xbf16> to vector<3x16x384xbf16>
    %29 = vector.shape_cast %20 : vector<3x16x384xbf16> to vector<1x3x16x384xbf16>
    tpu.vector_store %arg4[%c0_16, %c19, %c0_17, %c0_18], %29 {strides = array<i32>} : memref<1x22x16x384xbf16, #tpu.memory_space<vmem>>, vector<1x3x16x384xbf16>,
    return
  }
  func.func @transform_0(%arg0: i32) -> (i32, i32, i32, i32) {
    %c0_i32 = arith.constant 0 : i32
    %c0_i32_0 = arith.constant 0 : i32
    %c0_i32_1 = arith.constant 0 : i32
    %c0_i32_2 = arith.constant 0 : i32
    return %arg0, %c0_i32, %c0_i32_0, %c0_i32_1 : i32, i32, i32, i32
  }
  func.func @transform_1(%arg0: i32) -> (i32, i32) {
    %c0_i32 = arith.constant 0 : i32
    %c0_i32_0 = arith.constant 0 : i32
    %c0_i32_1 = arith.constant 0 : i32
    return %c0_i32, %c0_i32_0 : i32, i32
  }
  func.func @transform_2(%arg0: i32) -> (i32, i32) {
    %c0_i32 = arith.constant 0 : i32
    %c0_i32_0 = arith.constant 0 : i32
    %c0_i32_1 = arith.constant 0 : i32
    return %c0_i32, %c0_i32_0 : i32, i32
  }
  func.func @transform_3(%arg0: i32) -> (i32, i32, i32, i32) {
    %c0_i32 = arith.constant 0 : i32
    %c0_i32_0 = arith.constant 0 : i32
    %c0_i32_1 = arith.constant 0 : i32
    %c0_i32_2 = arith.constant 0 : i32
    return %arg0, %c0_i32, %c0_i32_0, %c0_i32_1 : i32, i32, i32, i32
  }
}

module attributes {stable_mosaic.version = 11 : i64} {
  func.func @_conv3x3_stats_kernel(%arg0: i32, %arg1: i32, %arg2: i32, %arg3: memref<1x22x16x384xbf16, #tpu.memory_space<vmem>>, %arg4: memref<3x384x128xbf16, #tpu.memory_space<vmem>>, %arg5: memref<1x8x16x128xbf16, #tpu.memory_space<vmem>>, %arg6: memref<1x1x2x128xf32, #tpu.memory_space<vmem>>) attributes {dimension_semantics = [#tpu.dimension_semantics<parallel>, #tpu.dimension_semantics<parallel>, #tpu.dimension_semantics<parallel>], iteration_bounds = array<i64: 2, 2, 1>, scalar_prefetch = 0 : i64, scratch_operands = 0 : i64, tpu.core_type = #tpu.core_type<tc>, window_params = [{transform_indices = @transform_0, window_bounds = array<i64: 1, 22, 16, 384>}, {transform_indices = @transform_1, window_bounds = array<i64: 3, 384, 128>}, {transform_indices = @transform_2, window_bounds = array<i64: 1, 8, 16, 128>}, {transform_indices = @transform_3, window_bounds = array<i64: 1, 1, 2, 128>}]} {
    %c8_i32 = arith.constant 8 : i32
    %0 = arith.muli %arg1, %c8_i32 : i32
    %1 = tpu.assume_multiple %0, 8 : i32
    %cst = arith.constant 0.000000e+00 : f32
    %2 = vector.broadcast %cst : f32 to vector<128x128xf32>
    %c0_i32 = arith.constant 0 : i32
    %3 = arith.addi %1, %c0_i32 : i32
    %c0 = arith.constant 0 : index
    %4 = arith.index_cast %3 : i32 to index
    %c0_0 = arith.constant 0 : index
    %c0_1 = arith.constant 0 : index
    %5 = vector.load %arg3[%c0, %4, %c0_0, %c0_1] : memref<1x22x16x384xbf16, #tpu.memory_space<vmem>>, vector<1x8x16x384xbf16>
    %6 = vector.shape_cast %5 : vector<1x8x16x384xbf16> to vector<8x16x384xbf16>
    %7 = vector.shape_cast %6 : vector<8x16x384xbf16> to vector<128x384xbf16>
    %c0_2 = arith.constant 0 : index
    %c0_3 = arith.constant 0 : index
    %c0_4 = arith.constant 0 : index
    %8 = vector.load %arg4[%c0_2, %c0_3, %c0_4] : memref<3x384x128xbf16, #tpu.memory_space<vmem>>, vector<1x384x128xbf16>
    %9 = vector.shape_cast %8 : vector<1x384x128xbf16> to vector<384x128xbf16>
    %cst_5 = arith.constant dense<0.000000e+00> : vector<128x128xf32>
    %10 = tpu.matmul %7, %9, %cst_5 {dimension_numbers = #tpu.dot_dimension_numbers<[1], [0], [0], [1], [0, 0, 1, 1], [], []>} : vector<128x384xbf16>, vector<384x128xbf16>, vector<128x128xf32> -> vector<128x128xf32>
    %11 = arith.addf %2, %10 : vector<128x128xf32>
    %c3_i32 = arith.constant 3 : i32
    %12 = arith.addi %1, %c3_i32 : i32
    %c0_6 = arith.constant 0 : index
    %13 = arith.index_cast %12 : i32 to index
    %c0_7 = arith.constant 0 : index
    %c0_8 = arith.constant 0 : index
    %14 = vector.load %arg3[%c0_6, %13, %c0_7, %c0_8] : memref<1x22x16x384xbf16, #tpu.memory_space<vmem>>, vector<1x8x16x384xbf16>
    %15 = vector.shape_cast %14 : vector<1x8x16x384xbf16> to vector<8x16x384xbf16>
    %16 = vector.shape_cast %15 : vector<8x16x384xbf16> to vector<128x384xbf16>
    %c1 = arith.constant 1 : index
    %c0_9 = arith.constant 0 : index
    %c0_10 = arith.constant 0 : index
    %17 = vector.load %arg4[%c1, %c0_9, %c0_10] : memref<3x384x128xbf16, #tpu.memory_space<vmem>>, vector<1x384x128xbf16>
    %18 = vector.shape_cast %17 : vector<1x384x128xbf16> to vector<384x128xbf16>
    %cst_11 = arith.constant dense<0.000000e+00> : vector<128x128xf32>
    %19 = tpu.matmul %16, %18, %cst_11 {dimension_numbers = #tpu.dot_dimension_numbers<[1], [0], [0], [1], [0, 0, 1, 1], [], []>} : vector<128x384xbf16>, vector<384x128xbf16>, vector<128x128xf32> -> vector<128x128xf32>
    %20 = arith.addf %11, %19 : vector<128x128xf32>
    %c6_i32 = arith.constant 6 : i32
    %21 = arith.addi %1, %c6_i32 : i32
    %c0_12 = arith.constant 0 : index
    %22 = arith.index_cast %21 : i32 to index
    %c0_13 = arith.constant 0 : index
    %c0_14 = arith.constant 0 : index
    %23 = vector.load %arg3[%c0_12, %22, %c0_13, %c0_14] : memref<1x22x16x384xbf16, #tpu.memory_space<vmem>>, vector<1x8x16x384xbf16>
    %24 = vector.shape_cast %23 : vector<1x8x16x384xbf16> to vector<8x16x384xbf16>
    %25 = vector.shape_cast %24 : vector<8x16x384xbf16> to vector<128x384xbf16>
    %c2 = arith.constant 2 : index
    %c0_15 = arith.constant 0 : index
    %c0_16 = arith.constant 0 : index
    %26 = vector.load %arg4[%c2, %c0_15, %c0_16] : memref<3x384x128xbf16, #tpu.memory_space<vmem>>, vector<1x384x128xbf16>
    %27 = vector.shape_cast %26 : vector<1x384x128xbf16> to vector<384x128xbf16>
    %cst_17 = arith.constant dense<0.000000e+00> : vector<128x128xf32>
    %28 = tpu.matmul %25, %27, %cst_17 {dimension_numbers = #tpu.dot_dimension_numbers<[1], [0], [0], [1], [0, 0, 1, 1], [], []>} : vector<128x384xbf16>, vector<384x128xbf16>, vector<128x128xf32> -> vector<128x128xf32>
    %29 = arith.addf %20, %28 : vector<128x128xf32>
    %30 = vector.shape_cast %29 : vector<128x128xf32> to vector<8x16x128xf32>
    %31 = arith.truncf %30 : vector<8x16x128xf32> to vector<8x16x128xbf16>
    %c0_18 = arith.constant 0 : index
    %c0_19 = arith.constant 0 : index
    %c0_20 = arith.constant 0 : index
    %c0_21 = arith.constant 0 : index
    %32 = vector.load %arg5[%c0_18, %c0_19, %c0_20, %c0_21] : memref<1x8x16x128xbf16, #tpu.memory_space<vmem>>, vector<1x8x16x128xbf16>
    %33 = vector.shape_cast %32 : vector<1x8x16x128xbf16> to vector<8x16x128xbf16>
    %34 = vector.shape_cast %31 : vector<8x16x128xbf16> to vector<1x8x16x128xbf16>
    tpu.vector_store %arg5[%c0_18, %c0_19, %c0_20, %c0_21], %34 {strides = array<i32>} : memref<1x8x16x128xbf16, #tpu.memory_space<vmem>>, vector<1x8x16x128xbf16>,
    %cst_22 = arith.constant dense<0.000000e+00> : vector<128xf32>
    %35 = vector.multi_reduction <add>, %29, %cst_22 [0] : vector<128x128xf32> to vector<128xf32>
    %36 = vector.shape_cast %35 : vector<128xf32> to vector<1x128xf32>
    %c0_23 = arith.constant 0 : index
    %c0_24 = arith.constant 0 : index
    %c0_25 = arith.constant 0 : index
    %c0_26 = arith.constant 0 : index
    %37 = vector.load %arg6[%c0_23, %c0_24, %c0_25, %c0_26] : memref<1x1x2x128xf32, #tpu.memory_space<vmem>>, vector<1x1x1x128xf32>
    %38 = vector.shape_cast %37 : vector<1x1x1x128xf32> to vector<1x128xf32>
    %39 = vector.shape_cast %36 : vector<1x128xf32> to vector<1x1x1x128xf32>
    tpu.vector_store %arg6[%c0_23, %c0_24, %c0_25, %c0_26], %39 {strides = array<i32>} : memref<1x1x2x128xf32, #tpu.memory_space<vmem>>, vector<1x1x1x128xf32>,
    %40 = arith.mulf %29, %29 : vector<128x128xf32>
    %cst_27 = arith.constant dense<0.000000e+00> : vector<128xf32>
    %41 = vector.multi_reduction <add>, %40, %cst_27 [0] : vector<128x128xf32> to vector<128xf32>
    %42 = vector.shape_cast %41 : vector<128xf32> to vector<1x128xf32>
    %c0_28 = arith.constant 0 : index
    %c0_29 = arith.constant 0 : index
    %c1_30 = arith.constant 1 : index
    %c0_31 = arith.constant 0 : index
    %43 = vector.load %arg6[%c0_28, %c0_29, %c1_30, %c0_31] : memref<1x1x2x128xf32, #tpu.memory_space<vmem>>, vector<1x1x1x128xf32>
    %44 = vector.shape_cast %43 : vector<1x1x1x128xf32> to vector<1x128xf32>
    %45 = vector.shape_cast %42 : vector<1x128xf32> to vector<1x1x1x128xf32>
    tpu.vector_store %arg6[%c0_28, %c0_29, %c1_30, %c0_31], %45 {strides = array<i32>} : memref<1x1x2x128xf32, #tpu.memory_space<vmem>>, vector<1x1x1x128xf32>,
    return
  }
  func.func @transform_0(%arg0: i32, %arg1: i32, %arg2: i32) -> (i32, i32, i32, i32) {
    %c0_i32 = arith.constant 0 : i32
    %c0_i32_0 = arith.constant 0 : i32
    %c0_i32_1 = arith.constant 0 : i32
    %c0_i32_2 = arith.constant 0 : i32
    return %arg0, %c0_i32, %c0_i32_0, %c0_i32_1 : i32, i32, i32, i32
  }
  func.func @transform_1(%arg0: i32, %arg1: i32, %arg2: i32) -> (i32, i32, i32) {
    %c0_i32 = arith.constant 0 : i32
    %c0_i32_0 = arith.constant 0 : i32
    %c0_i32_1 = arith.constant 0 : i32
    return %c0_i32, %c0_i32_0, %arg2 : i32, i32, i32
  }
  func.func @transform_2(%arg0: i32, %arg1: i32, %arg2: i32) -> (i32, i32, i32, i32) {
    %c0_i32 = arith.constant 0 : i32
    %c0_i32_0 = arith.constant 0 : i32
    return %arg0, %arg1, %c0_i32, %arg2 : i32, i32, i32, i32
  }
  func.func @transform_3(%arg0: i32, %arg1: i32, %arg2: i32) -> (i32, i32, i32, i32) {
    %c0_i32 = arith.constant 0 : i32
    %c0_i32_0 = arith.constant 0 : i32
    return %arg0, %arg1, %c0_i32, %arg2 : i32, i32, i32, i32
  }
}

module attributes {stable_mosaic.version = 11 : i64} {
  func.func @_affine_relu_kernel(%arg0: i32, %arg1: memref<512x128xbf16, #tpu.memory_space<vmem>>, %arg2: memref<1x128xf32, #tpu.memory_space<vmem>>, %arg3: memref<1x128xf32, #tpu.memory_space<vmem>>, %arg4: memref<512x128xf32, #tpu.memory_space<vmem>>) attributes {dimension_semantics = [#tpu.dimension_semantics<parallel>], iteration_bounds = array<i64: 1>, scalar_prefetch = 0 : i64, scratch_operands = 0 : i64, tpu.core_type = #tpu.core_type<tc>, window_params = [{transform_indices = @transform_0, window_bounds = array<i64: 512, 128>}, {pipeline_mode = #tpu.pipeline_mode<synchronous>, transform_indices = @transform_1, window_bounds = array<i64: 1, 128>}, {pipeline_mode = #tpu.pipeline_mode<synchronous>, transform_indices = @transform_2, window_bounds = array<i64: 1, 128>}, {transform_indices = @transform_3, window_bounds = array<i64: 512, 128>}]} {
    %c0 = arith.constant 0 : index
    %c0_0 = arith.constant 0 : index
    %0 = vector.load %arg1[%c0, %c0_0] : memref<512x128xbf16, #tpu.memory_space<vmem>>, vector<512x128xbf16>
    %1 = arith.extf %0 : vector<512x128xbf16> to vector<512x128xf32>
    %c0_1 = arith.constant 0 : index
    %c0_2 = arith.constant 0 : index
    %2 = vector.load %arg2[%c0_1, %c0_2] : memref<1x128xf32, #tpu.memory_space<vmem>>, vector<1x128xf32>
    %3 = vector.broadcast %2 : vector<1x128xf32> to vector<512x128xf32>
    %4 = arith.mulf %1, %3 : vector<512x128xf32>
    %c0_3 = arith.constant 0 : index
    %c0_4 = arith.constant 0 : index
    %5 = vector.load %arg3[%c0_3, %c0_4] : memref<1x128xf32, #tpu.memory_space<vmem>>, vector<1x128xf32>
    %6 = vector.broadcast %5 : vector<1x128xf32> to vector<512x128xf32>
    %7 = arith.addf %4, %6 : vector<512x128xf32>
    %cst = arith.constant 0.000000e+00 : f32
    %8 = vector.broadcast %cst : f32 to vector<512x128xf32>
    %9 = arith.maximumf %7, %8 : vector<512x128xf32>
    %c0_5 = arith.constant 0 : index
    %c0_6 = arith.constant 0 : index
    %10 = vector.load %arg4[%c0_5, %c0_6] : memref<512x128xf32, #tpu.memory_space<vmem>>, vector<512x128xf32>
    tpu.vector_store %arg4[%c0_5, %c0_6], %9 {strides = array<i32>} : memref<512x128xf32, #tpu.memory_space<vmem>>, vector<512x128xf32>,
    return
  }
  func.func @transform_0(%arg0: i32) -> (i32, i32) {
    %c0_i32 = arith.constant 0 : i32
    %c0_i32_0 = arith.constant 0 : i32
    return %arg0, %c0_i32 : i32, i32
  }
  func.func @transform_1(%arg0: i32) -> (i32, i32) {
    %c0_i32 = arith.constant 0 : i32
    %c0_i32_0 = arith.constant 0 : i32
    %c0_i32_1 = arith.constant 0 : i32
    return %c0_i32, %c0_i32_0 : i32, i32
  }
  func.func @transform_2(%arg0: i32) -> (i32, i32) {
    %c0_i32 = arith.constant 0 : i32
    %c0_i32_0 = arith.constant 0 : i32
    %c0_i32_1 = arith.constant 0 : i32
    return %c0_i32, %c0_i32_0 : i32, i32
  }
  func.func @transform_3(%arg0: i32) -> (i32, i32) {
    %c0_i32 = arith.constant 0 : i32
    %c0_i32_0 = arith.constant 0 : i32
    return %arg0, %c0_i32 : i32, i32
  }
}

</mosaic_0001>

<llo_original>
// kernel: double_conv2_forward.4
$region0: #{double_conv2_forward.4}
  #allocation0 [shape = 'u32[]', space=smem, size = 0x4, offset = 0x4, fixed_abs, tag = 'smem constant byte address 0x4 - core index']
  #allocation1 [shape = 'u32[144,128]{1,0:T(1,128)}', space=vmem, size = 0x12000, scoped, tag = 'internal scratch']
  %s0 = inlined_call_operand.vmem [shape: bf16[2,20,16,384], index: 0, kind: input, shape index: {}]
  %s1 = inlined_call_operand.vmem [shape: bf16[3,384,128], index: 1, kind: input, shape index: {}]
  %s2 = inlined_call_operand.vmem [shape: bf16[2,16,16,128], index: 2, kind: output, shape index: {0}]
  %s3 = inlined_call_operand.vmem [shape: f32[2,2,2,128], index: 3, kind: output, shape index: {1}]
  %4 = xla_tuple %s2, %s3
  %s5 = sld [smem:[#allocation0]]
  $region49: #{double_conv2_forward.4} parent=0
    _
  %s7 = ssub.s32 1, %s5
  %s8 = scalar_select 0, %s7, %s5
  loop: start=0, step=1, limit=6
  $region2: #{double_conv2_forward.4} parent=0 // loop_pre_header
    _
  $region3: #{double_conv2_forward.4} parent=0 // loop_header
    %s10 = sphi 0, %s14
    %p11 = scmp.ge.s32.totalorder %s10, 6
    %s17 = sphi 0, %s36
    %s18 = sphi 0, %s32
    %s19 = sphi 0, %s28
    %s20 = sphi 0, %s17
    %s21 = sphi 0, %s18
    %s22 = sphi 0, %s19
    %s23 = sphi 0, %s20
    %s24 = sphi 0, %s21
    %s25 = sphi 0, %s22
    %s39 = sphi 0, %s41
    %s42 = sphi 0, %s39
    %s43 = sphi 0, %s42
    %s59 = sphi 0, %s43
    %s65 = sphi 0, %s67
    %s68 = sphi 0, %s65
    %s69 = sphi 0, %s68
    %s85 = sphi 0, %s69
    %s95 = sphi 0, %s97
    %s98 = sphi 0, %s95
    %s99 = sphi 0, %s98
    %s115 = sphi 0, %s99
    %s125 = sphi 0, %s127
    %s128 = sphi 0, %s125
    %s129 = sphi 0, %s128
    %s145 = sphi 0, %s129
  $region4: #{double_conv2_forward.4} parent=0 // loop_header_branch
    %13 = sbr.rel (%p11) target = $region8
  $region5: #{double_conv2_forward.4} parent=0 // loop_body
    %s15 = ssub.s32 %s10, 1
    %s16 = ssub.s32 %s10, 2
    %s26 = sadd.s32 1, %s19
    %p27 = scmp.ge.s32.totalorder %s26, 1
    %s28 = scalar_select %p27, 0, %s26
    %s29 = sadd.s32 1, %s18
    %s30 = scalar_select %p27, %s29, %s18
    %p31 = scmp.ge.s32.totalorder %s30, 2
    %s32 = scalar_select %p31, 0, %s30
    %s33 = sadd.s32 1, %s17
    %s34 = scalar_select %p31, %s33, %s17
    %p35 = scmp.ge.s32.totalorder %s34, 2
    %s36 = scalar_select %p35, 0, %s34
    %s37 = ssub.s32 %s17, %s36
    %p38 = scmp.eq.s32.totalorder %s37, 0
    %s40 = sadd.s32 %s39, 1
    %s41 = scalar_select %p38, %s39, %s40
    %p44 = pneg %p38
    %p45 = scmp.eq.s32.totalorder %s10, 3
    %p46 = por %p44, %p45
    %p47 = scmp.ne.s32.totalorder %s39, %s42
    %p48 = scmp.eq.s32.totalorder %s10, 0
    %p49 = por %p47, %p48
    %p50 = scmp.ne.s32.totalorder %s39, %s42
    %p51 = scmp.eq.s32.totalorder %s15, 3
    %p52 = por %p50, %p51
    %p53 = scmp.ne.s32.totalorder %s42, %s43
    %p54 = scmp.eq.s32.totalorder %s15, 0
    %p55 = por %p53, %p54
    %p56 = scmp.ne.s32.totalorder %s42, %s43
    %p57 = scmp.eq.s32.totalorder %s16, 3
    %p58 = por %p56, %p57
    %p60 = scmp.ne.s32.totalorder %s43, %s59
    %p61 = scmp.eq.s32.totalorder %s16, 0
    %p62 = por %p60, %p61
    %s63 = ssub.s32 %s19, %s28
    %p64 = scmp.eq.s32.totalorder %s63, 0
    %s66 = sadd.s32 %s65, 1
    %s67 = scalar_select %p64, %s65, %s66
    %p70 = pneg %p64
    %p71 = scmp.eq.s32.totalorder %s10, 3
    %p72 = por %p70, %p71
    %p73 = scmp.ne.s32.totalorder %s65, %s68
    %p74 = scmp.eq.s32.totalorder %s10, 0
    %p75 = por %p73, %p74
    %p76 = scmp.ne.s32.totalorder %s65, %s68
    %p77 = scmp.eq.s32.totalorder %s15, 3
    %p78 = por %p76, %p77
    %p79 = scmp.ne.s32.totalorder %s68, %s69
    %p80 = scmp.eq.s32.totalorder %s15, 0
    %p81 = por %p79, %p80
    %p82 = scmp.ne.s32.totalorder %s68, %s69
    %p83 = scmp.eq.s32.totalorder %s16, 3
    %p84 = por %p82, %p83
    %p86 = scmp.ne.s32.totalorder %s69, %s85
    %p87 = scmp.eq.s32.totalorder %s16, 0
    %p88 = por %p86, %p87
    %s89 = ssub.s32 %s17, %s36
    %s90 = ssub.s32 %s18, %s32
    %s91 = sor.u32 %s89, %s90
    %s92 = ssub.s32 %s19, %s28
    %s93 = sor.u32 %s91, %s92
    %p94 = scmp.eq.s32.totalorder %s93, 0
    %s96 = sadd.s32 %s95, 1
    %s97 = scalar_select %p94, %s95, %s96
    %p100 = pneg %p94
    %p101 = scmp.eq.s32.totalorder %s10, 3
    %p102 = por %p100, %p101
    %p103 = scmp.ne.s32.totalorder %s95, %s98
    %p104 = scmp.eq.s32.totalorder %s10, 0
    %p105 = por %p103, %p104
    %p106 = scmp.ne.s32.totalorder %s95, %s98
    %p107 = scmp.eq.s32.totalorder %s15, 3
    %p108 = por %p106, %p107
    %p109 = scmp.ne.s32.totalorder %s98, %s99
    %p110 = scmp.eq.s32.totalorder %s15, 0
    %p111 = por %p109, %p110
    %p112 = scmp.ne.s32.totalorder %s98, %s99
    %p113 = scmp.eq.s32.totalorder %s16, 3
    %p114 = por %p112, %p113
    %p116 = scmp.ne.s32.totalorder %s99, %s115
    %p117 = scmp.eq.s32.totalorder %s16, 0
    %p118 = por %p116, %p117
    %s119 = ssub.s32 %s17, %s36
    %s120 = ssub.s32 %s18, %s32
    %s121 = sor.u32 %s119, %s120
    %s122 = ssub.s32 %s19, %s28
    %s123 = sor.u32 %s121, %s122
    %p124 = scmp.eq.s32.totalorder %s123, 0
    %s126 = sadd.s32 %s125, 1
    %s127 = scalar_select %p124, %s125, %s126
    %p130 = pneg %p124
    %p131 = scmp.eq.s32.totalorder %s10, 3
    %p132 = por %p130, %p131
    %p133 = scmp.ne.s32.totalorder %s125, %s128
    %p134 = scmp.eq.s32.totalorder %s10, 0
    %p135 = por %p133, %p134
    %p136 = scmp.ne.s32.totalorder %s125, %s128
    %p137 = scmp.eq.s32.totalorder %s15, 3
    %p138 = por %p136, %p137
    %p139 = scmp.ne.s32.totalorder %s128, %s129
    %p140 = scmp.eq.s32.totalorder %s15, 0
    %p141 = por %p139, %p140
    %p142 = scmp.ne.s32.totalorder %s128, %s129
    %p143 = scmp.eq.s32.totalorder %s16, 3
    %p144 = por %p142, %p143
    %p146 = scmp.ne.s32.totalorder %s129, %s145
    %p147 = scmp.eq.s32.totalorder %s16, 0
    %p148 = por %p146, %p147
    %p149 = scmp.le.s32.totalorder 1, %s10
    %p150 = scmp.lt.s32.totalorder %s10, 5
    %p151 = pnand %p149, %p150
    %p152 = pneg %p151
    // Predicated region
    $region9: #{double_conv2_forward.4} parent=5 // pred_check
      _
    $region10: #{double_conv2_forward.4} parent=5 // pred_check_branch
      %154 = sbr.rel (%p151) target = $region12
    $region11: #{double_conv2_forward.4} parent=5 // pred_region
      %s155 = ssub.s32 %s10, 1
      // Predicated region
      $region13: #{double_conv2_forward.4} parent=11 // pred_check
        %p156 = pneg %p81
      $region14: #{double_conv2_forward.4} parent=11 // pred_check_branch
        %158 = sbr.rel (%p156) target = $region16
      $region15: #{double_conv2_forward.4} parent=11 // pred_region
        %p159 = scmp.lt.s32.totalorder %s22, 0
        %s160 = scalar_select %p159, %s22, 0
        %s161 = smul.addr %s160, 4
        %s162 = scalar_lea.vmem %s1, %s161
      $region16: #{double_conv2_forward.4} parent=11 // pred_fallthru
        _
    $region12: #{double_conv2_forward.4} parent=5 // pred_fallthru
      _
    %p163 = scmp.lt.s32.totalorder %s10, 4
    // Predicated region
    $region17: #{double_conv2_forward.4} parent=5 // pred_check
      %p164 = pneg %p163
    $region18: #{double_conv2_forward.4} parent=5 // pred_check_branch
      %166 = sbr.rel (%p164) target = $region20
    $region19: #{double_conv2_forward.4} parent=5 // pred_region
      // Predicated region
      $region21: #{double_conv2_forward.4} parent=19 // pred_check
        %p167 = pneg %p49
      $region22: #{double_conv2_forward.4} parent=19 // pred_check_branch
        %169 = sbr.rel (%p167) target = $region24
      $region23: #{double_conv2_forward.4} parent=19 // pred_region
        %p170 = scmp.lt.s32.totalorder %s17, 1
        %s171 = scalar_select %p170, %s17, 1
        %s172 = smul.addr %s171, 120
        %s173 = smul.addr %s172, 4
        %s174 = scalar_lea.vmem %s0, %s173
      $region24: #{double_conv2_forward.4} parent=19 // pred_fallthru
        _
    $region20: #{double_conv2_forward.4} parent=5 // pred_fallthru
      _
    %p175 = scmp.le.s32.totalorder 1, %s10
    %p176 = scmp.lt.s32.totalorder %s10, 5
    %p177 = pnand %p175, %p176
    %p178 = pneg %p177
    // Predicated region
    $region25: #{double_conv2_forward.4} parent=5 // pred_check
      _
    $region26: #{double_conv2_forward.4} parent=5 // pred_check_branch
      %180 = sbr.rel (%p177) target = $region28
    $region27: #{double_conv2_forward.4} parent=5 // pred_region
      %s181 = ssub.s32 %s10, 1
      %p182 = scmp.lt.s32.totalorder %s20, 1
      %s183 = scalar_select %p182, %s20, 1
      %s184 = smul.addr %s183, 120
      %s185 = smul.addr %s184, 4
      %s186 = scalar_lea.vmem %s0, %s185
      %p187 = pneg %p55
      %p188 = pneg %p52
      %p189 = scmp.lt.s32.totalorder %s22, 0
      %s190 = scalar_select %p189, %s22, 0
      %s191 = smul.addr %s190, 4
      %s192 = scalar_lea.vmem %s1, %s191
      %p193 = pneg %p81
      %p194 = pneg %p78
      %p195 = pneg %p111
      %p196 = pneg %p108
      %s197 = smul.u32 8, %s21
      %p198 = scmp.lt.s32.totalorder %s20, 1
      %s199 = scalar_select %p198, %s20, 1
      %p200 = scmp.lt.s32.totalorder %s197, 15
      %s201 = scalar_select %p200, %s197, 15
      %p202 = scmp.lt.s32.totalorder %s22, 0
      %s203 = scalar_select %p202, %s22, 0
      %s204 = smul.addr %s201, 2
      %s205 = sadd.s32 %s203, %s204
      %s206 = smul.addr %s199, 32
      %s207 = sadd.s32 %s205, %s206
      %s208 = smul.addr %s207, 4
      %s209 = scalar_lea.vmem %s2, %s208
      %p210 = pneg %p141
      %p211 = pneg %p138
      %p212 = scmp.lt.s32.totalorder %s20, 1
      %s213 = scalar_select %p212, %s20, 1
      %p214 = scmp.lt.s32.totalorder %s21, 1
      %s215 = scalar_select %p214, %s21, 1
      %p216 = scmp.lt.s32.totalorder %s22, 0
      %s217 = scalar_select %p216, %s22, 0
      %s218 = sadd.s32 %s217, %s215
      %s219 = smul.addr %s213, 2
      %s220 = sadd.s32 %s218, %s219
      %s221 = smul.addr %s220, 2
      %s222 = scalar_lea.vmem %s3, %s221
      %p223 = scmp.lt.s32.totalorder %s20, 1
      %s224 = scalar_select %p223, %s20, 1
      %s225 = smul.addr %s224, 120
      %s226 = smul.addr %s225, 4
      %s227 = scalar_lea.vmem %s0, %s226
      %p228 = scmp.lt.s32.totalorder %s22, 0
      %s229 = scalar_select %p228, %s22, 0
      %s230 = smul.addr %s229, 4
      %s231 = scalar_lea.vmem %s1, %s230
      %s232 = smul.u32 8, %s21
      %p233 = scmp.lt.s32.totalorder %s20, 1
      %s234 = scalar_select %p233, %s20, 1
      %p235 = scmp.lt.s32.totalorder %s232, 15
      %s236 = scalar_select %p235, %s232, 15
      %p237 = scmp.lt.s32.totalorder %s22, 0
      %s238 = scalar_select %p237, %s22, 0
      %s239 = smul.addr %s236, 2
      %s240 = sadd.s32 %s238, %s239
      %s241 = smul.addr %s234, 32
      %s242 = sadd.s32 %s240, %s241
      %s243 = smul.addr %s242, 4
      %s244 = scalar_lea.vmem %s2, %s243
      %s245 = smul.u32 8, %s21
      %p246 = scmp.lt.s32.totalorder %s20, 1
      %s247 = scalar_select %p246, %s20, 1
      %p248 = scmp.lt.s32.totalorder %s21, 1
      %s249 = scalar_select %p248, %s21, 1
      %p250 = scmp.lt.s32.totalorder %s22, 0
      %s251 = scalar_select %p250, %s22, 0
      %s252 = sadd.s32 %s251, %s249
      %s253 = smul.addr %s247, 2
      %s254 = sadd.s32 %s252, %s253
      %s255 = smul.addr %s254, 2
      %s256 = scalar_lea.vmem %s3, %s255
      %s258 = smul.u32 %s21, 8
      %s259 = smul.u32 %s258, 6
      %s260 = smul.addr %s259, 4
      %s261 = scalar_lea.vmem %s227, %s260
      %v262 = vld [vmem:[%s261] sm:$0xff]
      %v263 = vld [vmem:[%s261 + $0x8] sm:$0xf]
      %v264 = vld [vmem:[%s261 + $0xc] sm:$0xff]
      %v265 = vld [vmem:[%s261 + $0x14] sm:$0xf]
      %v266 = vld [vmem:[%s261 + $0x18] sm:$0xff]
      %v267 = vld [vmem:[%s261 + $0x20] sm:$0xf]
      %v268 = vld [vmem:[%s261 + $0x24] sm:$0xff]
      %v269 = vld [vmem:[%s261 + $0x2c] sm:$0xf]
      %v270 = vld [vmem:[%s261 + $0x30] sm:$0xff]
      %v271 = vld [vmem:[%s261 + $0x38] sm:$0xf]
      %v272 = vld [vmem:[%s261 + $0x3c] sm:$0xff]
      %v273 = vld [vmem:[%s261 + $0x44] sm:$0xf]
      %v274 = vld [vmem:[%s261 + $0x48] sm:$0xff]
      %v275 = vld [vmem:[%s261 + $0x50] sm:$0xf]
      %v276 = vld [vmem:[%s261 + $0x54] sm:$0xff]
      %v277 = vld [vmem:[%s261 + $0x5c] sm:$0xf]
      %v278 = vld [vmem:[%s261 + $0x60] sm:$0xff]
      %v279 = vld [vmem:[%s261 + $0x68] sm:$0xf]
      %v280 = vld [vmem:[%s261 + $0x6c] sm:$0xff]
      %v281 = vld [vmem:[%s261 + $0x74] sm:$0xf]
      %v282 = vld [vmem:[%s261 + $0x78] sm:$0xff]
      %v283 = vld [vmem:[%s261 + $0x80] sm:$0xf]
      %v284 = vld [vmem:[%s261 + $0x84] sm:$0xff]
      %v285 = vld [vmem:[%s261 + $0x8c] sm:$0xf]
      %v286 = vld [vmem:[%s261 + $0x90] sm:$0xff]
      %v287 = vld [vmem:[%s261 + $0x98] sm:$0xf]
      %v288 = vld [vmem:[%s261 + $0x9c] sm:$0xff]
      %v289 = vld [vmem:[%s261 + $0xa4] sm:$0xf]
      %v290 = vld [vmem:[%s261 + $0xa8] sm:$0xff]
      %v291 = vld [vmem:[%s261 + $0xb0] sm:$0xf]
      %v292 = vld [vmem:[%s261 + $0xb4] sm:$0xff]
      %v293 = vld [vmem:[%s261 + $0xbc] sm:$0xf]
      %v294 = vld [vmem:[%s231] sm:$0xf]
      %v295 = vld [vmem:[%s231 + $0x4] sm:$0xf]
      %v296 = vld [vmem:[%s231 + $0x8] sm:$0xf]
      %v297 = vld [vmem:[%s231 + $0xc] sm:$0xf]
      %v298 = vld [vmem:[%s231 + $0x10] sm:$0xf]
      %v299 = vld [vmem:[%s231 + $0x14] sm:$0xf]
      %v300 = vld [vmem:[%s231 + $0x18] sm:$0xf]
      %v301 = vld [vmem:[%s231 + $0x1c] sm:$0xf]
      %v302 = vld [vmem:[%s231 + $0x20] sm:$0xf]
      %v303 = vld [vmem:[%s231 + $0x24] sm:$0xf]
      %v304 = vld [vmem:[%s231 + $0x28] sm:$0xf]
      %v305 = vld [vmem:[%s231 + $0x2c] sm:$0xf]
      %v306 = vld [vmem:[%s231 + $0x30] sm:$0xf]
      %v307 = vld [vmem:[%s231 + $0x34] sm:$0xf]
      %v308 = vld [vmem:[%s231 + $0x38] sm:$0xf]
      %v309 = vld [vmem:[%s231 + $0x3c] sm:$0xf]
      %v310 = vld [vmem:[%s231 + $0x40] sm:$0xf]
      %v311 = vld [vmem:[%s231 + $0x44] sm:$0xf]
      %v312 = vld [vmem:[%s231 + $0x48] sm:$0xf]
      %v313 = vld [vmem:[%s231 + $0x4c] sm:$0xf]
      %v314 = vld [vmem:[%s231 + $0x50] sm:$0xf]
      %v315 = vld [vmem:[%s231 + $0x54] sm:$0xf]
      %v316 = vld [vmem:[%s231 + $0x58] sm:$0xf]
      %v317 = vld [vmem:[%s231 + $0x5c] sm:$0xf]
      %v318 = vld [vmem:[%s231 + $0x60] sm:$0xf]
      %v319 = vld [vmem:[%s231 + $0x64] sm:$0xf]
      %v320 = vld [vmem:[%s231 + $0x68] sm:$0xf]
      %v321 = vld [vmem:[%s231 + $0x6c] sm:$0xf]
      %v322 = vld [vmem:[%s231 + $0x70] sm:$0xf]
      %v323 = vld [vmem:[%s231 + $0x74] sm:$0xf]
      %v324 = vld [vmem:[%s231 + $0x78] sm:$0xf]
      %v325 = vld [vmem:[%s231 + $0x7c] sm:$0xf]
      %v326 = vld [vmem:[%s231 + $0x80] sm:$0xf]
      %v327 = vld [vmem:[%s231 + $0x84] sm:$0xf]
      %v328 = vld [vmem:[%s231 + $0x88] sm:$0xf]
      %v329 = vld [vmem:[%s231 + $0x8c] sm:$0xf]
      %v330 = vld [vmem:[%s231 + $0x90] sm:$0xf]
      %v331 = vld [vmem:[%s231 + $0x94] sm:$0xf]
      %v332 = vld [vmem:[%s231 + $0x98] sm:$0xf]
      %v333 = vld [vmem:[%s231 + $0x9c] sm:$0xf]
      %v334 = vld [vmem:[%s231 + $0xa0] sm:$0xf]
      %v335 = vld [vmem:[%s231 + $0xa4] sm:$0xf]
      %v336 = vld [vmem:[%s231 + $0xa8] sm:$0xf]
      %v337 = vld [vmem:[%s231 + $0xac] sm:$0xf]
      %v338 = vld [vmem:[%s231 + $0xb0] sm:$0xf]
      %v339 = vld [vmem:[%s231 + $0xb4] sm:$0xf]
      %v340 = vld [vmem:[%s231 + $0xb8] sm:$0xf]
      %v341 = vld [vmem:[%s231 + $0xbc] sm:$0xf]
      %s342 = sadd.s32 %s258, 2
      %s343 = smul.u32 %s342, 6
      %s344 = smul.addr %s343, 4
      %s345 = scalar_lea.vmem %s227, %s344
      %v346 = vld [vmem:[%s345] sm:$0xff]
      %v347 = vld [vmem:[%s345 + $0x8] sm:$0xf]
      %v348 = vld [vmem:[%s345 + $0xc] sm:$0xff]
      %v349 = vld [vmem:[%s345 + $0x14] sm:$0xf]
      %v350 = vld [vmem:[%s345 + $0x18] sm:$0xff]
      %v351 = vld [vmem:[%s345 + $0x20] sm:$0xf]
      %v352 = vld [vmem:[%s345 + $0x24] sm:$0xff]
      %v353 = vld [vmem:[%s345 + $0x2c] sm:$0xf]
      %v354 = vld [vmem:[%s345 + $0x30] sm:$0xff]
      %v355 = vld [vmem:[%s345 + $0x38] sm:$0xf]
      %v356 = vld [vmem:[%s345 + $0x3c] sm:$0xff]
      %v357 = vld [vmem:[%s345 + $0x44] sm:$0xf]
      %v358 = vld [vmem:[%s345 + $0x48] sm:$0xff]
      %v359 = vld [vmem:[%s345 + $0x50] sm:$0xf]
      %v360 = vld [vmem:[%s345 + $0x54] sm:$0xff]
      %v361 = vld [vmem:[%s345 + $0x5c] sm:$0xf]
      %v362 = vld [vmem:[%s345 + $0x60] sm:$0xff]
      %v363 = vld [vmem:[%s345 + $0x68] sm:$0xf]
      %v364 = vld [vmem:[%s345 + $0x6c] sm:$0xff]
      %v365 = vld [vmem:[%s345 + $0x74] sm:$0xf]
      %v366 = vld [vmem:[%s345 + $0x78] sm:$0xff]
      %v367 = vld [vmem:[%s345 + $0x80] sm:$0xf]
      %v368 = vld [vmem:[%s345 + $0x84] sm:$0xff]
      %v369 = vld [vmem:[%s345 + $0x8c] sm:$0xf]
      %v370 = vld [vmem:[%s345 + $0x90] sm:$0xff]
      %v371 = vld [vmem:[%s345 + $0x98] sm:$0xf]
      %v372 = vld [vmem:[%s345 + $0x9c] sm:$0xff]
      %v373 = vld [vmem:[%s345 + $0xa4] sm:$0xf]
      %v374 = vld [vmem:[%s345 + $0xa8] sm:$0xff]
      %v375 = vld [vmem:[%s345 + $0xb0] sm:$0xf]
      %v376 = vld [vmem:[%s345 + $0xb4] sm:$0xff]
      %v377 = vld [vmem:[%s345 + $0xbc] sm:$0xf]
      %s378 = scalar_lea.vmem %s231, 192
      %v379 = vld [vmem:[%s378] sm:$0xf]
      %v380 = vld [vmem:[%s378 + $0x4] sm:$0xf]
      %v381 = vld [vmem:[%s378 + $0x8] sm:$0xf]
      %v382 = vld [vmem:[%s378 + $0xc] sm:$0xf]
      %v383 = vld [vmem:[%s378 + $0x10] sm:$0xf]
      %v384 = vld [vmem:[%s378 + $0x14] sm:$0xf]
      %v385 = vld [vmem:[%s378 + $0x18] sm:$0xf]
      %v386 = vld [vmem:[%s378 + $0x1c] sm:$0xf]
      %v387 = vld [vmem:[%s378 + $0x20] sm:$0xf]
      %v388 = vld [vmem:[%s378 + $0x24] sm:$0xf]
      %v389 = vld [vmem:[%s378 + $0x28] sm:$0xf]
      %v390 = vld [vmem:[%s378 + $0x2c] sm:$0xf]
      %v391 = vld [vmem:[%s378 + $0x30] sm:$0xf]
      %v392 = vld [vmem:[%s378 + $0x34] sm:$0xf]
      %v393 = vld [vmem:[%s378 + $0x38] sm:$0xf]
      %v394 = vld [vmem:[%s378 + $0x3c] sm:$0xf]
      %v395 = vld [vmem:[%s378 + $0x40] sm:$0xf]
      %v396 = vld [vmem:[%s378 + $0x44] sm:$0xf]
      %v397 = vld [vmem:[%s378 + $0x48] sm:$0xf]
      %v398 = vld [vmem:[%s378 + $0x4c] sm:$0xf]
      %v399 = vld [vmem:[%s378 + $0x50] sm:$0xf]
      %v400 = vld [vmem:[%s378 + $0x54] sm:$0xf]
      %v401 = vld [vmem:[%s378 + $0x58] sm:$0xf]
      %v402 = vld [vmem:[%s378 + $0x5c] sm:$0xf]
      %v403 = vld [vmem:[%s378 + $0x60] sm:$0xf]
      %v404 = vld [vmem:[%s378 + $0x64] sm:$0xf]
      %v405 = vld [vmem:[%s378 + $0x68] sm:$0xf]
      %v406 = vld [vmem:[%s378 + $0x6c] sm:$0xf]
      %v407 = vld [vmem:[%s378 + $0x70] sm:$0xf]
      %v408 = vld [vmem:[%s378 + $0x74] sm:$0xf]
      %v409 = vld [vmem:[%s378 + $0x78] sm:$0xf]
      %v410 = vld [vmem:[%s378 + $0x7c] sm:$0xf]
      %v411 = vld [vmem:[%s378 + $0x80] sm:$0xf]
      %v412 = vld [vmem:[%s378 + $0x84] sm:$0xf]
      %v413 = vld [vmem:[%s378 + $0x88] sm:$0xf]
      %v414 = vld [vmem:[%s378 + $0x8c] sm:$0xf]
      %v415 = vld [vmem:[%s378 + $0x90] sm:$0xf]
      %v416 = vld [vmem:[%s378 + $0x94] sm:$0xf]
      %v417 = vld [vmem:[%s378 + $0x98] sm:$0xf]
      %v418 = vld [vmem:[%s378 + $0x9c] sm:$0xf]
      %v419 = vld [vmem:[%s378 + $0xa0] sm:$0xf]
      %v420 = vld [vmem:[%s378 + $0xa4] sm:$0xf]
      %v421 = vld [vmem:[%s378 + $0xa8] sm:$0xf]
      %v422 = vld [vmem:[%s378 + $0xac] sm:$0xf]
      %v423 = vld [vmem:[%s378 + $0xb0] sm:$0xf]
      %v424 = vld [vmem:[%s378 + $0xb4] sm:$0xf]
      %v425 = vld [vmem:[%s378 + $0xb8] sm:$0xf]
      %v426 = vld [vmem:[%s378 + $0xbc] sm:$0xf]
      %v459 = vunpack.c.l.b16 %v346
      %v460 = vunpack.c.h.b16 %v346
      %v461 = vunpack.c.l.b16 %v347
      %v462 = vunpack.c.l.b16 %v348
      %v463 = vunpack.c.h.b16 %v348
      %v464 = vunpack.c.l.b16 %v349
      %v465 = vunpack.c.l.b16 %v350
      %v466 = vunpack.c.h.b16 %v350
      %v467 = vunpack.c.l.b16 %v351
      %v468 = vunpack.c.l.b16 %v352
      %v469 = vunpack.c.h.b16 %v352
      %v470 = vunpack.c.l.b16 %v353
      %v471 = vunpack.c.l.b16 %v354
      %v472 = vunpack.c.h.b16 %v354
      %v473 = vunpack.c.l.b16 %v355
      %v474 = vunpack.c.l.b16 %v356
      %v475 = vunpack.c.h.b16 %v356
      %v476 = vunpack.c.l.b16 %v357
      %v477 = vunpack.c.l.b16 %v358
      %v478 = vunpack.c.h.b16 %v358
      %v479 = vunpack.c.l.b16 %v359
      %v480 = vunpack.c.l.b16 %v360
      %v481 = vunpack.c.h.b16 %v360
      %v482 = vunpack.c.l.b16 %v361
      %v483 = vunpack.c.l.b16 %v362
      %v484 = vunpack.c.h.b16 %v362
      %v485 = vunpack.c.l.b16 %v363
      %v486 = vunpack.c.l.b16 %v364
      %v487 = vunpack.c.h.b16 %v364
      %v488 = vunpack.c.l.b16 %v365
      %v489 = vunpack.c.l.b16 %v366
      %v490 = vunpack.c.h.b16 %v366
      %v491 = vunpack.c.l.b16 %v367
      %v492 = vunpack.c.l.b16 %v368
      %v493 = vunpack.c.h.b16 %v368
      %v494 = vunpack.c.l.b16 %v369
      %v495 = vunpack.c.l.b16 %v370
      %v496 = vunpack.c.h.b16 %v370
      %v497 = vunpack.c.l.b16 %v371
      %v498 = vunpack.c.l.b16 %v372
      %v499 = vunpack.c.h.b16 %v372
      %v500 = vunpack.c.l.b16 %v373
      %v501 = vunpack.c.l.b16 %v374
      %v502 = vunpack.c.h.b16 %v374
      %v503 = vunpack.c.l.b16 %v375
      %v504 = vunpack.c.l.b16 %v376
      %v505 = vunpack.c.h.b16 %v376
      %v506 = vunpack.c.l.b16 %v377
      %v507 = vpack.c.b16 %v462, %v459
      %v508 = vpack.c.b16 %v463, %v460
      %v509 = vpack.c.b16 %v464, %v461
      %v510 = vpack.c.b16 %v468, %v465
      %v511 = vpack.c.b16 %v469, %v466
      %v512 = vpack.c.b16 %v470, %v467
      %v513 = vpack.c.b16 %v474, %v471
      %v514 = vpack.c.b16 %v475, %v472
      %v515 = vpack.c.b16 %v476, %v473
      %v516 = vpack.c.b16 %v480, %v477
      %v517 = vpack.c.b16 %v481, %v478
      %v518 = vpack.c.b16 %v482, %v479
      %v519 = vpack.c.b16 %v486, %v483
      %v520 = vpack.c.b16 %v487, %v484
      %v521 = vpack.c.b16 %v488, %v485
      %v522 = vpack.c.b16 %v492, %v489
      %v523 = vpack.c.b16 %v493, %v490
      %v524 = vpack.c.b16 %v494, %v491
      %v525 = vpack.c.b16 %v498, %v495
      %v526 = vpack.c.b16 %v499, %v496
      %v527 = vpack.c.b16 %v500, %v497
      %v528 = vpack.c.b16 %v504, %v501
      %v529 = vpack.c.b16 %v505, %v502
      %v530 = vpack.c.b16 %v506, %v503
      %v603 = vunpack.c.l.b16 %v379
      %v604 = vunpack.c.l.b16 %v380
      %v605 = vunpack.c.l.b16 %v381
      %v606 = vunpack.c.l.b16 %v382
      %v607 = vunpack.c.l.b16 %v383
      %v608 = vunpack.c.l.b16 %v384
      %v609 = vunpack.c.l.b16 %v385
      %v610 = vunpack.c.l.b16 %v386
      %v611 = vunpack.c.l.b16 %v387
      %v612 = vunpack.c.l.b16 %v388
      %v613 = vunpack.c.l.b16 %v389
      %v614 = vunpack.c.l.b16 %v390
      %v615 = vunpack.c.l.b16 %v391
      %v616 = vunpack.c.l.b16 %v392
      %v617 = vunpack.c.l.b16 %v393
      %v618 = vunpack.c.l.b16 %v394
      %v619 = vunpack.c.l.b16 %v395
      %v620 = vunpack.c.l.b16 %v396
      %v621 = vunpack.c.l.b16 %v397
      %v622 = vunpack.c.l.b16 %v398
      %v623 = vunpack.c.l.b16 %v399
      %v624 = vunpack.c.l.b16 %v400
      %v625 = vunpack.c.l.b16 %v401
      %v626 = vunpack.c.l.b16 %v402
      %v627 = vunpack.c.l.b16 %v403
      %v628 = vunpack.c.l.b16 %v404
      %v629 = vunpack.c.l.b16 %v405
      %v630 = vunpack.c.l.b16 %v406
      %v631 = vunpack.c.l.b16 %v407
      %v632 = vunpack.c.l.b16 %v408
      %v633 = vunpack.c.l.b16 %v409
      %v634 = vunpack.c.l.b16 %v410
      %v635 = vunpack.c.l.b16 %v411
      %v636 = vunpack.c.l.b16 %v412
      %v637 = vunpack.c.l.b16 %v413
      %v638 = vunpack.c.l.b16 %v414
      %v639 = vunpack.c.l.b16 %v415
      %v640 = vunpack.c.l.b16 %v416
      %v641 = vunpack.c.l.b16 %v417
      %v642 = vunpack.c.l.b16 %v418
      %v643 = vunpack.c.l.b16 %v419
      %v644 = vunpack.c.l.b16 %v420
      %v645 = vunpack.c.l.b16 %v421
      %v646 = vunpack.c.l.b16 %v422
      %v647 = vunpack.c.l.b16 %v423
      %v648 = vunpack.c.l.b16 %v424
      %v649 = vunpack.c.l.b16 %v425
      %v650 = vunpack.c.l.b16 %v426
      %v651 = vpack.c.b16 %v604, %v603
      %v652 = vpack.c.b16 %v606, %v605
      %v653 = vpack.c.b16 %v608, %v607
      %v654 = vpack.c.b16 %v610, %v609
      %v655 = vpack.c.b16 %v612, %v611
      %v656 = vpack.c.b16 %v614, %v613
      %v657 = vpack.c.b16 %v616, %v615
      %v658 = vpack.c.b16 %v618, %v617
      %v659 = vpack.c.b16 %v620, %v619
      %v660 = vpack.c.b16 %v622, %v621
      %v661 = vpack.c.b16 %v624, %v623
      %v662 = vpack.c.b16 %v626, %v625
      %v663 = vpack.c.b16 %v628, %v627
      %v664 = vpack.c.b16 %v630, %v629
      %v665 = vpack.c.b16 %v632, %v631
      %v666 = vpack.c.b16 %v634, %v633
      %v667 = vpack.c.b16 %v636, %v635
      %v668 = vpack.c.b16 %v638, %v637
      %v669 = vpack.c.b16 %v640, %v639
      %v670 = vpack.c.b16 %v642, %v641
      %v671 = vpack.c.b16 %v644, %v643
      %v672 = vpack.c.b16 %v646, %v645
      %v673 = vpack.c.b16 %v648, %v647
      %v674 = vpack.c.b16 %v650, %v649
      %699 = vmatprep.subr.bf16.mxu0 0
      %700 = vmatpush1.bf16.msra.mxu0 %v651
      %701 = vmatprep.subr.bf16.mxu0 0
      %702 = vmatpush1.bf16.msra.mxu0 %v652
      %703 = vmatprep.subr.bf16.mxu0 0
      %704 = vmatpush1.bf16.msra.mxu0 %v653
      %705 = vmatprep.subr.bf16.mxu0 0
      %706 = vmatpush1.bf16.msra.mxu0 %v654
      %707 = vmatprep.subr.bf16.mxu0 0
      %708 = vmatpush1.bf16.msra.mxu0 %v655
      %709 = vmatprep.subr.bf16.mxu0 0
      %710 = vmatpush1.bf16.msra.mxu0 %v656
      %711 = vmatprep.subr.bf16.mxu0 0
      %712 = vmatpush1.bf16.msra.mxu0 %v657
      %713 = vmatprep.subr.bf16.mxu0 0
      %714 = vmatpush1.bf16.msra.mxu0 %v658
      %715 = vmatprep.subr.bf16.mxu0 0
      %716 = vmatpush1.bf16.msra.mxu0 %v659
      %717 = vmatprep.subr.bf16.mxu0 0
      %718 = vmatpush1.bf16.msra.mxu0 %v660
      %719 = vmatprep.subr.bf16.mxu0 0
      %720 = vmatpush1.bf16.msra.mxu0 %v661
      %721 = vmatprep.subr.bf16.mxu0 0
      %722 = vmatpush1.bf16.msra.mxu0 %v662
      %723 = vmatprep.subr.bf16.mxu0 0
      %724 = vmatpush1.bf16.msra.mxu0 %v663
      %725 = vmatprep.subr.bf16.mxu0 0
      %726 = vmatpush1.bf16.msra.mxu0 %v664
      %727 = vmatprep.subr.bf16.mxu0 0
      %728 = vmatpush1.bf16.msra.mxu0 %v665
      %729 = vmatprep.subr.bf16.mxu0 0
      %730 = vmatpush1.bf16.msra.mxu0 %v666
      %731 = vmatprep.mubr.bf16.mxu0 %v508
      %732 = vmatmul.mubr.bf16.gmra.mrb[0].mxu0 %v507
      %v733 = vpop.f32.mrb[0].mxu0
      %v734 = vadd.f32 0.0, %v733
      %v735 = vpop.f32.mrb[0].mxu0
      %v736 = vpop.f32.mrb[0].mxu0
      %v737 = vadd.f32 0.0, %v736
      %v738 = vpop.f32.mrb[0].mxu0
      %739 = vmatprep.mubr.bf16.mxu0 %v511
      %740 = vmatmul.mubr.bf16.gmra.mrb[0].mxu0 %v510
      %v741 = vpop.f32.mrb[0].mxu0
      %v742 = vadd.f32 0.0, %v741
      %v743 = vpop.f32.mrb[0].mxu0
      %v744 = vpop.f32.mrb[0].mxu0
      %v745 = vadd.f32 0.0, %v744
      %v746 = vpop.f32.mrb[0].mxu0
      %747 = vmatprep.mubr.bf16.mxu0 %v514
      %748 = vmatmul.mubr.bf16.gmra.mrb[0].mxu0 %v513
      %v749 = vpop.f32.mrb[0].mxu0
      %v750 = vadd.f32 0.0, %v749
      %v751 = vpop.f32.mrb[0].mxu0
      %v752 = vpop.f32.mrb[0].mxu0
      %v753 = vadd.f32 0.0, %v752
      %v754 = vpop.f32.mrb[0].mxu0
      %755 = vmatprep.mubr.bf16.mxu0 %v517
      %756 = vmatmul.mubr.bf16.gmra.mrb[0].mxu0 %v516
      %v757 = vpop.f32.mrb[0].mxu0
      %v758 = vadd.f32 0.0, %v757
      %v759 = vpop.f32.mrb[0].mxu0
      %v760 = vpop.f32.mrb[0].mxu0
      %v761 = vadd.f32 0.0, %v760
      %v762 = vpop.f32.mrb[0].mxu0
      %763 = vmatprep.mubr.bf16.mxu0 %v520
      %764 = vmatmul.mubr.bf16.gmra.mrb[0].mxu0 %v519
      %v765 = vpop.f32.mrb[0].mxu0
      %v766 = vadd.f32 0.0, %v765
      %v767 = vpop.f32.mrb[0].mxu0
      %v768 = vpop.f32.mrb[0].mxu0
      %v769 = vadd.f32 0.0, %v768
      %v770 = vpop.f32.mrb[0].mxu0
      %771 = vmatprep.mubr.bf16.mxu0 %v523
      %772 = vmatmul.mubr.bf16.gmra.mrb[0].mxu0 %v522
      %v773 = vpop.f32.mrb[0].mxu0
      %v774 = vadd.f32 0.0, %v773
      %v775 = vpop.f32.mrb[0].mxu0
      %v776 = vpop.f32.mrb[0].mxu0
      %v777 = vadd.f32 0.0, %v776
      %v778 = vpop.f32.mrb[0].mxu0
      %779 = vmatprep.mubr.bf16.mxu0 %v526
      %780 = vmatmul.mubr.bf16.gmra.mrb[0].mxu0 %v525
      %v781 = vpop.f32.mrb[0].mxu0
      %v782 = vadd.f32 0.0, %v781
      %v783 = vpop.f32.mrb[0].mxu0
      %v784 = vpop.f32.mrb[0].mxu0
      %v785 = vadd.f32 0.0, %v784
      %v786 = vpop.f32.mrb[0].mxu0
      %787 = vmatprep.mubr.bf16.mxu0 %v529
      %788 = vmatmul.mubr.bf16.gmra.mrb[0].mxu0 %v528
      %v789 = vpop.f32.mrb[0].mxu0
      %v790 = vadd.f32 0.0, %v789
      %v791 = vpop.f32.mrb[0].mxu0
      %v792 = vpop.f32.mrb[0].mxu0
      %v793 = vadd.f32 0.0, %v792
      %v794 = vpop.f32.mrb[0].mxu0
      %795 = vdwg.mxu0
      %796 = vmatprep.subr.bf16.mxu0 0
      %797 = vmatpush1.bf16.msra.mxu0 %v667
      %798 = vmatprep.subr.bf16.mxu0 0
      %799 = vmatpush1.bf16.msra.mxu0 %v668
      %800 = vmatprep.subr.bf16.mxu0 0
      %801 = vmatpush1.bf16.msra.mxu0 %v669
      %802 = vmatprep.subr.bf16.mxu0 0
      %803 = vmatpush1.bf16.msra.mxu0 %v670
      %804 = vmatprep.subr.bf16.mxu0 0
      %805 = vmatpush1.bf16.msra.mxu0 %v671
      %806 = vmatprep.subr.bf16.mxu0 0
      %807 = vmatpush1.bf16.msra.mxu0 %v672
      %808 = vmatprep.subr.bf16.mxu0 0
      %809 = vmatpush1.bf16.msra.mxu0 %v673
      %810 = vmatprep.subr.bf16.mxu0 0
      %811 = vmatpush1.bf16.msra.mxu0 %v674
      %812 = vmatprep.subr.bf16.mxu0 0
      %813 = vmatpush1.bf16.msra.mxu0 0
      %814 = vmatprep.subr.bf16.mxu0 0
      %815 = vmatpush1.bf16.msra.mxu0 0
      %816 = vmatprep.subr.bf16.mxu0 0
      %817 = vmatpush1.bf16.msra.mxu0 0
      %818 = vmatprep.subr.bf16.mxu0 0
      %819 = vmatpush1.bf16.msra.mxu0 0
      %820 = vmatprep.subr.bf16.mxu0 0
      %821 = vmatpush1.bf16.msra.mxu0 0
      %822 = vmatprep.subr.bf16.mxu0 0
      %823 = vmatpush1.bf16.msra.mxu0 0
      %824 = vmatprep.subr.bf16.mxu0 0
      %825 = vmatpush1.bf16.msra.mxu0 0
      %826 = vmatprep.subr.bf16.mxu0 0
      %827 = vmatpush1.bf16.msra.mxu0 0
      %828 = vmatprep.mubr.bf16.mxu0 0
      %829 = vmatmul.mubr.bf16.gmra.mrb[0].mxu0 %v509
      %v830 = vpop.f32.mrb[0].mxu0
      %v831 = vadd.f32 %v734, %v830
      %v832 = vpop.f32.mrb[0].mxu0
      %v833 = vpop.f32.mrb[0].mxu0
      %v834 = vadd.f32 %v737, %v833
      %v835 = vpop.f32.mrb[0].mxu0
      %836 = vmatprep.mubr.bf16.mxu0 0
      %837 = vmatmul.mubr.bf16.gmra.mrb[0].mxu0 %v512
      %v838 = vpop.f32.mrb[0].mxu0
      %v839 = vadd.f32 %v742, %v838
      %v840 = vpop.f32.mrb[0].mxu0
      %v841 = vpop.f32.mrb[0].mxu0
      %v842 = vadd.f32 %v745, %v841
      %v843 = vpop.f32.mrb[0].mxu0
      %844 = vmatprep.mubr.bf16.mxu0 0
      %845 = vmatmul.mubr.bf16.gmra.mrb[0].mxu0 %v515
      %v846 = vpop.f32.mrb[0].mxu0
      %v847 = vadd.f32 %v750, %v846
      %v848 = vpop.f32.mrb[0].mxu0
      %v849 = vpop.f32.mrb[0].mxu0
      %v850 = vadd.f32 %v753, %v849
      %v851 = vpop.f32.mrb[0].mxu0
      %852 = vmatprep.mubr.bf16.mxu0 0
      %853 = vmatmul.mubr.bf16.gmra.mrb[0].mxu0 %v518
      %v854 = vpop.f32.mrb[0].mxu0
      %v855 = vadd.f32 %v758, %v854
      %v856 = vpop.f32.mrb[0].mxu0
      %v857 = vpop.f32.mrb[0].mxu0
      %v858 = vadd.f32 %v761, %v857
      %v859 = vpop.f32.mrb[0].mxu0
      %860 = vmatprep.mubr.bf16.mxu0 0
      %861 = vmatmul.mubr.bf16.gmra.mrb[0].mxu0 %v521
      %v862 = vpop.f32.mrb[0].mxu0
      %v863 = vadd.f32 %v766, %v862
      %v864 = vpop.f32.mrb[0].mxu0
      %v865 = vpop.f32.mrb[0].mxu0
      %v866 = vadd.f32 %v769, %v865
      %v867 = vpop.f32.mrb[0].mxu0
      %868 = vmatprep.mubr.bf16.mxu0 0
      %869 = vmatmul.mubr.bf16.gmra.mrb[0].mxu0 %v524
      %v870 = vpop.f32.mrb[0].mxu0
      %v871 = vadd.f32 %v774, %v870
      %v872 = vpop.f32.mrb[0].mxu0
      %v873 = vpop.f32.mrb[0].mxu0
      %v874 = vadd.f32 %v777, %v873
      %v875 = vpop.f32.mrb[0].mxu0
      %876 = vmatprep.mubr.bf16.mxu0 0
      %877 = vmatmul.mubr.bf16.gmra.mrb[0].mxu0 %v527
      %v878 = vpop.f32.mrb[0].mxu0
      %v879 = vadd.f32 %v782, %v878
      %v880 = vpop.f32.mrb[0].mxu0
      %v881 = vpop.f32.mrb[0].mxu0
      %v882 = vadd.f32 %v785, %v881
      %v883 = vpop.f32.mrb[0].mxu0
      %884 = vmatprep.mubr.bf16.mxu0 0
      %885 = vmatmul.mubr.bf16.gmra.mrb[0].mxu0 %v530
      %v886 = vpop.f32.mrb[0].mxu0
      %v887 = vadd.f32 %v790, %v886
      %v888 = vpop.f32.mrb[0].mxu0
      %v889 = vpop.f32.mrb[0].mxu0
      %v890 = vadd.f32 %v793, %v889
      %v891 = vpop.f32.mrb[0].mxu0
      %892 = vdwg.mxu0
      %v925 = vunpack.c.l.b16 %v262
      %v926 = vunpack.c.h.b16 %v262
      %v927 = vunpack.c.l.b16 %v263
      %v928 = vunpack.c.l.b16 %v264
      %v929 = vunpack.c.h.b16 %v264
      %v930 = vunpack.c.l.b16 %v265
      %v931 = vunpack.c.l.b16 %v266
      %v932 = vunpack.c.h.b16 %v266
      %v933 = vunpack.c.l.b16 %v267
      %v934 = vunpack.c.l.b16 %v268
      %v935 = vunpack.c.h.b16 %v268
      %v936 = vunpack.c.l.b16 %v269
      %v937 = vunpack.c.l.b16 %v270
      %v938 = vunpack.c.h.b16 %v270
      %v939 = vunpack.c.l.b16 %v271
      %v940 = vunpack.c.l.b16 %v272
      %v941 = vunpack.c.h.b16 %v272
      %v942 = vunpack.c.l.b16 %v273
      %v943 = vunpack.c.l.b16 %v274
      %v944 = vunpack.c.h.b16 %v274
      %v945 = vunpack.c.l.b16 %v275
      %v946 = vunpack.c.l.b16 %v276
      %v947 = vunpack.c.h.b16 %v276
      %v948 = vunpack.c.l.b16 %v277
      %v949 = vunpack.c.l.b16 %v278
      %v950 = vunpack.c.h.b16 %v278
      %v951 = vunpack.c.l.b16 %v279
      %v952 = vunpack.c.l.b16 %v280
      %v953 = vunpack.c.h.b16 %v280
      %v954 = vunpack.c.l.b16 %v281
      %v955 = vunpack.c.l.b16 %v282
      %v956 = vunpack.c.h.b16 %v282
      %v957 = vunpack.c.l.b16 %v283
      %v958 = vunpack.c.l.b16 %v284
      %v959 = vunpack.c.h.b16 %v284
      %v960 = vunpack.c.l.b16 %v285
      %v961 = vunpack.c.l.b16 %v286
      %v962 = vunpack.c.h.b16 %v286
      %v963 = vunpack.c.l.b16 %v287
      %v964 = vunpack.c.l.b16 %v288
      %v965 = vunpack.c.h.b16 %v288
      %v966 = vunpack.c.l.b16 %v289
      %v967 = vunpack.c.l.b16 %v290
      %v968 = vunpack.c.h.b16 %v290
      %v969 = vunpack.c.l.b16 %v291
      %v970 = vunpack.c.l.b16 %v292
      %v971 = vunpack.c.h.b16 %v292
      %v972 = vunpack.c.l.b16 %v293
      %v973 = vpack.c.b16 %v928, %v925
      %v974 = vpack.c.b16 %v929, %v926
      %v975 = vpack.c.b16 %v930, %v927
      %v976 = vpack.c.b16 %v934, %v931
      %v977 = vpack.c.b16 %v935, %v932
      %v978 = vpack.c.b16 %v936, %v933
      %v979 = vpack.c.b16 %v940, %v937
      %v980 = vpack.c.b16 %v941, %v938
      %v981 = vpack.c.b16 %v942, %v939
      %v982 = vpack.c.b16 %v946, %v943
      %v983 = vpack.c.b16 %v947, %v944
      %v984 = vpack.c.b16 %v948, %v945
      %v985 = vpack.c.b16 %v952, %v949
      %v986 = vpack.c.b16 %v953, %v950
      %v987 = vpack.c.b16 %v954, %v951
      %v988 = vpack.c.b16 %v958, %v955
      %v989 = vpack.c.b16 %v959, %v956
      %v990 = vpack.c.b16 %v960, %v957
      %v991 = vpack.c.b16 %v964, %v961
      %v992 = vpack.c.b16 %v965, %v962
      %v993 = vpack.c.b16 %v966, %v963
      %v994 = vpack.c.b16 %v970, %v967
      %v995 = vpack.c.b16 %v971, %v968
      %v996 = vpack.c.b16 %v972, %v969
      %v1069 = vunpack.c.l.b16 %v294
      %v1070 = vunpack.c.l.b16 %v295
      %v1071 = vunpack.c.l.b16 %v296
      %v1072 = vunpack.c.l.b16 %v297
      %v1073 = vunpack.c.l.b16 %v298
      %v1074 = vunpack.c.l.b16 %v299
      %v1075 = vunpack.c.l.b16 %v300
      %v1076 = vunpack.c.l.b16 %v301
      %v1077 = vunpack.c.l.b16 %v302
      %v1078 = vunpack.c.l.b16 %v303
      %v1079 = vunpack.c.l.b16 %v304
      %v1080 = vunpack.c.l.b16 %v305
      %v1081 = vunpack.c.l.b16 %v306
      %v1082 = vunpack.c.l.b16 %v307
      %v1083 = vunpack.c.l.b16 %v308
      %v1084 = vunpack.c.l.b16 %v309
      %v1085 = vunpack.c.l.b16 %v310
      %v1086 = vunpack.c.l.b16 %v311
      %v1087 = vunpack.c.l.b16 %v312
      %v1088 = vunpack.c.l.b16 %v313
      %v1089 = vunpack.c.l.b16 %v314
      %v1090 = vunpack.c.l.b16 %v315
      %v1091 = vunpack.c.l.b16 %v316
      %v1092 = vunpack.c.l.b16 %v317
      %v1093 = vunpack.c.l.b16 %v318
      %v1094 = vunpack.c.l.b16 %v319
      %v1095 = vunpack.c.l.b16 %v320
      %v1096 = vunpack.c.l.b16 %v321
      %v1097 = vunpack.c.l.b16 %v322
      %v1098 = vunpack.c.l.b16 %v323
      %v1099 = vunpack.c.l.b16 %v324
      %v1100 = vunpack.c.l.b16 %v325
      %v1101 = vunpack.c.l.b16 %v326
      %v1102 = vunpack.c.l.b16 %v327
      %v1103 = vunpack.c.l.b16 %v328
      %v1104 = vunpack.c.l.b16 %v329
      %v1105 = vunpack.c.l.b16 %v330
      %v1106 = vunpack.c.l.b16 %v331
      %v1107 = vunpack.c.l.b16 %v332
      %v1108 = vunpack.c.l.b16 %v333
      %v1109 = vunpack.c.l.b16 %v334
      %v1110 = vunpack.c.l.b16 %v335
      %v1111 = vunpack.c.l.b16 %v336
      %v1112 = vunpack.c.l.b16 %v337
      %v1113 = vunpack.c.l.b16 %v338
      %v1114 = vunpack.c.l.b16 %v339
      %v1115 = vunpack.c.l.b16 %v340
      %v1116 = vunpack.c.l.b16 %v341
      %v1117 = vpack.c.b16 %v1070, %v1069
      %v1118 = vpack.c.b16 %v1072, %v1071
      %v1119 = vpack.c.b16 %v1074, %v1073
      %v1120 = vpack.c.b16 %v1076, %v1075
      %v1121 = vpack.c.b16 %v1078, %v1077
      %v1122 = vpack.c.b16 %v1080, %v1079
      %v1123 = vpack.c.b16 %v1082, %v1081
      %v1124 = vpack.c.b16 %v1084, %v1083
      %v1125 = vpack.c.b16 %v1086, %v1085
      %v1126 = vpack.c.b16 %v1088, %v1087
      %v1127 = vpack.c.b16 %v1090, %v1089
      %v1128 = vpack.c.b16 %v1092, %v1091
      %v1129 = vpack.c.b16 %v1094, %v1093
      %v1130 = vpack.c.b16 %v1096, %v1095
      %v1131 = vpack.c.b16 %v1098, %v1097
      %v1132 = vpack.c.b16 %v1100, %v1099
      %v1133 = vpack.c.b16 %v1102, %v1101
      %v1134 = vpack.c.b16 %v1104, %v1103
      %v1135 = vpack.c.b16 %v1106, %v1105
      %v1136 = vpack.c.b16 %v1108, %v1107
      %v1137 = vpack.c.b16 %v1110, %v1109
      %v1138 = vpack.c.b16 %v1112, %v1111
      %v1139 = vpack.c.b16 %v1114, %v1113
      %v1140 = vpack.c.b16 %v1116, %v1115
      %1165 = vmatprep.subr.bf16.mxu0 0
      %1166 = vmatpush1.bf16.msra.mxu0 %v1117
      %1167 = vmatprep.subr.bf16.mxu0 0
      %1168 = vmatpush1.bf16.msra.mxu0 %v1118
      %1169 = vmatprep.subr.bf16.mxu0 0
      %1170 = vmatpush1.bf16.msra.mxu0 %v1119
      %1171 = vmatprep.subr.bf16.mxu0 0
      %1172 = vmatpush1.bf16.msra.mxu0 %v1120
      %1173 = vmatprep.subr.bf16.mxu0 0
      %1174 = vmatpush1.bf16.msra.mxu0 %v1121
      %1175 = vmatprep.subr.bf16.mxu0 0
      %1176 = vmatpush1.bf16.msra.mxu0 %v1122
      %1177 = vmatprep.subr.bf16.mxu0 0
      %1178 = vmatpush1.bf16.msra.mxu0 %v1123
      %1179 = vmatprep.subr.bf16.mxu0 0
      %1180 = vmatpush1.bf16.msra.mxu0 %v1124
      %1181 = vmatprep.subr.bf16.mxu0 0
      %1182 = vmatpush1.bf16.msra.mxu0 %v1125
      %1183 = vmatprep.subr.bf16.mxu0 0
      %1184 = vmatpush1.bf16.msra.mxu0 %v1126
      %1185 = vmatprep.subr.bf16.mxu0 0
      %1186 = vmatpush1.bf16.msra.mxu0 %v1127
      %1187 = vmatprep.subr.bf16.mxu0 0
      %1188 = vmatpush1.bf16.msra.mxu0 %v1128
      %1189 = vmatprep.subr.bf16.mxu0 0
      %1190 = vmatpush1.bf16.msra.mxu0 %v1129
      %1191 = vmatprep.subr.bf16.mxu0 0
      %1192 = vmatpush1.bf16.msra.mxu0 %v1130
      %1193 = vmatprep.subr.bf16.mxu0 0
      %1194 = vmatpush1.bf16.msra.mxu0 %v1131
      %1195 = vmatprep.subr.bf16.mxu0 0
      %1196 = vmatpush1.bf16.msra.mxu0 %v1132
      %1197 = vmatprep.mubr.bf16.mxu0 %v974
      %1198 = vmatmul.mubr.bf16.gmra.mrb[0].mxu0 %v973
      %v1199 = vpop.f32.mrb[0].mxu0
      %v1200 = vadd.f32 %v831, %v1199
      %v1201 = vpop.f32.mrb[0].mxu0
      %v1202 = vpop.f32.mrb[0].mxu0
      %v1203 = vadd.f32 %v834, %v1202
      %v1204 = vpop.f32.mrb[0].mxu0
      %1205 = vmatprep.mubr.bf16.mxu0 %v977
      %1206 = vmatmul.mubr.bf16.gmra.mrb[0].mxu0 %v976
      %v1207 = vpop.f32.mrb[0].mxu0
      %v1208 = vadd.f32 %v839, %v1207
      %v1209 = vpop.f32.mrb[0].mxu0
      %v1210 = vpop.f32.mrb[0].mxu0
      %v1211 = vadd.f32 %v842, %v1210
      %v1212 = vpop.f32.mrb[0].mxu0
      %1213 = vmatprep.mubr.bf16.mxu0 %v980
      %1214 = vmatmul.mubr.bf16.gmra.mrb[0].mxu0 %v979
      %v1215 = vpop.f32.mrb[0].mxu0
      %v1216 = vadd.f32 %v847, %v1215
      %v1217 = vpop.f32.mrb[0].mxu0
      %v1218 = vpop.f32.mrb[0].mxu0
      %v1219 = vadd.f32 %v850, %v1218
      %v1220 = vpop.f32.mrb[0].mxu0
      %1221 = vmatprep.mubr.bf16.mxu0 %v983
      %1222 = vmatmul.mubr.bf16.gmra.mrb[0].mxu0 %v982
      %v1223 = vpop.f32.mrb[0].mxu0
      %v1224 = vadd.f32 %v855, %v1223
      %v1225 = vpop.f32.mrb[0].mxu0
      %v1226 = vpop.f32.mrb[0].mxu0
      %v1227 = vadd.f32 %v858, %v1226
      %v1228 = vpop.f32.mrb[0].mxu0
      %1229 = vmatprep.mubr.bf16.mxu0 %v986
      %1230 = vmatmul.mubr.bf16.gmra.mrb[0].mxu0 %v985
      %v1231 = vpop.f32.mrb[0].mxu0
      %v1232 = vadd.f32 %v863, %v1231
      %v1233 = vpop.f32.mrb[0].mxu0
      %v1234 = vpop.f32.mrb[0].mxu0
      %v1235 = vadd.f32 %v866, %v1234
      %v1236 = vpop.f32.mrb[0].mxu0
      %1237 = vmatprep.mubr.bf16.mxu0 %v989
      %1238 = vmatmul.mubr.bf16.gmra.mrb[0].mxu0 %v988
      %v1239 = vpop.f32.mrb[0].mxu0
      %v1240 = vadd.f32 %v871, %v1239
      %v1241 = vpop.f32.mrb[0].mxu0
      %v1242 = vpop.f32.mrb[0].mxu0
      %v1243 = vadd.f32 %v874, %v1242
      %v1244 = vpop.f32.mrb[0].mxu0
      %1245 = vmatprep.mubr.bf16.mxu0 %v992
      %1246 = vmatmul.mubr.bf16.gmra.mrb[0].mxu0 %v991
      %v1247 = vpop.f32.mrb[0].mxu0
      %v1248 = vadd.f32 %v879, %v1247
      %v1249 = vpop.f32.mrb[0].mxu0
      %v1250 = vpop.f32.mrb[0].mxu0
      %v1251 = vadd.f32 %v882, %v1250
      %v1252 = vpop.f32.mrb[0].mxu0
      %1253 = vmatprep.mubr.bf16.mxu0 %v995
      %1254 = vmatmul.mubr.bf16.gmra.mrb[0].mxu0 %v994
      %v1255 = vpop.f32.mrb[0].mxu0
      %v1256 = vadd.f32 %v887, %v1255
      %v1257 = vpop.f32.mrb[0].mxu0
      %v1258 = vpop.f32.mrb[0].mxu0
      %v1259 = vadd.f32 %v890, %v1258
      %v1260 = vpop.f32.mrb[0].mxu0
      %1261 = vdwg.mxu0
      %1262 = vmatprep.subr.bf16.mxu0 0
      %1263 = vmatpush1.bf16.msra.mxu0 %v1133
      %1264 = vmatprep.subr.bf16.mxu0 0
      %1265 = vmatpush1.bf16.msra.mxu0 %v1134
      %1266 = vmatprep.subr.bf16.mxu0 0
      %1267 = vmatpush1.bf16.msra.mxu0 %v1135
      %1268 = vmatprep.subr.bf16.mxu0 0
      %1269 = vmatpush1.bf16.msra.mxu0 %v1136
      %1270 = vmatprep.subr.bf16.mxu0 0
      %1271 = vmatpush1.bf16.msra.mxu0 %v1137
      %1272 = vmatprep.subr.bf16.mxu0 0
      %1273 = vmatpush1.bf16.msra.mxu0 %v1138
      %1274 = vmatprep.subr.bf16.mxu0 0
      %1275 = vmatpush1.bf16.msra.mxu0 %v1139
      %1276 = vmatprep.subr.bf16.mxu0 0
      %1277 = vmatpush1.bf16.msra.mxu0 %v1140
      %1278 = vmatprep.subr.bf16.mxu0 0
      %1279 = vmatpush1.bf16.msra.mxu0 0
      %1280 = vmatprep.subr.bf16.mxu0 0
      %1281 = vmatpush1.bf16.msra.mxu0 0
      %1282 = vmatprep.subr.bf16.mxu0 0
      %1283 = vmatpush1.bf16.msra.mxu0 0
      %1284 = vmatprep.subr.bf16.mxu0 0
      %1285 = vmatpush1.bf16.msra.mxu0 0
      %1286 = vmatprep.subr.bf16.mxu0 0
      %1287 = vmatpush1.bf16.msra.mxu0 0
      %1288 = vmatprep.subr.bf16.mxu0 0
      %1289 = vmatpush1.bf16.msra.mxu0 0
      %1290 = vmatprep.subr.bf16.mxu0 0
      %1291 = vmatpush1.bf16.msra.mxu0 0
      %1292 = vmatprep.subr.bf16.mxu0 0
      %1293 = vmatpush1.bf16.msra.mxu0 0
      %1294 = vmatprep.mubr.bf16.mxu0 0
      %1295 = vmatmul.mubr.bf16.gmra.mrb[0].mxu0 %v975
      %v1296 = vpop.f32.mrb[0].mxu0
      %v1297 = vadd.f32 %v1200, %v1296
      %v1298 = vpop.f32.mrb[0].mxu0
      %v1299 = vpop.f32.mrb[0].mxu0
      %v1300 = vadd.f32 %v1203, %v1299
      %v1301 = vpop.f32.mrb[0].mxu0
      %1302 = vmatprep.mubr.bf16.mxu0 0
      %1303 = vmatmul.mubr.bf16.gmra.mrb[0].mxu0 %v978
      %v1304 = vpop.f32.mrb[0].mxu0
      %v1305 = vadd.f32 %v1208, %v1304
      %v1306 = vpop.f32.mrb[0].mxu0
      %v1307 = vpop.f32.mrb[0].mxu0
      %v1308 = vadd.f32 %v1211, %v1307
      %v1309 = vpop.f32.mrb[0].mxu0
      %1310 = vmatprep.mubr.bf16.mxu0 0
      %1311 = vmatmul.mubr.bf16.gmra.mrb[0].mxu0 %v981
      %v1312 = vpop.f32.mrb[0].mxu0
      %v1313 = vadd.f32 %v1216, %v1312
      %v1314 = vpop.f32.mrb[0].mxu0
      %v1315 = vpop.f32.mrb[0].mxu0
      %v1316 = vadd.f32 %v1219, %v1315
      %v1317 = vpop.f32.mrb[0].mxu0
      %1318 = vmatprep.mubr.bf16.mxu0 0
      %1319 = vmatmul.mubr.bf16.gmra.mrb[0].mxu0 %v984
      %v1320 = vpop.f32.mrb[0].mxu0
      %v1321 = vadd.f32 %v1224, %v1320
      %v1322 = vpop.f32.mrb[0].mxu0
      %v1323 = vpop.f32.mrb[0].mxu0
      %v1324 = vadd.f32 %v1227, %v1323
      %v1325 = vpop.f32.mrb[0].mxu0
      %1326 = vmatprep.mubr.bf16.mxu0 0
      %1327 = vmatmul.mubr.bf16.gmra.mrb[0].mxu0 %v987
      %v1328 = vpop.f32.mrb[0].mxu0
      %v1329 = vadd.f32 %v1232, %v1328
      %v1330 = vpop.f32.mrb[0].mxu0
      %v1331 = vpop.f32.mrb[0].mxu0
      %v1332 = vadd.f32 %v1235, %v1331
      %v1333 = vpop.f32.mrb[0].mxu0
      %1334 = vmatprep.mubr.bf16.mxu0 0
      %1335 = vmatmul.mubr.bf16.gmra.mrb[0].mxu0 %v990
      %v1336 = vpop.f32.mrb[0].mxu0
      %v1337 = vadd.f32 %v1240, %v1336
      %v1338 = vpop.f32.mrb[0].mxu0
      %v1339 = vpop.f32.mrb[0].mxu0
      %v1340 = vadd.f32 %v1243, %v1339
      %v1341 = vpop.f32.mrb[0].mxu0
      %1342 = vmatprep.mubr.bf16.mxu0 0
      %1343 = vmatmul.mubr.bf16.gmra.mrb[0].mxu0 %v993
      %v1344 = vpop.f32.mrb[0].mxu0
      %v1345 = vadd.f32 %v1248, %v1344
      %v1346 = vpop.f32.mrb[0].mxu0
      %v1347 = vpop.f32.mrb[0].mxu0
      %v1348 = vadd.f32 %v1251, %v1347
      %v1349 = vpop.f32.mrb[0].mxu0
      %1350 = vmatprep.mubr.bf16.mxu0 0
      %1351 = vmatmul.mubr.bf16.gmra.mrb[0].mxu0 %v996
      %v1352 = vpop.f32.mrb[0].mxu0
      %v1353 = vadd.f32 %v1256, %v1352
      %v1354 = vpop.f32.mrb[0].mxu0
      %v1355 = vpop.f32.mrb[0].mxu0
      %v1356 = vadd.f32 %v1259, %v1355
      %v1357 = vpop.f32.mrb[0].mxu0
      %1358 = vdwg.mxu0
      %s1359 = sadd.s32 %s258, 4
      %s1360 = smul.u32 %s1359, 6
      %s1361 = smul.addr %s1360, 4
      %s1362 = scalar_lea.vmem %s227, %s1361
      %v1363 = vld [vmem:[%s1362] sm:$0xff]
      %v1364 = vld [vmem:[%s1362 + $0x8] sm:$0xf]
      %v1365 = vld [vmem:[%s1362 + $0xc] sm:$0xff]
      %v1366 = vld [vmem:[%s1362 + $0x14] sm:$0xf]
      %v1367 = vld [vmem:[%s1362 + $0x18] sm:$0xff]
      %v1368 = vld [vmem:[%s1362 + $0x20] sm:$0xf]
      %v1369 = vld [vmem:[%s1362 + $0x24] sm:$0xff]
      %v1370 = vld [vmem:[%s1362 + $0x2c] sm:$0xf]
      %v1371 = vld [vmem:[%s1362 + $0x30] sm:$0xff]
      %v1372 = vld [vmem:[%s1362 + $0x38] sm:$0xf]
      %v1373 = vld [vmem:[%s1362 + $0x3c] sm:$0xff]
      %v1374 = vld [vmem:[%s1362 + $0x44] sm:$0xf]
      %v1375 = vld [vmem:[%s1362 + $0x48] sm:$0xff]
      %v1376 = vld [vmem:[%s1362 + $0x50] sm:$0xf]
      %v1377 = vld [vmem:[%s1362 + $0x54] sm:$0xff]
      %v1378 = vld [vmem:[%s1362 + $0x5c] sm:$0xf]
      %v1379 = vld [vmem:[%s1362 + $0x60] sm:$0xff]
      %v1380 = vld [vmem:[%s1362 + $0x68] sm:$0xf]
      %v1381 = vld [vmem:[%s1362 + $0x6c] sm:$0xff]
      %v1382 = vld [vmem:[%s1362 + $0x74] sm:$0xf]
      %v1383 = vld [vmem:[%s1362 + $0x78] sm:$0xff]
      %v1384 = vld [vmem:[%s1362 + $0x80] sm:$0xf]
      %v1385 = vld [vmem:[%s1362 + $0x84] sm:$0xff]
      %v1386 = vld [vmem:[%s1362 + $0x8c] sm:$0xf]
      %v1387 = vld [vmem:[%s1362 + $0x90] sm:$0xff]
      %v1388 = vld [vmem:[%s1362 + $0x98] sm:$0xf]
      %v1389 = vld [vmem:[%s1362 + $0x9c] sm:$0xff]
      %v1390 = vld [vmem:[%s1362 + $0xa4] sm:$0xf]
      %v1391 = vld [vmem:[%s1362 + $0xa8] sm:$0xff]
      %v1392 = vld [vmem:[%s1362 + $0xb0] sm:$0xf]
      %v1393 = vld [vmem:[%s1362 + $0xb4] sm:$0xff]
      %v1394 = vld [vmem:[%s1362 + $0xbc] sm:$0xf]
      %s1395 = scalar_lea.vmem %s231, 384
      %v1396 = vld [vmem:[%s1395] sm:$0xf]
      %v1397 = vld [vmem:[%s1395 + $0x4] sm:$0xf]
      %v1398 = vld [vmem:[%s1395 + $0x8] sm:$0xf]
      %v1399 = vld [vmem:[%s1395 + $0xc] sm:$0xf]
      %v1400 = vld [vmem:[%s1395 + $0x10] sm:$0xf]
      %v1401 = vld [vmem:[%s1395 + $0x14] sm:$0xf]
      %v1402 = vld [vmem:[%s1395 + $0x18] sm:$0xf]
      %v1403 = vld [vmem:[%s1395 + $0x1c] sm:$0xf]
      %v1404 = vld [vmem:[%s1395 + $0x20] sm:$0xf]
      %v1405 = vld [vmem:[%s1395 + $0x24] sm:$0xf]
      %v1406 = vld [vmem:[%s1395 + $0x28] sm:$0xf]
      %v1407 = vld [vmem:[%s1395 + $0x2c] sm:$0xf]
      %v1408 = vld [vmem:[%s1395 + $0x30] sm:$0xf]
      %v1409 = vld [vmem:[%s1395 + $0x34] sm:$0xf]
      %v1410 = vld [vmem:[%s1395 + $0x38] sm:$0xf]
      %v1411 = vld [vmem:[%s1395 + $0x3c] sm:$0xf]
      %v1412 = vld [vmem:[%s1395 + $0x40] sm:$0xf]
      %v1413 = vld [vmem:[%s1395 + $0x44] sm:$0xf]
      %v1414 = vld [vmem:[%s1395 + $0x48] sm:$0xf]
      %v1415 = vld [vmem:[%s1395 + $0x4c] sm:$0xf]
      %v1416 = vld [vmem:[%s1395 + $0x50] sm:$0xf]
      %v1417 = vld [vmem:[%s1395 + $0x54] sm:$0xf]
      %v1418 = vld [vmem:[%s1395 + $0x58] sm:$0xf]
      %v1419 = vld [vmem:[%s1395 + $0x5c] sm:$0xf]
      %v1420 = vld [vmem:[%s1395 + $0x60] sm:$0xf]
      %v1421 = vld [vmem:[%s1395 + $0x64] sm:$0xf]
      %v1422 = vld [vmem:[%s1395 + $0x68] sm:$0xf]
      %v1423 = vld [vmem:[%s1395 + $0x6c] sm:$0xf]
      %v1424 = vld [vmem:[%s1395 + $0x70] sm:$0xf]
      %v1425 = vld [vmem:[%s1395 + $0x74] sm:$0xf]
      %v1426 = vld [vmem:[%s1395 + $0x78] sm:$0xf]
      %v1427 = vld [vmem:[%s1395 + $0x7c] sm:$0xf]
      %v1428 = vld [vmem:[%s1395 + $0x80] sm:$0xf]
      %v1429 = vld [vmem:[%s1395 + $0x84] sm:$0xf]
      %v1430 = vld [vmem:[%s1395 + $0x88] sm:$0xf]
      %v1431 = vld [vmem:[%s1395 + $0x8c] sm:$0xf]
      %v1432 = vld [vmem:[%s1395 + $0x90] sm:$0xf]
      %v1433 = vld [vmem:[%s1395 + $0x94] sm:$0xf]
      %v1434 = vld [vmem:[%s1395 + $0x98] sm:$0xf]
      %v1435 = vld [vmem:[%s1395 + $0x9c] sm:$0xf]
      %v1436 = vld [vmem:[%s1395 + $0xa0] sm:$0xf]
      %v1437 = vld [vmem:[%s1395 + $0xa4] sm:$0xf]
      %v1438 = vld [vmem:[%s1395 + $0xa8] sm:$0xf]
      %v1439 = vld [vmem:[%s1395 + $0xac] sm:$0xf]
      %v1440 = vld [vmem:[%s1395 + $0xb0] sm:$0xf]
      %v1441 = vld [vmem:[%s1395 + $0xb4] sm:$0xf]
      %v1442 = vld [vmem:[%s1395 + $0xb8] sm:$0xf]
      %v1443 = vld [vmem:[%s1395 + $0xbc] sm:$0xf]
      %v1476 = vunpack.c.l.b16 %v1363
      %v1477 = vunpack.c.h.b16 %v1363
      %v1478 = vunpack.c.l.b16 %v1364
      %v1479 = vunpack.c.l.b16 %v1365
      %v1480 = vunpack.c.h.b16 %v1365
      %v1481 = vunpack.c.l.b16 %v1366
      %v1482 = vunpack.c.l.b16 %v1367
      %v1483 = vunpack.c.h.b16 %v1367
      %v1484 = vunpack.c.l.b16 %v1368
      %v1485 = vunpack.c.l.b16 %v1369
      %v1486 = vunpack.c.h.b16 %v1369
      %v1487 = vunpack.c.l.b16 %v1370
      %v1488 = vunpack.c.l.b16 %v1371
      %v1489 = vunpack.c.h.b16 %v1371
      %v1490 = vunpack.c.l.b16 %v1372
      %v1491 = vunpack.c.l.b16 %v1373
      %v1492 = vunpack.c.h.b16 %v1373
      %v1493 = vunpack.c.l.b16 %v1374
      %v1494 = vunpack.c.l.b16 %v1375
      %v1495 = vunpack.c.h.b16 %v1375
      %v1496 = vunpack.c.l.b16 %v1376
      %v1497 = vunpack.c.l.b16 %v1377
      %v1498 = vunpack.c.h.b16 %v1377
      %v1499 = vunpack.c.l.b16 %v1378
      %v1500 = vunpack.c.l.b16 %v1379
      %v1501 = vunpack.c.h.b16 %v1379
      %v1502 = vunpack.c.l.b16 %v1380
      %v1503 = vunpack.c.l.b16 %v1381
      %v1504 = vunpack.c.h.b16 %v1381
      %v1505 = vunpack.c.l.b16 %v1382
      %v1506 = vunpack.c.l.b16 %v1383
      %v1507 = vunpack.c.h.b16 %v1383
      %v1508 = vunpack.c.l.b16 %v1384
      %v1509 = vunpack.c.l.b16 %v1385
      %v1510 = vunpack.c.h.b16 %v1385
      %v1511 = vunpack.c.l.b16 %v1386
      %v1512 = vunpack.c.l.b16 %v1387
      %v1513 = vunpack.c.h.b16 %v1387
      %v1514 = vunpack.c.l.b16 %v1388
      %v1515 = vunpack.c.l.b16 %v1389
      %v1516 = vunpack.c.h.b16 %v1389
      %v1517 = vunpack.c.l.b16 %v1390
      %v1518 = vunpack.c.l.b16 %v1391
      %v1519 = vunpack.c.h.b16 %v1391
      %v1520 = vunpack.c.l.b16 %v1392
      %v1521 = vunpack.c.l.b16 %v1393
      %v1522 = vunpack.c.h.b16 %v1393
      %v1523 = vunpack.c.l.b16 %v1394
      %v1524 = vpack.c.b16 %v1479, %v1476
      %v1525 = vpack.c.b16 %v1480, %v1477
      %v1526 = vpack.c.b16 %v1481, %v1478
      %v1527 = vpack.c.b16 %v1485, %v1482
      %v1528 = vpack.c.b16 %v1486, %v1483
      %v1529 = vpack.c.b16 %v1487, %v1484
      %v1530 = vpack.c.b16 %v1491, %v1488
      %v1531 = vpack.c.b16 %v1492, %v1489
      %v1532 = vpack.c.b16 %v1493, %v1490
      %v1533 = vpack.c.b16 %v1497, %v1494
      %v1534 = vpack.c.b16 %v1498, %v1495
      %v1535 = vpack.c.b16 %v1499, %v1496
      %v1536 = vpack.c.b16 %v1503, %v1500
      %v1537 = vpack.c.b16 %v1504, %v1501
      %v1538 = vpack.c.b16 %v1505, %v1502
      %v1539 = vpack.c.b16 %v1509, %v1506
      %v1540 = vpack.c.b16 %v1510, %v1507
      %v1541 = vpack.c.b16 %v1511, %v1508
      %v1542 = vpack.c.b16 %v1515, %v1512
      %v1543 = vpack.c.b16 %v1516, %v1513
      %v1544 = vpack.c.b16 %v1517, %v1514
      %v1545 = vpack.c.b16 %v1521, %v1518
      %v1546 = vpack.c.b16 %v1522, %v1519
      %v1547 = vpack.c.b16 %v1523, %v1520
      %v1620 = vunpack.c.l.b16 %v1396
      %v1621 = vunpack.c.l.b16 %v1397
      %v1622 = vunpack.c.l.b16 %v1398
      %v1623 = vunpack.c.l.b16 %v1399
      %v1624 = vunpack.c.l.b16 %v1400
      %v1625 = vunpack.c.l.b16 %v1401
      %v1626 = vunpack.c.l.b16 %v1402
      %v1627 = vunpack.c.l.b16 %v1403
      %v1628 = vunpack.c.l.b16 %v1404
      %v1629 = vunpack.c.l.b16 %v1405
      %v1630 = vunpack.c.l.b16 %v1406
      %v1631 = vunpack.c.l.b16 %v1407
      %v1632 = vunpack.c.l.b16 %v1408
      %v1633 = vunpack.c.l.b16 %v1409
      %v1634 = vunpack.c.l.b16 %v1410
      %v1635 = vunpack.c.l.b16 %v1411
      %v1636 = vunpack.c.l.b16 %v1412
      %v1637 = vunpack.c.l.b16 %v1413
      %v1638 = vunpack.c.l.b16 %v1414
      %v1639 = vunpack.c.l.b16 %v1415
      %v1640 = vunpack.c.l.b16 %v1416
      %v1641 = vunpack.c.l.b16 %v1417
      %v1642 = vunpack.c.l.b16 %v1418
      %v1643 = vunpack.c.l.b16 %v1419
      %v1644 = vunpack.c.l.b16 %v1420
      %v1645 = vunpack.c.l.b16 %v1421
      %v1646 = vunpack.c.l.b16 %v1422
      %v1647 = vunpack.c.l.b16 %v1423
      %v1648 = vunpack.c.l.b16 %v1424
      %v1649 = vunpack.c.l.b16 %v1425
      %v1650 = vunpack.c.l.b16 %v1426
      %v1651 = vunpack.c.l.b16 %v1427
      %v1652 = vunpack.c.l.b16 %v1428
      %v1653 = vunpack.c.l.b16 %v1429
      %v1654 = vunpack.c.l.b16 %v1430
      %v1655 = vunpack.c.l.b16 %v1431
      %v1656 = vunpack.c.l.b16 %v1432
      %v1657 = vunpack.c.l.b16 %v1433
      %v1658 = vunpack.c.l.b16 %v1434
      %v1659 = vunpack.c.l.b16 %v1435
      %v1660 = vunpack.c.l.b16 %v1436
      %v1661 = vunpack.c.l.b16 %v1437
      %v1662 = vunpack.c.l.b16 %v1438
      %v1663 = vunpack.c.l.b16 %v1439
      %v1664 = vunpack.c.l.b16 %v1440
      %v1665 = vunpack.c.l.b16 %v1441
      %v1666 = vunpack.c.l.b16 %v1442
      %v1667 = vunpack.c.l.b16 %v1443
      %v1668 = vpack.c.b16 %v1621, %v1620
      %v1669 = vpack.c.b16 %v1623, %v1622
      %v1670 = vpack.c.b16 %v1625, %v1624
      %v1671 = vpack.c.b16 %v1627, %v1626
      %v1672 = vpack.c.b16 %v1629, %v1628
      %v1673 = vpack.c.b16 %v1631, %v1630
      %v1674 = vpack.c.b16 %v1633, %v1632
      %v1675 = vpack.c.b16 %v1635, %v1634
      %v1676 = vpack.c.b16 %v1637, %v1636
      %v1677 = vpack.c.b16 %v1639, %v1638
      %v1678 = vpack.c.b16 %v1641, %v1640
      %v1679 = vpack.c.b16 %v1643, %v1642
      %v1680 = vpack.c.b16 %v1645, %v1644
      %v1681 = vpack.c.b16 %v1647, %v1646
      %v1682 = vpack.c.b16 %v1649, %v1648
      %v1683 = vpack.c.b16 %v1651, %v1650
      %v1684 = vpack.c.b16 %v1653, %v1652
      %v1685 = vpack.c.b16 %v1655, %v1654
      %v1686 = vpack.c.b16 %v1657, %v1656
      %v1687 = vpack.c.b16 %v1659, %v1658
      %v1688 = vpack.c.b16 %v1661, %v1660
      %v1689 = vpack.c.b16 %v1663, %v1662
      %v1690 = vpack.c.b16 %v1665, %v1664
      %v1691 = vpack.c.b16 %v1667, %v1666
      %1716 = vmatprep.subr.bf16.mxu0 0
      %1717 = vmatpush1.bf16.msra.mxu0 %v1668
      %1718 = vmatprep.subr.bf16.mxu0 0
      %1719 = vmatpush1.bf16.msra.mxu0 %v1669
      %1720 = vmatprep.subr.bf16.mxu0 0
      %1721 = vmatpush1.bf16.msra.mxu0 %v1670
      %1722 = vmatprep.subr.bf16.mxu0 0
      %1723 = vmatpush1.bf16.msra.mxu0 %v1671
      %1724 = vmatprep.subr.bf16.mxu0 0
      %1725 = vmatpush1.bf16.msra.mxu0 %v1672
      %1726 = vmatprep.subr.bf16.mxu0 0
      %1727 = vmatpush1.bf16.msra.mxu0 %v1673
      %1728 = vmatprep.subr.bf16.mxu0 0
      %1729 = vmatpush1.bf16.msra.mxu0 %v1674
      %1730 = vmatprep.subr.bf16.mxu0 0
      %1731 = vmatpush1.bf16.msra.mxu0 %v1675
      %1732 = vmatprep.subr.bf16.mxu0 0
      %1733 = vmatpush1.bf16.msra.mxu0 %v1676
      %1734 = vmatprep.subr.bf16.mxu0 0
      %1735 = vmatpush1.bf16.msra.mxu0 %v1677
      %1736 = vmatprep.subr.bf16.mxu0 0
      %1737 = vmatpush1.bf16.msra.mxu0 %v1678
      %1738 = vmatprep.subr.bf16.mxu0 0
      %1739 = vmatpush1.bf16.msra.mxu0 %v1679
      %1740 = vmatprep.subr.bf16.mxu0 0
      %1741 = vmatpush1.bf16.msra.mxu0 %v1680
      %1742 = vmatprep.subr.bf16.mxu0 0
      %1743 = vmatpush1.bf16.msra.mxu0 %v1681
      %1744 = vmatprep.subr.bf16.mxu0 0
      %1745 = vmatpush1.bf16.msra.mxu0 %v1682
      %1746 = vmatprep.subr.bf16.mxu0 0
      %1747 = vmatpush1.bf16.msra.mxu0 %v1683
      %1748 = vmatprep.mubr.bf16.mxu0 %v1525
      %1749 = vmatmul.mubr.bf16.gmra.mrb[0].mxu0 %v1524
      %v1750 = vpop.f32.mrb[0].mxu0
      %v1751 = vadd.f32 0.0, %v1750
      %v1752 = vpop.f32.mrb[0].mxu0
      %v1753 = vpop.f32.mrb[0].mxu0
      %v1754 = vadd.f32 0.0, %v1753
      %v1755 = vpop.f32.mrb[0].mxu0
      %1756 = vmatprep.mubr.bf16.mxu0 %v1528
      %1757 = vmatmul.mubr.bf16.gmra.mrb[0].mxu0 %v1527
      %v1758 = vpop.f32.mrb[0].mxu0
      %v1759 = vadd.f32 0.0, %v1758
      %v1760 = vpop.f32.mrb[0].mxu0
      %v1761 = vpop.f32.mrb[0].mxu0
      %v1762 = vadd.f32 0.0, %v1761
      %v1763 = vpop.f32.mrb[0].mxu0
      %1764 = vmatprep.mubr.bf16.mxu0 %v1531
      %1765 = vmatmul.mubr.bf16.gmra.mrb[0].mxu0 %v1530
      %v1766 = vpop.f32.mrb[0].mxu0
      %v1767 = vadd.f32 0.0, %v1766
      %v1768 = vpop.f32.mrb[0].mxu0
      %v1769 = vpop.f32.mrb[0].mxu0
      %v1770 = vadd.f32 0.0, %v1769
      %v1771 = vpop.f32.mrb[0].mxu0
      %1772 = vmatprep.mubr.bf16.mxu0 %v1534
      %1773 = vmatmul.mubr.bf16.gmra.mrb[0].mxu0 %v1533
      %v1774 = vpop.f32.mrb[0].mxu0
      %v1775 = vadd.f32 0.0, %v1774
      %v1776 = vpop.f32.mrb[0].mxu0
      %v1777 = vpop.f32.mrb[0].mxu0
      %v1778 = vadd.f32 0.0, %v1777
      %v1779 = vpop.f32.mrb[0].mxu0
      %1780 = vmatprep.mubr.bf16.mxu0 %v1537
      %1781 = vmatmul.mubr.bf16.gmra.mrb[0].mxu0 %v1536
      %v1782 = vpop.f32.mrb[0].mxu0
      %v1783 = vadd.f32 0.0, %v1782
      %v1784 = vpop.f32.mrb[0].mxu0
      %v1785 = vpop.f32.mrb[0].mxu0
      %v1786 = vadd.f32 0.0, %v1785
      %v1787 = vpop.f32.mrb[0].mxu0
      %1788 = vmatprep.mubr.bf16.mxu0 %v1540
      %1789 = vmatmul.mubr.bf16.gmra.mrb[0].mxu0 %v1539
      %v1790 = vpop.f32.mrb[0].mxu0
      %v1791 = vadd.f32 0.0, %v1790
      %v1792 = vpop.f32.mrb[0].mxu0
      %v1793 = vpop.f32.mrb[0].mxu0
      %v1794 = vadd.f32 0.0, %v1793
      %v1795 = vpop.f32.mrb[0].mxu0
      %1796 = vmatprep.mubr.bf16.mxu0 %v1543
      %1797 = vmatmul.mubr.bf16.gmra.mrb[0].mxu0 %v1542
      %v1798 = vpop.f32.mrb[0].mxu0
      %v1799 = vadd.f32 0.0, %v1798
      %v1800 = vpop.f32.mrb[0].mxu0
      %v1801 = vpop.f32.mrb[0].mxu0
      %v1802 = vadd.f32 0.0, %v1801
      %v1803 = vpop.f32.mrb[0].mxu0
      %1804 = vmatprep.mubr.bf16.mxu0 %v1546
      %1805 = vmatmul.mubr.bf16.gmra.mrb[0].mxu0 %v1545
      %v1806 = vpop.f32.mrb[0].mxu0
      %v1807 = vadd.f32 0.0, %v1806
      %v1808 = vpop.f32.mrb[0].mxu0
      %v1809 = vpop.f32.mrb[0].mxu0
      %v1810 = vadd.f32 0.0, %v1809
      %v1811 = vpop.f32.mrb[0].mxu0
      %1812 = vdwg.mxu0
      %1813 = vmatprep.subr.bf16.mxu0 0
      %1814 = vmatpush1.bf16.msra.mxu0 %v1684
      %1815 = vmatprep.subr.bf16.mxu0 0
      %1816 = vmatpush1.bf16.msra.mxu0 %v1685
      %1817 = vmatprep.subr.bf16.mxu0 0
      %1818 = vmatpush1.bf16.msra.mxu0 %v1686
      %1819 = vmatprep.subr.bf16.mxu0 0
      %1820 = vmatpush1.bf16.msra.mxu0 %v1687
      %1821 = vmatprep.subr.bf16.mxu0 0
      %1822 = vmatpush1.bf16.msra.mxu0 %v1688
      %1823 = vmatprep.subr.bf16.mxu0 0
      %1824 = vmatpush1.bf16.msra.mxu0 %v1689
      %1825 = vmatprep.subr.bf16.mxu0 0
      %1826 = vmatpush1.bf16.msra.mxu0 %v1690
      %1827 = vmatprep.subr.bf16.mxu0 0
      %1828 = vmatpush1.bf16.msra.mxu0 %v1691
      %1829 = vmatprep.subr.bf16.mxu0 0
      %1830 = vmatpush1.bf16.msra.mxu0 0
      %1831 = vmatprep.subr.bf16.mxu0 0
      %1832 = vmatpush1.bf16.msra.mxu0 0
      %1833 = vmatprep.subr.bf16.mxu0 0
      %1834 = vmatpush1.bf16.msra.mxu0 0
      %1835 = vmatprep.subr.bf16.mxu0 0
      %1836 = vmatpush1.bf16.msra.mxu0 0
      %1837 = vmatprep.subr.bf16.mxu0 0
      %1838 = vmatpush1.bf16.msra.mxu0 0
      %1839 = vmatprep.subr.bf16.mxu0 0
      %1840 = vmatpush1.bf16.msra.mxu0 0
      %1841 = vmatprep.subr.bf16.mxu0 0
      %1842 = vmatpush1.bf16.msra.mxu0 0
      %1843 = vmatprep.subr.bf16.mxu0 0
      %1844 = vmatpush1.bf16.msra.mxu0 0
      %1845 = vmatprep.mubr.bf16.mxu0 0
      %1846 = vmatmul.mubr.bf16.gmra.mrb[0].mxu0 %v1526
      %v1847 = vpop.f32.mrb[0].mxu0
      %v1848 = vadd.f32 %v1751, %v1847
      %v1849 = vpop.f32.mrb[0].mxu0
      %v1850 = vpop.f32.mrb[0].mxu0
      %v1851 = vadd.f32 %v1754, %v1850
      %v1852 = vpop.f32.mrb[0].mxu0
      %1853 = vmatprep.mubr.bf16.mxu0 0
      %1854 = vmatmul.mubr.bf16.gmra.mrb[0].mxu0 %v1529
      %v1855 = vpop.f32.mrb[0].mxu0
      %v1856 = vadd.f32 %v1759, %v1855
      %v1857 = vpop.f32.mrb[0].mxu0
      %v1858 = vpop.f32.mrb[0].mxu0
      %v1859 = vadd.f32 %v1762, %v1858
      %v1860 = vpop.f32.mrb[0].mxu0
      %1861 = vmatprep.mubr.bf16.mxu0 0
      %1862 = vmatmul.mubr.bf16.gmra.mrb[0].mxu0 %v1532
      %v1863 = vpop.f32.mrb[0].mxu0
      %v1864 = vadd.f32 %v1767, %v1863
      %v1865 = vpop.f32.mrb[0].mxu0
      %v1866 = vpop.f32.mrb[0].mxu0
      %v1867 = vadd.f32 %v1770, %v1866
      %v1868 = vpop.f32.mrb[0].mxu0
      %1869 = vmatprep.mubr.bf16.mxu0 0
      %1870 = vmatmul.mubr.bf16.gmra.mrb[0].mxu0 %v1535
      %v1871 = vpop.f32.mrb[0].mxu0
      %v1872 = vadd.f32 %v1775, %v1871
      %v1873 = vpop.f32.mrb[0].mxu0
      %v1874 = vpop.f32.mrb[0].mxu0
      %v1875 = vadd.f32 %v1778, %v1874
      %v1876 = vpop.f32.mrb[0].mxu0
      %1877 = vmatprep.mubr.bf16.mxu0 0
      %1878 = vmatmul.mubr.bf16.gmra.mrb[0].mxu0 %v1538
      %v1879 = vpop.f32.mrb[0].mxu0
      %v1880 = vadd.f32 %v1783, %v1879
      %v1881 = vpop.f32.mrb[0].mxu0
      %v1882 = vpop.f32.mrb[0].mxu0
      %v1883 = vadd.f32 %v1786, %v1882
      %v1884 = vpop.f32.mrb[0].mxu0
      %1885 = vmatprep.mubr.bf16.mxu0 0
      %1886 = vmatmul.mubr.bf16.gmra.mrb[0].mxu0 %v1541
      %v1887 = vpop.f32.mrb[0].mxu0
      %v1888 = vadd.f32 %v1791, %v1887
      %v1889 = vpop.f32.mrb[0].mxu0
      %v1890 = vpop.f32.mrb[0].mxu0
      %v1891 = vadd.f32 %v1794, %v1890
      %v1892 = vpop.f32.mrb[0].mxu0
      %1893 = vmatprep.mubr.bf16.mxu0 0
      %1894 = vmatmul.mubr.bf16.gmra.mrb[0].mxu0 %v1544
      %v1895 = vpop.f32.mrb[0].mxu0
      %v1896 = vadd.f32 %v1799, %v1895
      %v1897 = vpop.f32.mrb[0].mxu0
      %v1898 = vpop.f32.mrb[0].mxu0
      %v1899 = vadd.f32 %v1802, %v1898
      %v1900 = vpop.f32.mrb[0].mxu0
      %1901 = vmatprep.mubr.bf16.mxu0 0
      %1902 = vmatmul.mubr.bf16.gmra.mrb[0].mxu0 %v1547
      %v1903 = vpop.f32.mrb[0].mxu0
      %v1904 = vadd.f32 %v1807, %v1903
      %v1905 = vpop.f32.mrb[0].mxu0
      %v1906 = vpop.f32.mrb[0].mxu0
      %v1907 = vadd.f32 %v1810, %v1906
      %v1908 = vpop.f32.mrb[0].mxu0
      %1909 = vdwg.mxu0
      %v1910 = vadd.f32 %v1297, %v1848
      %v1911 = vadd.f32 %v1300, %v1851
      %v1912 = vadd.f32 %v1305, %v1856
      %v1913 = vadd.f32 %v1308, %v1859
      %v1914 = vadd.f32 %v1313, %v1864
      %v1915 = vadd.f32 %v1316, %v1867
      %v1916 = vadd.f32 %v1321, %v1872
      %v1917 = vadd.f32 %v1324, %v1875
      %v1918 = vadd.f32 %v1329, %v1880
      %v1919 = vadd.f32 %v1332, %v1883
      %v1920 = vadd.f32 %v1337, %v1888
      %v1921 = vadd.f32 %v1340, %v1891
      %v1922 = vadd.f32 %v1345, %v1896
      %v1923 = vadd.f32 %v1348, %v1899
      %v1924 = vadd.f32 %v1353, %v1904
      %v1925 = vadd.f32 %v1356, %v1907
      %v1926 = vpack.c.bf16 %v1911, %v1910
      %v1927 = vpack.c.bf16 %v1913, %v1912
      %v1928 = vpack.c.bf16 %v1915, %v1914
      %v1929 = vpack.c.bf16 %v1917, %v1916
      %v1930 = vpack.c.bf16 %v1919, %v1918
      %v1931 = vpack.c.bf16 %v1921, %v1920
      %v1932 = vpack.c.bf16 %v1923, %v1922
      %v1933 = vpack.c.bf16 %v1925, %v1924
      %v1942 = vunpack.c.l.b16 %v1926
      %v1943 = vunpack.c.h.b16 %v1926
      %v1944 = vunpack.c.l.b16 %v1927
      %v1945 = vunpack.c.h.b16 %v1927
      %v1946 = vunpack.c.l.b16 %v1928
      %v1947 = vunpack.c.h.b16 %v1928
      %v1948 = vunpack.c.l.b16 %v1929
      %v1949 = vunpack.c.h.b16 %v1929
      %v1950 = vunpack.c.l.b16 %v1930
      %v1951 = vunpack.c.h.b16 %v1930
      %v1952 = vunpack.c.l.b16 %v1931
      %v1953 = vunpack.c.h.b16 %v1931
      %v1954 = vunpack.c.l.b16 %v1932
      %v1955 = vunpack.c.h.b16 %v1932
      %v1956 = vunpack.c.l.b16 %v1933
      %v1957 = vunpack.c.h.b16 %v1933
      %v1958 = vpack.c.b16 %v1942, %v1942
      %v1959 = vpack.c.b16 %v1943, %v1943
      %v1960 = vpack.c.b16 %v1944, %v1944
      %v1961 = vpack.c.b16 %v1945, %v1945
      %v1962 = vpack.c.b16 %v1946, %v1946
      %v1963 = vpack.c.b16 %v1947, %v1947
      %v1964 = vpack.c.b16 %v1948, %v1948
      %v1965 = vpack.c.b16 %v1949, %v1949
      %v1966 = vpack.c.b16 %v1950, %v1950
      %v1967 = vpack.c.b16 %v1951, %v1951
      %v1968 = vpack.c.b16 %v1952, %v1952
      %v1969 = vpack.c.b16 %v1953, %v1953
      %v1970 = vpack.c.b16 %v1954, %v1954
      %v1971 = vpack.c.b16 %v1955, %v1955
      %v1972 = vpack.c.b16 %v1956, %v1956
      %v1973 = vpack.c.b16 %v1957, %v1957
      %1990 = vst [vmem:[%s244] sm:$0xf] %v1958
      %1991 = vst [vmem:[%s244 + $0x4] sm:$0xf] %v1959
      %1992 = vst [vmem:[%s244 + $0x8] sm:$0xf] %v1960
      %1993 = vst [vmem:[%s244 + $0xc] sm:$0xf] %v1961
      %1994 = vst [vmem:[%s244 + $0x10] sm:$0xf] %v1962
      %1995 = vst [vmem:[%s244 + $0x14] sm:$0xf] %v1963
      %1996 = vst [vmem:[%s244 + $0x18] sm:$0xf] %v1964
      %1997 = vst [vmem:[%s244 + $0x1c] sm:$0xf] %v1965
      %1998 = vst [vmem:[%s244 + $0x20] sm:$0xf] %v1966
      %1999 = vst [vmem:[%s244 + $0x24] sm:$0xf] %v1967
      %2000 = vst [vmem:[%s244 + $0x28] sm:$0xf] %v1968
      %2001 = vst [vmem:[%s244 + $0x2c] sm:$0xf] %v1969
      %2002 = vst [vmem:[%s244 + $0x30] sm:$0xf] %v1970
      %2003 = vst [vmem:[%s244 + $0x34] sm:$0xf] %v1971
      %2004 = vst [vmem:[%s244 + $0x38] sm:$0xf] %v1972
      %2005 = vst [vmem:[%s244 + $0x3c] sm:$0xf] %v1973
      %v2006 = vadd.f32 %v1910, %v1911
      %v2007 = vadd.f32 %v2006, %v1912
      %v2008 = vadd.f32 %v2007, %v1913
      %v2009 = vadd.f32 %v2008, %v1914
      %v2010 = vadd.f32 %v2009, %v1915
      %v2011 = vadd.f32 %v2010, %v1916
      %v2012 = vadd.f32 %v2011, %v1917
      %v2013 = vadd.f32 %v2012, %v1918
      %v2014 = vadd.f32 %v2013, %v1919
      %v2015 = vadd.f32 %v2014, %v1920
      %v2016 = vadd.f32 %v2015, %v1921
      %v2017 = vadd.f32 %v2016, %v1922
      %v2018 = vadd.f32 %v2017, %v1923
      %v2019 = vadd.f32 %v2018, %v1924
      %v2020 = vadd.f32 %v2019, %v1925
      %v2021 = vrot.slane %v2020, 4
      %v2022 = vadd.f32 %v2020, %v2021
      %v2023 = vrot.slane %v2022, 2
      %v2024 = vadd.f32 %v2022, %v2023
      %v2025 = vrot.slane %v2024, 1
      %v2026 = vadd.f32 %v2024, %v2025
      %2027 = vst [vmem:[%s256] sm:$0x1] %v2026
      %v2028 = vmul.f32 %v1910, %v1910
      %v2029 = vmul.f32 %v1911, %v1911
      %v2030 = vmul.f32 %v1912, %v1912
      %v2031 = vmul.f32 %v1913, %v1913
      %v2032 = vmul.f32 %v1914, %v1914
      %v2033 = vmul.f32 %v1915, %v1915
      %v2034 = vmul.f32 %v1916, %v1916
      %v2035 = vmul.f32 %v1917, %v1917
      %v2036 = vmul.f32 %v1918, %v1918
      %v2037 = vmul.f32 %v1919, %v1919
      %v2038 = vmul.f32 %v1920, %v1920
      %v2039 = vmul.f32 %v1921, %v1921
      %v2040 = vmul.f32 %v1922, %v1922
      %v2041 = vmul.f32 %v1923, %v1923
      %v2042 = vmul.f32 %v1924, %v1924
      %v2043 = vmul.f32 %v1925, %v1925
      %v2044 = vadd.f32 %v2028, %v2029
      %v2045 = vadd.f32 %v2044, %v2030
      %v2046 = vadd.f32 %v2045, %v2031
      %v2047 = vadd.f32 %v2046, %v2032
      %v2048 = vadd.f32 %v2047, %v2033
      %v2049 = vadd.f32 %v2048, %v2034
      %v2050 = vadd.f32 %v2049, %v2035
      %v2051 = vadd.f32 %v2050, %v2036
      %v2052 = vadd.f32 %v2051, %v2037
      %v2053 = vadd.f32 %v2052, %v2038
      %v2054 = vadd.f32 %v2053, %v2039
      %v2055 = vadd.f32 %v2054, %v2040
      %v2056 = vadd.f32 %v2055, %v2041
      %v2057 = vadd.f32 %v2056, %v2042
      %v2058 = vadd.f32 %v2057, %v2043
      %v2059 = vrot.slane %v2058, 4
      %v2060 = vadd.f32 %v2058, %v2059
      %v2061 = vrot.slane %v2060, 2
      %v2062 = vadd.f32 %v2060, %v2061
      %v2063 = vrot.slane %v2062, 1
      %v2064 = vadd.f32 %v2062, %v2063
      %2065 = vst [vmem:[%s256 + $0x1] sm:$0x1] %v2064
      %s2066 = smul.u32 8, %s21
      %p2067 = scmp.lt.s32.totalorder %s20, 1
      %s2068 = scalar_select %p2067, %s20, 1
      %p2069 = scmp.lt.s32.totalorder %s2066, 15
      %s2070 = scalar_select %p2069, %s2066, 15
      %p2071 = scmp.lt.s32.totalorder %s22, 0
      %s2072 = scalar_select %p2071, %s22, 0
      %s2073 = smul.addr %s2070, 2
      %s2074 = sadd.s32 %s2072, %s2073
      %s2075 = smul.addr %s2068, 32
      %s2076 = sadd.s32 %s2074, %s2075
      %s2077 = smul.addr %s2076, 4
      %s2078 = scalar_lea.vmem %s2, %s2077
      %p2079 = scmp.lt.s32.totalorder %s20, 1
      %s2080 = scalar_select %p2079, %s20, 1
      %p2081 = scmp.lt.s32.totalorder %s21, 1
      %s2082 = scalar_select %p2081, %s21, 1
      %p2083 = scmp.lt.s32.totalorder %s22, 0
      %s2084 = scalar_select %p2083, %s22, 0
      %s2085 = sadd.s32 %s2084, %s2082
      %s2086 = smul.addr %s2080, 2
      %s2087 = sadd.s32 %s2085, %s2086
      %s2088 = smul.addr %s2087, 2
      %s2089 = scalar_lea.vmem %s3, %s2088
      // Predicated region
      $region29: #{double_conv2_forward.4} parent=27 // pred_check
        %p2090 = pneg %p108
      $region30: #{double_conv2_forward.4} parent=27 // pred_check_branch
        %2092 = sbr.rel (%p2090) target = $region32
      $region31: #{double_conv2_forward.4} parent=27 // pred_region
        %s2093 = smul.u32 8, %s21
      $region32: #{double_conv2_forward.4} parent=27 // pred_fallthru
        _
      // Predicated region
      $region33: #{double_conv2_forward.4} parent=27 // pred_check
        %p2094 = pneg %p138
      $region34: #{double_conv2_forward.4} parent=27 // pred_check_branch
        %2096 = sbr.rel (%p2094) target = $region36
      $region35: #{double_conv2_forward.4} parent=27 // pred_region
        _
      $region36: #{double_conv2_forward.4} parent=27 // pred_fallthru
        _
    $region28: #{double_conv2_forward.4} parent=5 // pred_fallthru
      _
    %p2097 = scmp.le.s32.totalorder 2, %s10
    // Predicated region
    $region37: #{double_conv2_forward.4} parent=5 // pred_check
      %p2098 = pneg %p2097
    $region38: #{double_conv2_forward.4} parent=5 // pred_check_branch
      %2100 = sbr.rel (%p2098) target = $region40
    $region39: #{double_conv2_forward.4} parent=5 // pred_region
      %s2101 = ssub.s32 %s10, 2
      // Predicated region
      $region41: #{double_conv2_forward.4} parent=39 // pred_check
        %p2102 = pneg %p114
      $region42: #{double_conv2_forward.4} parent=39 // pred_check_branch
        %2104 = sbr.rel (%p2102) target = $region44
      $region43: #{double_conv2_forward.4} parent=39 // pred_region
        %s2105 = smul.u32 8, %s24
        %p2106 = scmp.lt.s32.totalorder %s23, 1
        %s2107 = scalar_select %p2106, %s23, 1
        %p2108 = scmp.lt.s32.totalorder %s2105, 15
        %s2109 = scalar_select %p2108, %s2105, 15
        %p2110 = scmp.lt.s32.totalorder %s25, 0
        %s2111 = scalar_select %p2110, %s25, 0
        %s2112 = smul.addr %s2109, 2
        %s2113 = sadd.s32 %s2111, %s2112
        %s2114 = smul.addr %s2107, 32
        %s2115 = sadd.s32 %s2113, %s2114
        %s2116 = smul.addr %s2115, 4
        %s2117 = scalar_lea.vmem %s2, %s2116
      $region44: #{double_conv2_forward.4} parent=39 // pred_fallthru
        _
      // Predicated region
      $region45: #{double_conv2_forward.4} parent=39 // pred_check
        %p2118 = pneg %p144
      $region46: #{double_conv2_forward.4} parent=39 // pred_check_branch
        %2120 = sbr.rel (%p2118) target = $region48
      $region47: #{double_conv2_forward.4} parent=39 // pred_region
        %p2121 = scmp.lt.s32.totalorder %s23, 1
        %s2122 = scalar_select %p2121, %s23, 1
        %p2123 = scmp.lt.s32.totalorder %s24, 1
        %s2124 = scalar_select %p2123, %s24, 1
        %p2125 = scmp.lt.s32.totalorder %s25, 0
        %s2126 = scalar_select %p2125, %s25, 0
        %s2127 = sadd.s32 %s2126, %s2124
        %s2128 = smul.addr %s2122, 2
        %s2129 = sadd.s32 %s2127, %s2128
        %s2130 = smul.addr %s2129, 2
        %s2131 = scalar_lea.vmem %s3, %s2130
      $region48: #{double_conv2_forward.4} parent=39 // pred_fallthru
        _
    $region40: #{double_conv2_forward.4} parent=5 // pred_fallthru
      _
  $region6: #{double_conv2_forward.4} parent=0 // loop_footer
    %s14 = sadd.s32 1, %s10
  $region7: #{double_conv2_forward.4} parent=0 // loop_footer_branch
    %9 = sbr.rel target = $region3
  $region8: #{double_conv2_forward.4} parent=0 // loop_exit
    _

// kernel: double_conv2_forward.5
$region0: #{double_conv2_forward.5}
  #allocation0 [shape = 'u32[]', space=smem, size = 0x4, offset = 0x4, fixed_abs, tag = 'smem constant byte address 0x4 - core index']
  #allocation1 [shape = 'u32[144,128]{1,0:T(1,128)}', space=vmem, size = 0x12000, scoped, tag = 'internal scratch']
  %s0 = inlined_call_operand.vmem [shape: bf16[2,16,16,128], index: 0, kind: input, shape index: {}]
  %s1 = inlined_call_operand.vmem [shape: f32[1,128], index: 1, kind: input, shape index: {}]
  %s2 = inlined_call_operand.vmem [shape: f32[1,128], index: 2, kind: input, shape index: {}]
  %s3 = inlined_call_operand.vmem [shape: bf16[2,22,16,384], index: 3, kind: output, shape index: {}]
  %s4 = sld [smem:[#allocation0]]
  $region45: #{double_conv2_forward.5} parent=0
    _
  %s6 = ssub.s32 1, %s4
  %s7 = scalar_select 0, %s6, %s4
  loop: start=0, step=1, limit=4
  $region2: #{double_conv2_forward.5} parent=0 // loop_pre_header
    _
  $region3: #{double_conv2_forward.5} parent=0 // loop_header
    %s9 = sphi 0, %s13
    %p10 = scmp.ge.s32.totalorder %s9, 4
    %s19 = sphi 0, %s21
    %s22 = sphi 0, %s19
    %s23 = sphi 0, %s22
    %s39 = sphi 0, %s23
    %s43 = sphi 0, %s43
    %s45 = sphi 0, %s43
    %s46 = sphi 0, %s45
    %s60 = sphi 0, %s46
    %s64 = sphi 0, %s64
    %s66 = sphi 0, %s64
    %s67 = sphi 0, %s66
    %s81 = sphi 0, %s67
    %s87 = sphi 0, %s89
    %s90 = sphi 0, %s87
    %s91 = sphi 0, %s90
    %s107 = sphi 0, %s91
  $region4: #{double_conv2_forward.5} parent=0 // loop_header_branch
    %12 = sbr.rel (%p10) target = $region8
  $region5: #{double_conv2_forward.5} parent=0 // loop_body
    %s14 = ssub.s32 %s9, 1
    %s15 = ssub.s32 %s9, 2
    %s16 = sadd.s32 %s9, 1
    %s17 = ssub.s32 %s9, %s16
    %p18 = scmp.eq.s32.totalorder %s17, 0
    %s20 = sadd.s32 %s19, 1
    %s21 = scalar_select %p18, %s19, %s20
    %p24 = pneg %p18
    %p25 = scmp.eq.s32.totalorder %s9, 1
    %p26 = por %p24, %p25
    %p27 = scmp.ne.s32.totalorder %s19, %s22
    %p28 = scmp.eq.s32.totalorder %s9, 0
    %p29 = por %p27, %p28
    %p30 = scmp.ne.s32.totalorder %s19, %s22
    %p31 = scmp.eq.s32.totalorder %s14, 1
    %p32 = por %p30, %p31
    %p33 = scmp.ne.s32.totalorder %s22, %s23
    %p34 = scmp.eq.s32.totalorder %s14, 0
    %p35 = por %p33, %p34
    %p36 = scmp.ne.s32.totalorder %s22, %s23
    %p37 = scmp.eq.s32.totalorder %s15, 1
    %p38 = por %p36, %p37
    %p40 = scmp.ne.s32.totalorder %s23, %s39
    %p41 = scmp.eq.s32.totalorder %s15, 0
    %p42 = por %p40, %p41
    %s44 = sadd.s32 %s43, 1
    %p47 = scmp.eq.s32.totalorder %s9, 1
    %p48 = scmp.ne.s32.totalorder %s43, %s45
    %p49 = scmp.eq.s32.totalorder %s9, 0
    %p50 = por %p48, %p49
    %p51 = scmp.ne.s32.totalorder %s43, %s45
    %p52 = scmp.eq.s32.totalorder %s14, 1
    %p53 = por %p51, %p52
    %p54 = scmp.ne.s32.totalorder %s45, %s46
    %p55 = scmp.eq.s32.totalorder %s14, 0
    %p56 = por %p54, %p55
    %p57 = scmp.ne.s32.totalorder %s45, %s46
    %p58 = scmp.eq.s32.totalorder %s15, 1
    %p59 = por %p57, %p58
    %p61 = scmp.ne.s32.totalorder %s46, %s60
    %p62 = scmp.eq.s32.totalorder %s15, 0
    %p63 = por %p61, %p62
    %s65 = sadd.s32 %s64, 1
    %p68 = scmp.eq.s32.totalorder %s9, 1
    %p69 = scmp.ne.s32.totalorder %s64, %s66
    %p70 = scmp.eq.s32.totalorder %s9, 0
    %p71 = por %p69, %p70
    %p72 = scmp.ne.s32.totalorder %s64, %s66
    %p73 = scmp.eq.s32.totalorder %s14, 1
    %p74 = por %p72, %p73
    %p75 = scmp.ne.s32.totalorder %s66, %s67
    %p76 = scmp.eq.s32.totalorder %s14, 0
    %p77 = por %p75, %p76
    %p78 = scmp.ne.s32.totalorder %s66, %s67
    %p79 = scmp.eq.s32.totalorder %s15, 1
    %p80 = por %p78, %p79
    %p82 = scmp.ne.s32.totalorder %s67, %s81
    %p83 = scmp.eq.s32.totalorder %s15, 0
    %p84 = por %p82, %p83
    %s85 = ssub.s32 %s9, %s16
    %p86 = scmp.eq.s32.totalorder %s85, 0
    %s88 = sadd.s32 %s87, 1
    %s89 = scalar_select %p86, %s87, %s88
    %p92 = pneg %p86
    %p93 = scmp.eq.s32.totalorder %s9, 1
    %p94 = por %p92, %p93
    %p95 = scmp.ne.s32.totalorder %s87, %s90
    %p96 = scmp.eq.s32.totalorder %s9, 0
    %p97 = por %p95, %p96
    %p98 = scmp.ne.s32.totalorder %s87, %s90
    %p99 = scmp.eq.s32.totalorder %s14, 1
    %p100 = por %p98, %p99
    %p101 = scmp.ne.s32.totalorder %s90, %s91
    %p102 = scmp.eq.s32.totalorder %s14, 0
    %p103 = por %p101, %p102
    %p104 = scmp.ne.s32.totalorder %s90, %s91
    %p105 = scmp.eq.s32.totalorder %s15, 1
    %p106 = por %p104, %p105
    %p108 = scmp.ne.s32.totalorder %s91, %s107
    %p109 = scmp.eq.s32.totalorder %s15, 0
    %p110 = por %p108, %p109
    %p111 = scmp.le.s32.totalorder 1, %s9
    %p112 = scmp.lt.s32.totalorder %s9, 3
    %p113 = pnand %p111, %p112
    %p114 = pneg %p113
    // Predicated region
    $region9: #{double_conv2_forward.5} parent=5 // pred_check
      _
    $region10: #{double_conv2_forward.5} parent=5 // pred_check_branch
      %116 = sbr.rel (%p113) target = $region12
    $region11: #{double_conv2_forward.5} parent=5 // pred_region
      %s117 = ssub.s32 %s9, 1
      // Predicated region
      $region13: #{double_conv2_forward.5} parent=11 // pred_check
        %p118 = pneg %p56
      $region14: #{double_conv2_forward.5} parent=11 // pred_check_branch
        %120 = sbr.rel (%p118) target = $region16
      $region15: #{double_conv2_forward.5} parent=11 // pred_region
        _
      $region16: #{double_conv2_forward.5} parent=11 // pred_fallthru
        _
      // Predicated region
      $region17: #{double_conv2_forward.5} parent=11 // pred_check
        %p121 = pneg %p77
      $region18: #{double_conv2_forward.5} parent=11 // pred_check_branch
        %123 = sbr.rel (%p121) target = $region20
      $region19: #{double_conv2_forward.5} parent=11 // pred_region
        _
      $region20: #{double_conv2_forward.5} parent=11 // pred_fallthru
        _
    $region12: #{double_conv2_forward.5} parent=5 // pred_fallthru
      _
    %p124 = scmp.lt.s32.totalorder %s9, 2
    // Predicated region
    $region21: #{double_conv2_forward.5} parent=5 // pred_check
      %p125 = pneg %p124
    $region22: #{double_conv2_forward.5} parent=5 // pred_check_branch
      %127 = sbr.rel (%p125) target = $region24
    $region23: #{double_conv2_forward.5} parent=5 // pred_region
      // Predicated region
      $region25: #{double_conv2_forward.5} parent=23 // pred_check
        %p128 = pneg %p29
      $region26: #{double_conv2_forward.5} parent=23 // pred_check_branch
        %130 = sbr.rel (%p128) target = $region28
      $region27: #{double_conv2_forward.5} parent=23 // pred_region
        %p131 = scmp.lt.s32.totalorder %s9, 1
        %s132 = scalar_select %p131, %s9, 1
        %s133 = smul.addr %s132, 32
        %s134 = smul.addr %s133, 4
        %s135 = scalar_lea.vmem %s0, %s134
      $region28: #{double_conv2_forward.5} parent=23 // pred_fallthru
        _
    $region24: #{double_conv2_forward.5} parent=5 // pred_fallthru
      _
    %p136 = scmp.le.s32.totalorder 1, %s9
    %p137 = scmp.lt.s32.totalorder %s9, 3
    %p138 = pnand %p136, %p137
    %p139 = pneg %p138
    // Predicated region
    $region29: #{double_conv2_forward.5} parent=5 // pred_check
      _
    $region30: #{double_conv2_forward.5} parent=5 // pred_check_branch
      %141 = sbr.rel (%p138) target = $region32
    $region31: #{double_conv2_forward.5} parent=5 // pred_region
      %s142 = ssub.s32 %s9, 1
      %p143 = scmp.lt.s32.totalorder %s14, 1
      %s144 = scalar_select %p143, %s14, 1
      %s145 = smul.addr %s144, 32
      %s146 = smul.addr %s145, 4
      %s147 = scalar_lea.vmem %s0, %s146
      %p148 = pneg %p35
      %p149 = pneg %p32
      %p150 = pneg %p56
      %p151 = pneg %p53
      %p152 = pneg %p77
      %p153 = pneg %p74
      %p154 = pneg %p103
      %p155 = pneg %p100
      %p156 = scmp.lt.s32.totalorder %s14, 1
      %s157 = scalar_select %p156, %s14, 1
      %s158 = smul.addr %s157, 132
      %s159 = smul.addr %s158, 4
      %s160 = scalar_lea.vmem %s3, %s159
      %p161 = scmp.lt.s32.totalorder %s14, 1
      %s162 = scalar_select %p161, %s14, 1
      %s163 = smul.addr %s162, 32
      %s164 = smul.addr %s163, 4
      %s165 = scalar_lea.vmem %s0, %s164
      %p166 = scmp.lt.s32.totalorder %s14, 1
      %s167 = scalar_select %p166, %s14, 1
      %s168 = smul.addr %s167, 132
      %s169 = smul.addr %s168, 4
      %s170 = scalar_lea.vmem %s3, %s169
      %v172 = vld [vmem:[%s1] sm:$0x1]
      %v173 = vld [vmem:[%s2] sm:$0x1]
      %v174 = vld [vmem:[%s165] sm:$0xf]
      %v175 = vld [vmem:[%s165 + $0x4] sm:$0xf]
      %v176 = vld [vmem:[%s165 + $0x8] sm:$0xf]
      %v177 = vld [vmem:[%s165 + $0xc] sm:$0xf]
      %v178 = vld [vmem:[%s165 + $0x10] sm:$0xf]
      %v179 = vld [vmem:[%s165 + $0x14] sm:$0xf]
      %v180 = vld [vmem:[%s165 + $0x18] sm:$0xf]
      %v181 = vld [vmem:[%s165 + $0x1c] sm:$0xf]
      %v182 = vld [vmem:[%s165 + $0x20] sm:$0xf]
      %v183 = vld [vmem:[%s165 + $0x24] sm:$0xf]
      %v184 = vld [vmem:[%s165 + $0x28] sm:$0xf]
      %v185 = vld [vmem:[%s165 + $0x2c] sm:$0xf]
      %v186 = vld [vmem:[%s165 + $0x30] sm:$0xf]
      %v187 = vld [vmem:[%s165 + $0x34] sm:$0xf]
      %v188 = vld [vmem:[%s165 + $0x38] sm:$0xf]
      %v189 = vld [vmem:[%s165 + $0x3c] sm:$0xf]
      %v190 = vld [vmem:[%s165 + $0x40] sm:$0xf]
      %v191 = vld [vmem:[%s165 + $0x44] sm:$0xf]
      %v192 = vld [vmem:[%s165 + $0x48] sm:$0xf]
      %v193 = vld [vmem:[%s165 + $0x4c] sm:$0xf]
      %v194 = vld [vmem:[%s165 + $0x50] sm:$0xf]
      %v195 = vld [vmem:[%s165 + $0x54] sm:$0xf]
      %v196 = vld [vmem:[%s165 + $0x58] sm:$0xf]
      %v197 = vld [vmem:[%s165 + $0x5c] sm:$0xf]
      %v198 = vld [vmem:[%s165 + $0x60] sm:$0xf]
      %v199 = vld [vmem:[%s165 + $0x64] sm:$0xf]
      %v200 = vld [vmem:[%s165 + $0x68] sm:$0xf]
      %v201 = vld [vmem:[%s165 + $0x6c] sm:$0xf]
      %v202 = vld [vmem:[%s165 + $0x70] sm:$0xf]
      %v203 = vld [vmem:[%s165 + $0x74] sm:$0xf]
      %v204 = vld [vmem:[%s165 + $0x78] sm:$0xf]
      %v205 = vld [vmem:[%s165 + $0x7c] sm:$0xf]
      %v206 = vunpack.c.l.bf16 %v174
      %v207 = vunpack.c.l.bf16 %v175
      %v208 = vunpack.c.l.bf16 %v176
      %v209 = vunpack.c.l.bf16 %v177
      %v210 = vunpack.c.l.bf16 %v178
      %v211 = vunpack.c.l.bf16 %v179
      %v212 = vunpack.c.l.bf16 %v180
      %v213 = vunpack.c.l.bf16 %v181
      %v214 = vunpack.c.l.bf16 %v182
      %v215 = vunpack.c.l.bf16 %v183
      %v216 = vunpack.c.l.bf16 %v184
      %v217 = vunpack.c.l.bf16 %v185
      %v218 = vunpack.c.l.bf16 %v186
      %v219 = vunpack.c.l.bf16 %v187
      %v220 = vunpack.c.l.bf16 %v188
      %v221 = vunpack.c.l.bf16 %v189
      %v222 = vunpack.c.l.bf16 %v190
      %v223 = vunpack.c.l.bf16 %v191
      %v224 = vunpack.c.l.bf16 %v192
      %v225 = vunpack.c.l.bf16 %v193
      %v226 = vunpack.c.l.bf16 %v194
      %v227 = vunpack.c.l.bf16 %v195
      %v228 = vunpack.c.l.bf16 %v196
      %v229 = vunpack.c.l.bf16 %v197
      %v230 = vunpack.c.l.bf16 %v198
      %v231 = vunpack.c.l.bf16 %v199
      %v232 = vunpack.c.l.bf16 %v200
      %v233 = vunpack.c.l.bf16 %v201
      %v234 = vunpack.c.l.bf16 %v202
      %v235 = vunpack.c.l.bf16 %v203
      %v236 = vunpack.c.l.bf16 %v204
      %v237 = vunpack.c.l.bf16 %v205
      %v239 = vlaneseq
      %v240 = vshrl.u32 %v239, 7
      %v241 = vsub.s32 0, %v240
      %v242 = vrot.slane %v172, %v241
      %v244 = vmul.f32 %v206, %v242
      %v245 = vmul.f32 %v207, %v242
      %v246 = vmul.f32 %v208, %v242
      %v247 = vmul.f32 %v209, %v242
      %v248 = vmul.f32 %v210, %v242
      %v249 = vmul.f32 %v211, %v242
      %v250 = vmul.f32 %v212, %v242
      %v251 = vmul.f32 %v213, %v242
      %v252 = vmul.f32 %v214, %v242
      %v253 = vmul.f32 %v215, %v242
      %v254 = vmul.f32 %v216, %v242
      %v255 = vmul.f32 %v217, %v242
      %v256 = vmul.f32 %v218, %v242
      %v257 = vmul.f32 %v219, %v242
      %v258 = vmul.f32 %v220, %v242
      %v259 = vmul.f32 %v221, %v242
      %v260 = vmul.f32 %v222, %v242
      %v261 = vmul.f32 %v223, %v242
      %v262 = vmul.f32 %v224, %v242
      %v263 = vmul.f32 %v225, %v242
      %v264 = vmul.f32 %v226, %v242
      %v265 = vmul.f32 %v227, %v242
      %v266 = vmul.f32 %v228, %v242
      %v267 = vmul.f32 %v229, %v242
      %v268 = vmul.f32 %v230, %v242
      %v269 = vmul.f32 %v231, %v242
      %v270 = vmul.f32 %v232, %v242
      %v271 = vmul.f32 %v233, %v242
      %v272 = vmul.f32 %v234, %v242
      %v273 = vmul.f32 %v235, %v242
      %v274 = vmul.f32 %v236, %v242
      %v275 = vmul.f32 %v237, %v242
      %v277 = vlaneseq
      %v278 = vshrl.u32 %v277, 7
      %v279 = vsub.s32 0, %v278
      %v280 = vrot.slane %v173, %v279
      %v282 = vadd.f32 %v244, %v280
      %v283 = vadd.f32 %v245, %v280
      %v284 = vadd.f32 %v246, %v280
      %v285 = vadd.f32 %v247, %v280
      %v286 = vadd.f32 %v248, %v280
      %v287 = vadd.f32 %v249, %v280
      %v288 = vadd.f32 %v250, %v280
      %v289 = vadd.f32 %v251, %v280
      %v290 = vadd.f32 %v252, %v280
      %v291 = vadd.f32 %v253, %v280
      %v292 = vadd.f32 %v254, %v280
      %v293 = vadd.f32 %v255, %v280
      %v294 = vadd.f32 %v256, %v280
      %v295 = vadd.f32 %v257, %v280
      %v296 = vadd.f32 %v258, %v280
      %v297 = vadd.f32 %v259, %v280
      %v298 = vadd.f32 %v260, %v280
      %v299 = vadd.f32 %v261, %v280
      %v300 = vadd.f32 %v262, %v280
      %v301 = vadd.f32 %v263, %v280
      %v302 = vadd.f32 %v264, %v280
      %v303 = vadd.f32 %v265, %v280
      %v304 = vadd.f32 %v266, %v280
      %v305 = vadd.f32 %v267, %v280
      %v306 = vadd.f32 %v268, %v280
      %v307 = vadd.f32 %v269, %v280
      %v308 = vadd.f32 %v270, %v280
      %v309 = vadd.f32 %v271, %v280
      %v310 = vadd.f32 %v272, %v280
      %v311 = vadd.f32 %v273, %v280
      %v312 = vadd.f32 %v274, %v280
      %v313 = vadd.f32 %v275, %v280
      %v314 = vmax.f32 %v282, 0.0
      %v315 = vmax.f32 %v283, 0.0
      %v316 = vmax.f32 %v284, 0.0
      %v317 = vmax.f32 %v285, 0.0
      %v318 = vmax.f32 %v286, 0.0
      %v319 = vmax.f32 %v287, 0.0
      %v320 = vmax.f32 %v288, 0.0
      %v321 = vmax.f32 %v289, 0.0
      %v322 = vmax.f32 %v290, 0.0
      %v323 = vmax.f32 %v291, 0.0
      %v324 = vmax.f32 %v292, 0.0
      %v325 = vmax.f32 %v293, 0.0
      %v326 = vmax.f32 %v294, 0.0
      %v327 = vmax.f32 %v295, 0.0
      %v328 = vmax.f32 %v296, 0.0
      %v329 = vmax.f32 %v297, 0.0
      %v330 = vmax.f32 %v298, 0.0
      %v331 = vmax.f32 %v299, 0.0
      %v332 = vmax.f32 %v300, 0.0
      %v333 = vmax.f32 %v301, 0.0
      %v334 = vmax.f32 %v302, 0.0
      %v335 = vmax.f32 %v303, 0.0
      %v336 = vmax.f32 %v304, 0.0
      %v337 = vmax.f32 %v305, 0.0
      %v338 = vmax.f32 %v306, 0.0
      %v339 = vmax.f32 %v307, 0.0
      %v340 = vmax.f32 %v308, 0.0
      %v341 = vmax.f32 %v309, 0.0
      %v342 = vmax.f32 %v310, 0.0
      %v343 = vmax.f32 %v311, 0.0
      %v344 = vmax.f32 %v312, 0.0
      %v345 = vmax.f32 %v313, 0.0
      %v346 = vpack.c.bf16 %v315, %v314
      %v347 = vpack.c.bf16 %v317, %v316
      %v348 = vpack.c.bf16 %v319, %v318
      %v349 = vpack.c.bf16 %v321, %v320
      %v350 = vpack.c.bf16 %v323, %v322
      %v351 = vpack.c.bf16 %v325, %v324
      %v352 = vpack.c.bf16 %v327, %v326
      %v353 = vpack.c.bf16 %v329, %v328
      %v354 = vpack.c.bf16 %v331, %v330
      %v355 = vpack.c.bf16 %v333, %v332
      %v356 = vpack.c.bf16 %v335, %v334
      %v357 = vpack.c.bf16 %v337, %v336
      %v358 = vpack.c.bf16 %v339, %v338
      %v359 = vpack.c.bf16 %v341, %v340
      %v360 = vpack.c.bf16 %v343, %v342
      %v361 = vpack.c.bf16 %v345, %v344
      %v363 = vshrl.u32 %v346, 16
      %v365 = vrot.slane %v363, 6
      %v366 = vshll.u32 %v346, 16
      %v368 = vrot.slane %v366, 7
      %v369 = vor.u32 %v365, %v368
      %v371 = vshrl.u32 %v347, 16
      %v373 = vrot.slane %v371, 6
      %v374 = vshll.u32 %v347, 16
      %v376 = vrot.slane %v374, 7
      %v377 = vor.u32 %v373, %v376
      %v379 = vshrl.u32 %v348, 16
      %v381 = vrot.slane %v379, 6
      %v382 = vshll.u32 %v348, 16
      %v384 = vrot.slane %v382, 7
      %v385 = vor.u32 %v381, %v384
      %v387 = vshrl.u32 %v349, 16
      %v389 = vrot.slane %v387, 6
      %v390 = vshll.u32 %v349, 16
      %v392 = vrot.slane %v390, 7
      %v393 = vor.u32 %v389, %v392
      %v395 = vshrl.u32 %v350, 16
      %v397 = vrot.slane %v395, 6
      %v398 = vshll.u32 %v350, 16
      %v400 = vrot.slane %v398, 7
      %v401 = vor.u32 %v397, %v400
      %v403 = vshrl.u32 %v351, 16
      %v405 = vrot.slane %v403, 6
      %v406 = vshll.u32 %v351, 16
      %v408 = vrot.slane %v406, 7
      %v409 = vor.u32 %v405, %v408
      %v411 = vshrl.u32 %v352, 16
      %v413 = vrot.slane %v411, 6
      %v414 = vshll.u32 %v352, 16
      %v416 = vrot.slane %v414, 7
      %v417 = vor.u32 %v413, %v416
      %v419 = vshrl.u32 %v353, 16
      %v421 = vrot.slane %v419, 6
      %v422 = vshll.u32 %v353, 16
      %v424 = vrot.slane %v422, 7
      %v425 = vor.u32 %v421, %v424
      %v427 = vshrl.u32 %v354, 16
      %v429 = vrot.slane %v427, 6
      %v430 = vshll.u32 %v354, 16
      %v432 = vrot.slane %v430, 7
      %v433 = vor.u32 %v429, %v432
      %v435 = vshrl.u32 %v355, 16
      %v437 = vrot.slane %v435, 6
      %v438 = vshll.u32 %v355, 16
      %v440 = vrot.slane %v438, 7
      %v441 = vor.u32 %v437, %v440
      %v443 = vshrl.u32 %v356, 16
      %v445 = vrot.slane %v443, 6
      %v446 = vshll.u32 %v356, 16
      %v448 = vrot.slane %v446, 7
      %v449 = vor.u32 %v445, %v448
      %v451 = vshrl.u32 %v357, 16
      %v453 = vrot.slane %v451, 6
      %v454 = vshll.u32 %v357, 16
      %v456 = vrot.slane %v454, 7
      %v457 = vor.u32 %v453, %v456
      %v459 = vshrl.u32 %v358, 16
      %v461 = vrot.slane %v459, 6
      %v462 = vshll.u32 %v358, 16
      %v464 = vrot.slane %v462, 7
      %v465 = vor.u32 %v461, %v464
      %v467 = vshrl.u32 %v359, 16
      %v469 = vrot.slane %v467, 6
      %v470 = vshll.u32 %v359, 16
      %v472 = vrot.slane %v470, 7
      %v473 = vor.u32 %v469, %v472
      %v475 = vshrl.u32 %v360, 16
      %v477 = vrot.slane %v475, 6
      %v478 = vshll.u32 %v360, 16
      %v480 = vrot.slane %v478, 7
      %v481 = vor.u32 %v477, %v480
      %v483 = vshrl.u32 %v361, 16
      %v485 = vrot.slane %v483, 6
      %v486 = vshll.u32 %v361, 16
      %v488 = vrot.slane %v486, 7
      %v489 = vor.u32 %v485, %v488
      %vm506 = vcmask 1041408
      %vm507 = vsmask.f32 1280
      %vm508 = vmand %vm506, %vm507
      %v509 = vsel %vm508, 0, %v369
      %v510 = vsel %vm508, 0, %v377
      %v511 = vsel %vm508, 0, %v385
      %v512 = vsel %vm508, 0, %v393
      %v513 = vsel %vm508, 0, %v401
      %v514 = vsel %vm508, 0, %v409
      %v515 = vsel %vm508, 0, %v417
      %v516 = vsel %vm508, 0, %v425
      %v517 = vsel %vm508, 0, %v433
      %v518 = vsel %vm508, 0, %v441
      %v519 = vsel %vm508, 0, %v449
      %v520 = vsel %vm508, 0, %v457
      %v521 = vsel %vm508, 0, %v465
      %v522 = vsel %vm508, 0, %v473
      %v523 = vsel %vm508, 0, %v481
      %v524 = vsel %vm508, 0, %v489
      %v525 = vrot.slane %v363, 1
      %v526 = vrot.slane %v366, 2
      %v527 = vor.u32 %v525, %v526
      %v528 = vrot.slane %v371, 1
      %v529 = vrot.slane %v374, 2
      %v530 = vor.u32 %v528, %v529
      %v531 = vrot.slane %v379, 1
      %v532 = vrot.slane %v382, 2
      %v533 = vor.u32 %v531, %v532
      %v534 = vrot.slane %v387, 1
      %v535 = vrot.slane %v390, 2
      %v536 = vor.u32 %v534, %v535
      %v537 = vrot.slane %v395, 1
      %v538 = vrot.slane %v398, 2
      %v539 = vor.u32 %v537, %v538
      %v540 = vrot.slane %v403, 1
      %v541 = vrot.slane %v406, 2
      %v542 = vor.u32 %v540, %v541
      %v543 = vrot.slane %v411, 1
      %v544 = vrot.slane %v414, 2
      %v545 = vor.u32 %v543, %v544
      %v546 = vrot.slane %v419, 1
      %v547 = vrot.slane %v422, 2
      %v548 = vor.u32 %v546, %v547
      %v549 = vrot.slane %v427, 1
      %v550 = vrot.slane %v430, 2
      %v551 = vor.u32 %v549, %v550
      %v552 = vrot.slane %v435, 1
      %v553 = vrot.slane %v438, 2
      %v554 = vor.u32 %v552, %v553
      %v555 = vrot.slane %v443, 1
      %v556 = vrot.slane %v446, 2
      %v557 = vor.u32 %v555, %v556
      %v558 = vrot.slane %v451, 1
      %v559 = vrot.slane %v454, 2
      %v560 = vor.u32 %v558, %v559
      %v561 = vrot.slane %v459, 1
      %v562 = vrot.slane %v462, 2
      %v563 = vor.u32 %v561, %v562
      %v564 = vrot.slane %v467, 1
      %v565 = vrot.slane %v470, 2
      %v566 = vor.u32 %v564, %v565
      %v567 = vrot.slane %v475, 1
      %v568 = vrot.slane %v478, 2
      %v569 = vor.u32 %v567, %v568
      %v570 = vrot.slane %v483, 1
      %v571 = vrot.slane %v486, 2
      %v572 = vor.u32 %v570, %v571
      %vm589 = vcmask 1046528
      %vm590 = vsmask.f32 6400
      %vm591 = vmand %vm589, %vm590
      %v592 = vsel %vm591, %v527, 0
      %v593 = vsel %vm591, %v530, 0
      %v594 = vsel %vm591, %v533, 0
      %v595 = vsel %vm591, %v536, 0
      %v596 = vsel %vm591, %v539, 0
      %v597 = vsel %vm591, %v542, 0
      %v598 = vsel %vm591, %v545, 0
      %v599 = vsel %vm591, %v548, 0
      %v600 = vsel %vm591, %v551, 0
      %v601 = vsel %vm591, %v554, 0
      %v602 = vsel %vm591, %v557, 0
      %v603 = vsel %vm591, %v560, 0
      %v604 = vsel %vm591, %v563, 0
      %v605 = vsel %vm591, %v566, 0
      %v606 = vsel %vm591, %v569, 0
      %v607 = vsel %vm591, %v572, 0
      %608 = vst [vmem:[%s170] sm:$0xff] 0
      %609 = vst [vmem:[%s170 + $0x8] sm:$0xf] 0
      %610 = vst [vmem:[%s170 + $0xc] sm:$0xff] 0
      %611 = vst [vmem:[%s170 + $0x14] sm:$0xf] 0
      %612 = vst [vmem:[%s170 + $0x18] sm:$0xff] 0
      %613 = vst [vmem:[%s170 + $0x20] sm:$0xf] 0
      %614 = vst [vmem:[%s170 + $0x24] sm:$0xff] 0
      %615 = vst [vmem:[%s170 + $0x2c] sm:$0xf] 0
      %616 = vst [vmem:[%s170 + $0x30] sm:$0xff] 0
      %617 = vst [vmem:[%s170 + $0x38] sm:$0xf] 0
      %618 = vst [vmem:[%s170 + $0x3c] sm:$0xff] 0
      %619 = vst [vmem:[%s170 + $0x44] sm:$0xf] 0
      %v668 = vunpack.c.l.b16 %v509
      %v669 = vunpack.c.l.b16 %v346
      %v670 = vunpack.c.l.b16 %v592
      %v671 = vunpack.c.h.b16 %v509
      %v672 = vunpack.c.h.b16 %v346
      %v673 = vunpack.c.h.b16 %v592
      %v674 = vunpack.c.l.b16 %v510
      %v675 = vunpack.c.l.b16 %v347
      %v676 = vunpack.c.l.b16 %v593
      %v677 = vunpack.c.h.b16 %v510
      %v678 = vunpack.c.h.b16 %v347
      %v679 = vunpack.c.h.b16 %v593
      %v680 = vunpack.c.l.b16 %v511
      %v681 = vunpack.c.l.b16 %v348
      %v682 = vunpack.c.l.b16 %v594
      %v683 = vunpack.c.h.b16 %v511
      %v684 = vunpack.c.h.b16 %v348
      %v685 = vunpack.c.h.b16 %v594
      %v686 = vunpack.c.l.b16 %v512
      %v687 = vunpack.c.l.b16 %v349
      %v688 = vunpack.c.l.b16 %v595
      %v689 = vunpack.c.h.b16 %v512
      %v690 = vunpack.c.h.b16 %v349
      %v691 = vunpack.c.h.b16 %v595
      %v692 = vunpack.c.l.b16 %v513
      %v693 = vunpack.c.l.b16 %v350
      %v694 = vunpack.c.l.b16 %v596
      %v695 = vunpack.c.h.b16 %v513
      %v696 = vunpack.c.h.b16 %v350
      %v697 = vunpack.c.h.b16 %v596
      %v698 = vunpack.c.l.b16 %v514
      %v699 = vunpack.c.l.b16 %v351
      %v700 = vunpack.c.l.b16 %v597
      %v701 = vunpack.c.h.b16 %v514
      %v702 = vunpack.c.h.b16 %v351
      %v703 = vunpack.c.h.b16 %v597
      %v704 = vunpack.c.l.b16 %v515
      %v705 = vunpack.c.l.b16 %v352
      %v706 = vunpack.c.l.b16 %v598
      %v707 = vunpack.c.h.b16 %v515
      %v708 = vunpack.c.h.b16 %v352
      %v709 = vunpack.c.h.b16 %v598
      %v710 = vunpack.c.l.b16 %v516
      %v711 = vunpack.c.l.b16 %v353
      %v712 = vunpack.c.l.b16 %v599
      %v713 = vunpack.c.h.b16 %v516
      %v714 = vunpack.c.h.b16 %v353
      %v715 = vunpack.c.h.b16 %v599
      %v716 = vunpack.c.l.b16 %v517
      %v717 = vunpack.c.l.b16 %v354
      %v718 = vunpack.c.l.b16 %v600
      %v719 = vunpack.c.h.b16 %v517
      %v720 = vunpack.c.h.b16 %v354
      %v721 = vunpack.c.h.b16 %v600
      %v722 = vunpack.c.l.b16 %v518
      %v723 = vunpack.c.l.b16 %v355
      %v724 = vunpack.c.l.b16 %v601
      %v725 = vunpack.c.h.b16 %v518
      %v726 = vunpack.c.h.b16 %v355
      %v727 = vunpack.c.h.b16 %v601
      %v728 = vunpack.c.l.b16 %v519
      %v729 = vunpack.c.l.b16 %v356
      %v730 = vunpack.c.l.b16 %v602
      %v731 = vunpack.c.h.b16 %v519
      %v732 = vunpack.c.h.b16 %v356
      %v733 = vunpack.c.h.b16 %v602
      %v734 = vunpack.c.l.b16 %v520
      %v735 = vunpack.c.l.b16 %v357
      %v736 = vunpack.c.l.b16 %v603
      %v737 = vunpack.c.h.b16 %v520
      %v738 = vunpack.c.h.b16 %v357
      %v739 = vunpack.c.h.b16 %v603
      %v740 = vunpack.c.l.b16 %v521
      %v741 = vunpack.c.l.b16 %v358
      %v742 = vunpack.c.l.b16 %v604
      %v743 = vunpack.c.h.b16 %v521
      %v744 = vunpack.c.h.b16 %v358
      %v745 = vunpack.c.h.b16 %v604
      %v746 = vunpack.c.l.b16 %v522
      %v747 = vunpack.c.l.b16 %v359
      %v748 = vunpack.c.l.b16 %v605
      %v749 = vunpack.c.h.b16 %v522
      %v750 = vunpack.c.h.b16 %v359
      %v751 = vunpack.c.h.b16 %v605
      %v752 = vunpack.c.l.b16 %v523
      %v753 = vunpack.c.l.b16 %v360
      %v754 = vunpack.c.l.b16 %v606
      %v755 = vunpack.c.h.b16 %v523
      %v756 = vunpack.c.h.b16 %v360
      %v757 = vunpack.c.h.b16 %v606
      %v758 = vunpack.c.l.b16 %v524
      %v759 = vunpack.c.l.b16 %v361
      %v760 = vunpack.c.l.b16 %v607
      %v761 = vunpack.c.h.b16 %v524
      %v762 = vunpack.c.h.b16 %v361
      %v763 = vunpack.c.h.b16 %v607
      %v764 = vpack.c.b16 %v669, %v668
      %v765 = vpack.c.b16 %v670, %v670
      %v766 = vpack.c.b16 %v672, %v671
      %v767 = vpack.c.b16 %v673, %v673
      %v768 = vpack.c.b16 %v675, %v674
      %v769 = vpack.c.b16 %v676, %v676
      %v770 = vpack.c.b16 %v678, %v677
      %v771 = vpack.c.b16 %v679, %v679
      %v772 = vpack.c.b16 %v681, %v680
      %v773 = vpack.c.b16 %v682, %v682
      %v774 = vpack.c.b16 %v684, %v683
      %v775 = vpack.c.b16 %v685, %v685
      %v776 = vpack.c.b16 %v687, %v686
      %v777 = vpack.c.b16 %v688, %v688
      %v778 = vpack.c.b16 %v690, %v689
      %v779 = vpack.c.b16 %v691, %v691
      %v780 = vpack.c.b16 %v693, %v692
      %v781 = vpack.c.b16 %v694, %v694
      %v782 = vpack.c.b16 %v696, %v695
      %v783 = vpack.c.b16 %v697, %v697
      %v784 = vpack.c.b16 %v699, %v698
      %v785 = vpack.c.b16 %v700, %v700
      %v786 = vpack.c.b16 %v702, %v701
      %v787 = vpack.c.b16 %v703, %v703
      %v788 = vpack.c.b16 %v705, %v704
      %v789 = vpack.c.b16 %v706, %v706
      %v790 = vpack.c.b16 %v708, %v707
      %v791 = vpack.c.b16 %v709, %v709
      %v792 = vpack.c.b16 %v711, %v710
      %v793 = vpack.c.b16 %v712, %v712
      %v794 = vpack.c.b16 %v714, %v713
      %v795 = vpack.c.b16 %v715, %v715
      %v796 = vpack.c.b16 %v717, %v716
      %v797 = vpack.c.b16 %v718, %v718
      %v798 = vpack.c.b16 %v720, %v719
      %v799 = vpack.c.b16 %v721, %v721
      %v800 = vpack.c.b16 %v723, %v722
      %v801 = vpack.c.b16 %v724, %v724
      %v802 = vpack.c.b16 %v726, %v725
      %v803 = vpack.c.b16 %v727, %v727
      %v804 = vpack.c.b16 %v729, %v728
      %v805 = vpack.c.b16 %v730, %v730
      %v806 = vpack.c.b16 %v732, %v731
      %v807 = vpack.c.b16 %v733, %v733
      %v808 = vpack.c.b16 %v735, %v734
      %v809 = vpack.c.b16 %v736, %v736
      %v810 = vpack.c.b16 %v738, %v737
      %v811 = vpack.c.b16 %v739, %v739
      %v812 = vpack.c.b16 %v741, %v740
      %v813 = vpack.c.b16 %v742, %v742
      %v814 = vpack.c.b16 %v744, %v743
      %v815 = vpack.c.b16 %v745, %v745
      %v816 = vpack.c.b16 %v747, %v746
      %v817 = vpack.c.b16 %v748, %v748
      %v818 = vpack.c.b16 %v750, %v749
      %v819 = vpack.c.b16 %v751, %v751
      %v820 = vpack.c.b16 %v753, %v752
      %v821 = vpack.c.b16 %v754, %v754
      %v822 = vpack.c.b16 %v756, %v755
      %v823 = vpack.c.b16 %v757, %v757
      %v824 = vpack.c.b16 %v759, %v758
      %v825 = vpack.c.b16 %v760, %v760
      %v826 = vpack.c.b16 %v762, %v761
      %v827 = vpack.c.b16 %v763, %v763
      %s892 = scalar_lea.vmem %s170, 72
      %893 = vst [vmem:[%s892] sm:$0xff] %v764
      %894 = vst [vmem:[%s892 + $0x8] sm:$0xf] %v765
      %895 = vst [vmem:[%s892 + $0xc] sm:$0xff] %v766
      %896 = vst [vmem:[%s892 + $0x14] sm:$0xf] %v767
      %897 = vst [vmem:[%s892 + $0x18] sm:$0xff] %v768
      %898 = vst [vmem:[%s892 + $0x20] sm:$0xf] %v769
      %899 = vst [vmem:[%s892 + $0x24] sm:$0xff] %v770
      %900 = vst [vmem:[%s892 + $0x2c] sm:$0xf] %v771
      %901 = vst [vmem:[%s892 + $0x30] sm:$0xff] %v772
      %902 = vst [vmem:[%s892 + $0x38] sm:$0xf] %v773
      %903 = vst [vmem:[%s892 + $0x3c] sm:$0xff] %v774
      %904 = vst [vmem:[%s892 + $0x44] sm:$0xf] %v775
      %905 = vst [vmem:[%s892 + $0x48] sm:$0xff] %v776
      %906 = vst [vmem:[%s892 + $0x50] sm:$0xf] %v777
      %907 = vst [vmem:[%s892 + $0x54] sm:$0xff] %v778
      %908 = vst [vmem:[%s892 + $0x5c] sm:$0xf] %v779
      %909 = vst [vmem:[%s892 + $0x60] sm:$0xff] %v780
      %910 = vst [vmem:[%s892 + $0x68] sm:$0xf] %v781
      %911 = vst [vmem:[%s892 + $0x6c] sm:$0xff] %v782
      %912 = vst [vmem:[%s892 + $0x74] sm:$0xf] %v783
      %913 = vst [vmem:[%s892 + $0x78] sm:$0xff] %v784
      %914 = vst [vmem:[%s892 + $0x80] sm:$0xf] %v785
      %915 = vst [vmem:[%s892 + $0x84] sm:$0xff] %v786
      %916 = vst [vmem:[%s892 + $0x8c] sm:$0xf] %v787
      %917 = vst [vmem:[%s892 + $0x90] sm:$0xff] %v788
      %918 = vst [vmem:[%s892 + $0x98] sm:$0xf] %v789
      %919 = vst [vmem:[%s892 + $0x9c] sm:$0xff] %v790
      %920 = vst [vmem:[%s892 + $0xa4] sm:$0xf] %v791
      %921 = vst [vmem:[%s892 + $0xa8] sm:$0xff] %v792
      %922 = vst [vmem:[%s892 + $0xb0] sm:$0xf] %v793
      %923 = vst [vmem:[%s892 + $0xb4] sm:$0xff] %v794
      %924 = vst [vmem:[%s892 + $0xbc] sm:$0xf] %v795
      %925 = vst [vmem:[%s892 + $0xc0] sm:$0xff] %v796
      %926 = vst [vmem:[%s892 + $0xc8] sm:$0xf] %v797
      %927 = vst [vmem:[%s892 + $0xcc] sm:$0xff] %v798
      %928 = vst [vmem:[%s892 + $0xd4] sm:$0xf] %v799
      %929 = vst [vmem:[%s892 + $0xd8] sm:$0xff] %v800
      %930 = vst [vmem:[%s892 + $0xe0] sm:$0xf] %v801
      %931 = vst [vmem:[%s892 + $0xe4] sm:$0xff] %v802
      %932 = vst [vmem:[%s892 + $0xec] sm:$0xf] %v803
      %933 = vst [vmem:[%s892 + $0xf0] sm:$0xff] %v804
      %934 = vst [vmem:[%s892 + $0xf8] sm:$0xf] %v805
      %935 = vst [vmem:[%s892 + $0xfc] sm:$0xff] %v806
      %936 = vst [vmem:[%s892 + $0x104] sm:$0xf] %v807
      %937 = vst [vmem:[%s892 + $0x108] sm:$0xff] %v808
      %938 = vst [vmem:[%s892 + $0x110] sm:$0xf] %v809
      %939 = vst [vmem:[%s892 + $0x114] sm:$0xff] %v810
      %940 = vst [vmem:[%s892 + $0x11c] sm:$0xf] %v811
      %941 = vst [vmem:[%s892 + $0x120] sm:$0xff] %v812
      %942 = vst [vmem:[%s892 + $0x128] sm:$0xf] %v813
      %943 = vst [vmem:[%s892 + $0x12c] sm:$0xff] %v814
      %944 = vst [vmem:[%s892 + $0x134] sm:$0xf] %v815
      %945 = vst [vmem:[%s892 + $0x138] sm:$0xff] %v816
      %946 = vst [vmem:[%s892 + $0x140] sm:$0xf] %v817
      %947 = vst [vmem:[%s892 + $0x144] sm:$0xff] %v818
      %948 = vst [vmem:[%s892 + $0x14c] sm:$0xf] %v819
      %949 = vst [vmem:[%s892 + $0x150] sm:$0xff] %v820
      %950 = vst [vmem:[%s892 + $0x158] sm:$0xf] %v821
      %951 = vst [vmem:[%s892 + $0x15c] sm:$0xff] %v822
      %952 = vst [vmem:[%s892 + $0x164] sm:$0xf] %v823
      %953 = vst [vmem:[%s892 + $0x168] sm:$0xff] %v824
      %954 = vst [vmem:[%s892 + $0x170] sm:$0xf] %v825
      %955 = vst [vmem:[%s892 + $0x174] sm:$0xff] %v826
      %956 = vst [vmem:[%s892 + $0x17c] sm:$0xf] %v827
      %s957 = scalar_lea.vmem %s170, 456
      %958 = vst [vmem:[%s957] sm:$0xff] 0
      %959 = vst [vmem:[%s957 + $0x8] sm:$0xf] 0
      %960 = vst [vmem:[%s957 + $0xc] sm:$0xff] 0
      %961 = vst [vmem:[%s957 + $0x14] sm:$0xf] 0
      %962 = vst [vmem:[%s957 + $0x18] sm:$0xff] 0
      %963 = vst [vmem:[%s957 + $0x20] sm:$0xf] 0
      %964 = vst [vmem:[%s957 + $0x24] sm:$0xff] 0
      %965 = vst [vmem:[%s957 + $0x2c] sm:$0xf] 0
      %966 = vst [vmem:[%s957 + $0x30] sm:$0xff] 0
      %967 = vst [vmem:[%s957 + $0x38] sm:$0xf] 0
      %968 = vst [vmem:[%s957 + $0x3c] sm:$0xff] 0
      %969 = vst [vmem:[%s957 + $0x44] sm:$0xf] 0
      %p970 = scmp.lt.s32.totalorder %s14, 1
      %s971 = scalar_select %p970, %s14, 1
      %s972 = smul.addr %s971, 132
      %s973 = smul.addr %s972, 4
      %s974 = scalar_lea.vmem %s3, %s973
      // Predicated region
      $region33: #{double_conv2_forward.5} parent=31 // pred_check
        %p975 = pneg %p100
      $region34: #{double_conv2_forward.5} parent=31 // pred_check_branch
        %977 = sbr.rel (%p975) target = $region36
      $region35: #{double_conv2_forward.5} parent=31 // pred_region
        _
      $region36: #{double_conv2_forward.5} parent=31 // pred_fallthru
        _
    $region32: #{double_conv2_forward.5} parent=5 // pred_fallthru
      _
    %p978 = scmp.le.s32.totalorder 2, %s9
    // Predicated region
    $region37: #{double_conv2_forward.5} parent=5 // pred_check
      %p979 = pneg %p978
    $region38: #{double_conv2_forward.5} parent=5 // pred_check_branch
      %981 = sbr.rel (%p979) target = $region40
    $region39: #{double_conv2_forward.5} parent=5 // pred_region
      %s982 = ssub.s32 %s9, 2
      // Predicated region
      $region41: #{double_conv2_forward.5} parent=39 // pred_check
        %p983 = pneg %p106
      $region42: #{double_conv2_forward.5} parent=39 // pred_check_branch
        %985 = sbr.rel (%p983) target = $region44
      $region43: #{double_conv2_forward.5} parent=39 // pred_region
        %p986 = scmp.lt.s32.totalorder %s15, 1
        %s987 = scalar_select %p986, %s15, 1
        %s988 = smul.addr %s987, 132
        %s989 = smul.addr %s988, 4
        %s990 = scalar_lea.vmem %s3, %s989
      $region44: #{double_conv2_forward.5} parent=39 // pred_fallthru
        _
    $region40: #{double_conv2_forward.5} parent=5 // pred_fallthru
      _
  $region6: #{double_conv2_forward.5} parent=0 // loop_footer
    %s13 = sadd.s32 1, %s9
  $region7: #{double_conv2_forward.5} parent=0 // loop_footer_branch
    %8 = sbr.rel target = $region3
  $region8: #{double_conv2_forward.5} parent=0 // loop_exit
    _

// kernel: double_conv2_forward.7
$region0: #{double_conv2_forward.7}
  #allocation0 [shape = 'u32[]', space=smem, size = 0x4, offset = 0x4, fixed_abs, tag = 'smem constant byte address 0x4 - core index']
  #allocation1 [shape = 'u32[144,128]{1,0:T(1,128)}', space=vmem, size = 0x12000, scoped, tag = 'internal scratch']
  %s0 = inlined_call_operand.vmem [shape: bf16[512,128], index: 0, kind: input, shape index: {}]
  %s1 = inlined_call_operand.vmem [shape: f32[1,128], index: 1, kind: input, shape index: {}]
  %s2 = inlined_call_operand.vmem [shape: f32[1,128], index: 2, kind: input, shape index: {}]
  %s3 = inlined_call_operand.vmem [shape: f32[512,128], index: 3, kind: output, shape index: {}]
  %s4 = sld [smem:[#allocation0]]
  $region22: #{double_conv2_forward.7} parent=0
    _
  %s6 = ssub.s32 1, %s4
  %s7 = scalar_select 0, %s6, %s4
  // Predicated region
  $region2: #{double_conv2_forward.7} parent=0 // pred_check
    _
  $region3: #{double_conv2_forward.7} parent=0 // pred_check_branch
    %9 = sbr.rel (0) target = $region5
  $region4: #{double_conv2_forward.7} parent=0 // pred_region
    _
  $region5: #{double_conv2_forward.7} parent=0 // pred_fallthru
    _
  // Predicated region
  $region6: #{double_conv2_forward.7} parent=0 // pred_check
    _
  $region7: #{double_conv2_forward.7} parent=0 // pred_check_branch
    %11 = sbr.rel (0) target = $region9
  $region8: #{double_conv2_forward.7} parent=0 // pred_region
    _
  $region9: #{double_conv2_forward.7} parent=0 // pred_fallthru
    _
  // Predicated region
  $region10: #{double_conv2_forward.7} parent=0 // pred_check
    _
  $region11: #{double_conv2_forward.7} parent=0 // pred_check_branch
    %13 = sbr.rel (0) target = $region13
  $region12: #{double_conv2_forward.7} parent=0 // pred_region
    _
  $region13: #{double_conv2_forward.7} parent=0 // pred_fallthru
    _
  %v14 = vld [vmem:[%s0] sm:$0xf]
  %v15 = vld [vmem:[%s0 + $0x4] sm:$0xf]
  %v16 = vld [vmem:[%s0 + $0x8] sm:$0xf]
  %v17 = vld [vmem:[%s0 + $0xc] sm:$0xf]
  %v18 = vld [vmem:[%s0 + $0x10] sm:$0xf]
  %v19 = vld [vmem:[%s0 + $0x14] sm:$0xf]
  %v20 = vld [vmem:[%s0 + $0x18] sm:$0xf]
  %v21 = vld [vmem:[%s0 + $0x1c] sm:$0xf]
  %v22 = vld [vmem:[%s0 + $0x20] sm:$0xf]
  %v23 = vld [vmem:[%s0 + $0x24] sm:$0xf]
  %v24 = vld [vmem:[%s0 + $0x28] sm:$0xf]
  %v25 = vld [vmem:[%s0 + $0x2c] sm:$0xf]
  %v26 = vld [vmem:[%s0 + $0x30] sm:$0xf]
  %v27 = vld [vmem:[%s0 + $0x34] sm:$0xf]
  %v28 = vld [vmem:[%s0 + $0x38] sm:$0xf]
  %v29 = vld [vmem:[%s0 + $0x3c] sm:$0xf]
  %v30 = vld [vmem:[%s0 + $0x40] sm:$0xf]
  %v31 = vld [vmem:[%s0 + $0x44] sm:$0xf]
  %v32 = vld [vmem:[%s0 + $0x48] sm:$0xf]
  %v33 = vld [vmem:[%s0 + $0x4c] sm:$0xf]
  %v34 = vld [vmem:[%s0 + $0x50] sm:$0xf]
  %v35 = vld [vmem:[%s0 + $0x54] sm:$0xf]
  %v36 = vld [vmem:[%s0 + $0x58] sm:$0xf]
  %v37 = vld [vmem:[%s0 + $0x5c] sm:$0xf]
  %v38 = vld [vmem:[%s0 + $0x60] sm:$0xf]
  %v39 = vld [vmem:[%s0 + $0x64] sm:$0xf]
  %v40 = vld [vmem:[%s0 + $0x68] sm:$0xf]
  %v41 = vld [vmem:[%s0 + $0x6c] sm:$0xf]
  %v42 = vld [vmem:[%s0 + $0x70] sm:$0xf]
  %v43 = vld [vmem:[%s0 + $0x74] sm:$0xf]
  %v44 = vld [vmem:[%s0 + $0x78] sm:$0xf]
  %v45 = vld [vmem:[%s0 + $0x7c] sm:$0xf]
  %v46 = vld [vmem:[%s0 + $0x80] sm:$0xf]
  %v47 = vld [vmem:[%s0 + $0x84] sm:$0xf]
  %v48 = vld [vmem:[%s0 + $0x88] sm:$0xf]
  %v49 = vld [vmem:[%s0 + $0x8c] sm:$0xf]
  %v50 = vld [vmem:[%s0 + $0x90] sm:$0xf]
  %v51 = vld [vmem:[%s0 + $0x94] sm:$0xf]
  %v52 = vld [vmem:[%s0 + $0x98] sm:$0xf]
  %v53 = vld [vmem:[%s0 + $0x9c] sm:$0xf]
  %v54 = vld [vmem:[%s0 + $0xa0] sm:$0xf]
  %v55 = vld [vmem:[%s0 + $0xa4] sm:$0xf]
  %v56 = vld [vmem:[%s0 + $0xa8] sm:$0xf]
  %v57 = vld [vmem:[%s0 + $0xac] sm:$0xf]
  %v58 = vld [vmem:[%s0 + $0xb0] sm:$0xf]
  %v59 = vld [vmem:[%s0 + $0xb4] sm:$0xf]
  %v60 = vld [vmem:[%s0 + $0xb8] sm:$0xf]
  %v61 = vld [vmem:[%s0 + $0xbc] sm:$0xf]
  %v62 = vld [vmem:[%s0 + $0xc0] sm:$0xf]
  %v63 = vld [vmem:[%s0 + $0xc4] sm:$0xf]
  %v64 = vld [vmem:[%s0 + $0xc8] sm:$0xf]
  %v65 = vld [vmem:[%s0 + $0xcc] sm:$0xf]
  %v66 = vld [vmem:[%s0 + $0xd0] sm:$0xf]
  %v67 = vld [vmem:[%s0 + $0xd4] sm:$0xf]
  %v68 = vld [vmem:[%s0 + $0xd8] sm:$0xf]
  %v69 = vld [vmem:[%s0 + $0xdc] sm:$0xf]
  %v70 = vld [vmem:[%s0 + $0xe0] sm:$0xf]
  %v71 = vld [vmem:[%s0 + $0xe4] sm:$0xf]
  %v72 = vld [vmem:[%s0 + $0xe8] sm:$0xf]
  %v73 = vld [vmem:[%s0 + $0xec] sm:$0xf]
  %v74 = vld [vmem:[%s0 + $0xf0] sm:$0xf]
  %v75 = vld [vmem:[%s0 + $0xf4] sm:$0xf]
  %v76 = vld [vmem:[%s0 + $0xf8] sm:$0xf]
  %v77 = vld [vmem:[%s0 + $0xfc] sm:$0xf]
  %v78 = vunpack.c.l.bf16 %v14
  %v79 = vunpack.c.l.bf16 %v15
  %v80 = vunpack.c.l.bf16 %v16
  %v81 = vunpack.c.l.bf16 %v17
  %v82 = vunpack.c.l.bf16 %v18
  %v83 = vunpack.c.l.bf16 %v19
  %v84 = vunpack.c.l.bf16 %v20
  %v85 = vunpack.c.l.bf16 %v21
  %v86 = vunpack.c.l.bf16 %v22
  %v87 = vunpack.c.l.bf16 %v23
  %v88 = vunpack.c.l.bf16 %v24
  %v89 = vunpack.c.l.bf16 %v25
  %v90 = vunpack.c.l.bf16 %v26
  %v91 = vunpack.c.l.bf16 %v27
  %v92 = vunpack.c.l.bf16 %v28
  %v93 = vunpack.c.l.bf16 %v29
  %v94 = vunpack.c.l.bf16 %v30
  %v95 = vunpack.c.l.bf16 %v31
  %v96 = vunpack.c.l.bf16 %v32
  %v97 = vunpack.c.l.bf16 %v33
  %v98 = vunpack.c.l.bf16 %v34
  %v99 = vunpack.c.l.bf16 %v35
  %v100 = vunpack.c.l.bf16 %v36
  %v101 = vunpack.c.l.bf16 %v37
  %v102 = vunpack.c.l.bf16 %v38
  %v103 = vunpack.c.l.bf16 %v39
  %v104 = vunpack.c.l.bf16 %v40
  %v105 = vunpack.c.l.bf16 %v41
  %v106 = vunpack.c.l.bf16 %v42
  %v107 = vunpack.c.l.bf16 %v43
  %v108 = vunpack.c.l.bf16 %v44
  %v109 = vunpack.c.l.bf16 %v45
  %v110 = vunpack.c.l.bf16 %v46
  %v111 = vunpack.c.l.bf16 %v47
  %v112 = vunpack.c.l.bf16 %v48
  %v113 = vunpack.c.l.bf16 %v49
  %v114 = vunpack.c.l.bf16 %v50
  %v115 = vunpack.c.l.bf16 %v51
  %v116 = vunpack.c.l.bf16 %v52
  %v117 = vunpack.c.l.bf16 %v53
  %v118 = vunpack.c.l.bf16 %v54
  %v119 = vunpack.c.l.bf16 %v55
  %v120 = vunpack.c.l.bf16 %v56
  %v121 = vunpack.c.l.bf16 %v57
  %v122 = vunpack.c.l.bf16 %v58
  %v123 = vunpack.c.l.bf16 %v59
  %v124 = vunpack.c.l.bf16 %v60
  %v125 = vunpack.c.l.bf16 %v61
  %v126 = vunpack.c.l.bf16 %v62
  %v127 = vunpack.c.l.bf16 %v63
  %v128 = vunpack.c.l.bf16 %v64
  %v129 = vunpack.c.l.bf16 %v65
  %v130 = vunpack.c.l.bf16 %v66
  %v131 = vunpack.c.l.bf16 %v67
  %v132 = vunpack.c.l.bf16 %v68
  %v133 = vunpack.c.l.bf16 %v69
  %v134 = vunpack.c.l.bf16 %v70
  %v135 = vunpack.c.l.bf16 %v71
  %v136 = vunpack.c.l.bf16 %v72
  %v137 = vunpack.c.l.bf16 %v73
  %v138 = vunpack.c.l.bf16 %v74
  %v139 = vunpack.c.l.bf16 %v75
  %v140 = vunpack.c.l.bf16 %v76
  %v141 = vunpack.c.l.bf16 %v77
  %v142 = vld [vmem:[%s1] sm:$0x1]
  %v144 = vlaneseq
  %v145 = vshrl.u32 %v144, 7
  %v146 = vsub.s32 0, %v145
  %v147 = vrot.slane %v142, %v146
  %v149 = vmul.f32 %v78, %v147
  %v150 = vmul.f32 %v79, %v147
  %v151 = vmul.f32 %v80, %v147
  %v152 = vmul.f32 %v81, %v147
  %v153 = vmul.f32 %v82, %v147
  %v154 = vmul.f32 %v83, %v147
  %v155 = vmul.f32 %v84, %v147
  %v156 = vmul.f32 %v85, %v147
  %v157 = vmul.f32 %v86, %v147
  %v158 = vmul.f32 %v87, %v147
  %v159 = vmul.f32 %v88, %v147
  %v160 = vmul.f32 %v89, %v147
  %v161 = vmul.f32 %v90, %v147
  %v162 = vmul.f32 %v91, %v147
  %v163 = vmul.f32 %v92, %v147
  %v164 = vmul.f32 %v93, %v147
  %v165 = vmul.f32 %v94, %v147
  %v166 = vmul.f32 %v95, %v147
  %v167 = vmul.f32 %v96, %v147
  %v168 = vmul.f32 %v97, %v147
  %v169 = vmul.f32 %v98, %v147
  %v170 = vmul.f32 %v99, %v147
  %v171 = vmul.f32 %v100, %v147
  %v172 = vmul.f32 %v101, %v147
  %v173 = vmul.f32 %v102, %v147
  %v174 = vmul.f32 %v103, %v147
  %v175 = vmul.f32 %v104, %v147
  %v176 = vmul.f32 %v105, %v147
  %v177 = vmul.f32 %v106, %v147
  %v178 = vmul.f32 %v107, %v147
  %v179 = vmul.f32 %v108, %v147
  %v180 = vmul.f32 %v109, %v147
  %v181 = vmul.f32 %v110, %v147
  %v182 = vmul.f32 %v111, %v147
  %v183 = vmul.f32 %v112, %v147
  %v184 = vmul.f32 %v113, %v147
  %v185 = vmul.f32 %v114, %v147
  %v186 = vmul.f32 %v115, %v147
  %v187 = vmul.f32 %v116, %v147
  %v188 = vmul.f32 %v117, %v147
  %v189 = vmul.f32 %v118, %v147
  %v190 = vmul.f32 %v119, %v147
  %v191 = vmul.f32 %v120, %v147
  %v192 = vmul.f32 %v121, %v147
  %v193 = vmul.f32 %v122, %v147
  %v194 = vmul.f32 %v123, %v147
  %v195 = vmul.f32 %v124, %v147
  %v196 = vmul.f32 %v125, %v147
  %v197 = vmul.f32 %v126, %v147
  %v198 = vmul.f32 %v127, %v147
  %v199 = vmul.f32 %v128, %v147
  %v200 = vmul.f32 %v129, %v147
  %v201 = vmul.f32 %v130, %v147
  %v202 = vmul.f32 %v131, %v147
  %v203 = vmul.f32 %v132, %v147
  %v204 = vmul.f32 %v133, %v147
  %v205 = vmul.f32 %v134, %v147
  %v206 = vmul.f32 %v135, %v147
  %v207 = vmul.f32 %v136, %v147
  %v208 = vmul.f32 %v137, %v147
  %v209 = vmul.f32 %v138, %v147
  %v210 = vmul.f32 %v139, %v147
  %v211 = vmul.f32 %v140, %v147
  %v212 = vmul.f32 %v141, %v147
  %v213 = vld [vmem:[%s2] sm:$0x1]
  %v215 = vlaneseq
  %v216 = vshrl.u32 %v215, 7
  %v217 = vsub.s32 0, %v216
  %v218 = vrot.slane %v213, %v217
  %v220 = vadd.f32 %v149, %v218
  %v221 = vadd.f32 %v150, %v218
  %v222 = vadd.f32 %v151, %v218
  %v223 = vadd.f32 %v152, %v218
  %v224 = vadd.f32 %v153, %v218
  %v225 = vadd.f32 %v154, %v218
  %v226 = vadd.f32 %v155, %v218
  %v227 = vadd.f32 %v156, %v218
  %v228 = vadd.f32 %v157, %v218
  %v229 = vadd.f32 %v158, %v218
  %v230 = vadd.f32 %v159, %v218
  %v231 = vadd.f32 %v160, %v218
  %v232 = vadd.f32 %v161, %v218
  %v233 = vadd.f32 %v162, %v218
  %v234 = vadd.f32 %v163, %v218
  %v235 = vadd.f32 %v164, %v218
  %v236 = vadd.f32 %v165, %v218
  %v237 = vadd.f32 %v166, %v218
  %v238 = vadd.f32 %v167, %v218
  %v239 = vadd.f32 %v168, %v218
  %v240 = vadd.f32 %v169, %v218
  %v241 = vadd.f32 %v170, %v218
  %v242 = vadd.f32 %v171, %v218
  %v243 = vadd.f32 %v172, %v218
  %v244 = vadd.f32 %v173, %v218
  %v245 = vadd.f32 %v174, %v218
  %v246 = vadd.f32 %v175, %v218
  %v247 = vadd.f32 %v176, %v218
  %v248 = vadd.f32 %v177, %v218
  %v249 = vadd.f32 %v178, %v218
  %v250 = vadd.f32 %v179, %v218
  %v251 = vadd.f32 %v180, %v218
  %v252 = vadd.f32 %v181, %v218
  %v253 = vadd.f32 %v182, %v218
  %v254 = vadd.f32 %v183, %v218
  %v255 = vadd.f32 %v184, %v218
  %v256 = vadd.f32 %v185, %v218
  %v257 = vadd.f32 %v186, %v218
  %v258 = vadd.f32 %v187, %v218
  %v259 = vadd.f32 %v188, %v218
  %v260 = vadd.f32 %v189, %v218
  %v261 = vadd.f32 %v190, %v218
  %v262 = vadd.f32 %v191, %v218
  %v263 = vadd.f32 %v192, %v218
  %v264 = vadd.f32 %v193, %v218
  %v265 = vadd.f32 %v194, %v218
  %v266 = vadd.f32 %v195, %v218
  %v267 = vadd.f32 %v196, %v218
  %v268 = vadd.f32 %v197, %v218
  %v269 = vadd.f32 %v198, %v218
  %v270 = vadd.f32 %v199, %v218
  %v271 = vadd.f32 %v200, %v218
  %v272 = vadd.f32 %v201, %v218
  %v273 = vadd.f32 %v202, %v218
  %v274 = vadd.f32 %v203, %v218
  %v275 = vadd.f32 %v204, %v218
  %v276 = vadd.f32 %v205, %v218
  %v277 = vadd.f32 %v206, %v218
  %v278 = vadd.f32 %v207, %v218
  %v279 = vadd.f32 %v208, %v218
  %v280 = vadd.f32 %v209, %v218
  %v281 = vadd.f32 %v210, %v218
  %v282 = vadd.f32 %v211, %v218
  %v283 = vadd.f32 %v212, %v218
  %v284 = vmax.f32 %v220, 0.0
  %v285 = vmax.f32 %v221, 0.0
  %v286 = vmax.f32 %v222, 0.0
  %v287 = vmax.f32 %v223, 0.0
  %v288 = vmax.f32 %v224, 0.0
  %v289 = vmax.f32 %v225, 0.0
  %v290 = vmax.f32 %v226, 0.0
  %v291 = vmax.f32 %v227, 0.0
  %v292 = vmax.f32 %v228, 0.0
  %v293 = vmax.f32 %v229, 0.0
  %v294 = vmax.f32 %v230, 0.0
  %v295 = vmax.f32 %v231, 0.0
  %v296 = vmax.f32 %v232, 0.0
  %v297 = vmax.f32 %v233, 0.0
  %v298 = vmax.f32 %v234, 0.0
  %v299 = vmax.f32 %v235, 0.0
  %v300 = vmax.f32 %v236, 0.0
  %v301 = vmax.f32 %v237, 0.0
  %v302 = vmax.f32 %v238, 0.0
  %v303 = vmax.f32 %v239, 0.0
  %v304 = vmax.f32 %v240, 0.0
  %v305 = vmax.f32 %v241, 0.0
  %v306 = vmax.f32 %v242, 0.0
  %v307 = vmax.f32 %v243, 0.0
  %v308 = vmax.f32 %v244, 0.0
  %v309 = vmax.f32 %v245, 0.0
  %v310 = vmax.f32 %v246, 0.0
  %v311 = vmax.f32 %v247, 0.0
  %v312 = vmax.f32 %v248, 0.0
  %v313 = vmax.f32 %v249, 0.0
  %v314 = vmax.f32 %v250, 0.0
  %v315 = vmax.f32 %v251, 0.0
  %v316 = vmax.f32 %v252, 0.0
  %v317 = vmax.f32 %v253, 0.0
  %v318 = vmax.f32 %v254, 0.0
  %v319 = vmax.f32 %v255, 0.0
  %v320 = vmax.f32 %v256, 0.0
  %v321 = vmax.f32 %v257, 0.0
  %v322 = vmax.f32 %v258, 0.0
  %v323 = vmax.f32 %v259, 0.0
  %v324 = vmax.f32 %v260, 0.0
  %v325 = vmax.f32 %v261, 0.0
  %v326 = vmax.f32 %v262, 0.0
  %v327 = vmax.f32 %v263, 0.0
  %v328 = vmax.f32 %v264, 0.0
  %v329 = vmax.f32 %v265, 0.0
  %v330 = vmax.f32 %v266, 0.0
  %v331 = vmax.f32 %v267, 0.0
  %v332 = vmax.f32 %v268, 0.0
  %v333 = vmax.f32 %v269, 0.0
  %v334 = vmax.f32 %v270, 0.0
  %v335 = vmax.f32 %v271, 0.0
  %v336 = vmax.f32 %v272, 0.0
  %v337 = vmax.f32 %v273, 0.0
  %v338 = vmax.f32 %v274, 0.0
  %v339 = vmax.f32 %v275, 0.0
  %v340 = vmax.f32 %v276, 0.0
  %v341 = vmax.f32 %v277, 0.0
  %v342 = vmax.f32 %v278, 0.0
  %v343 = vmax.f32 %v279, 0.0
  %v344 = vmax.f32 %v280, 0.0
  %v345 = vmax.f32 %v281, 0.0
  %v346 = vmax.f32 %v282, 0.0
  %v347 = vmax.f32 %v283, 0.0
  %348 = vst [vmem:[%s3] sm:$0xff] %v284
  %349 = vst [vmem:[%s3 + $0x8] sm:$0xff] %v285
  %350 = vst [vmem:[%s3 + $0x10] sm:$0xff] %v286
  %351 = vst [vmem:[%s3 + $0x18] sm:$0xff] %v287
  %352 = vst [vmem:[%s3 + $0x20] sm:$0xff] %v288
  %353 = vst [vmem:[%s3 + $0x28] sm:$0xff] %v289
  %354 = vst [vmem:[%s3 + $0x30] sm:$0xff] %v290
  %355 = vst [vmem:[%s3 + $0x38] sm:$0xff] %v291
  %356 = vst [vmem:[%s3 + $0x40] sm:$0xff] %v292
  %357 = vst [vmem:[%s3 + $0x48] sm:$0xff] %v293
  %358 = vst [vmem:[%s3 + $0x50] sm:$0xff] %v294
  %359 = vst [vmem:[%s3 + $0x58] sm:$0xff] %v295
  %360 = vst [vmem:[%s3 + $0x60] sm:$0xff] %v296
  %361 = vst [vmem:[%s3 + $0x68] sm:$0xff] %v297
  %362 = vst [vmem:[%s3 + $0x70] sm:$0xff] %v298
  %363 = vst [vmem:[%s3 + $0x78] sm:$0xff] %v299
  %364 = vst [vmem:[%s3 + $0x80] sm:$0xff] %v300
  %365 = vst [vmem:[%s3 + $0x88] sm:$0xff] %v301
  %366 = vst [vmem:[%s3 + $0x90] sm:$0xff] %v302
  %367 = vst [vmem:[%s3 + $0x98] sm:$0xff] %v303
  %368 = vst [vmem:[%s3 + $0xa0] sm:$0xff] %v304
  %369 = vst [vmem:[%s3 + $0xa8] sm:$0xff] %v305
  %370 = vst [vmem:[%s3 + $0xb0] sm:$0xff] %v306
  %371 = vst [vmem:[%s3 + $0xb8] sm:$0xff] %v307
  %372 = vst [vmem:[%s3 + $0xc0] sm:$0xff] %v308
  %373 = vst [vmem:[%s3 + $0xc8] sm:$0xff] %v309
  %374 = vst [vmem:[%s3 + $0xd0] sm:$0xff] %v310
  %375 = vst [vmem:[%s3 + $0xd8] sm:$0xff] %v311
  %376 = vst [vmem:[%s3 + $0xe0] sm:$0xff] %v312
  %377 = vst [vmem:[%s3 + $0xe8] sm:$0xff] %v313
  %378 = vst [vmem:[%s3 + $0xf0] sm:$0xff] %v314
  %379 = vst [vmem:[%s3 + $0xf8] sm:$0xff] %v315
  %380 = vst [vmem:[%s3 + $0x100] sm:$0xff] %v316
  %381 = vst [vmem:[%s3 + $0x108] sm:$0xff] %v317
  %382 = vst [vmem:[%s3 + $0x110] sm:$0xff] %v318
  %383 = vst [vmem:[%s3 + $0x118] sm:$0xff] %v319
  %384 = vst [vmem:[%s3 + $0x120] sm:$0xff] %v320
  %385 = vst [vmem:[%s3 + $0x128] sm:$0xff] %v321
  %386 = vst [vmem:[%s3 + $0x130] sm:$0xff] %v322
  %387 = vst [vmem:[%s3 + $0x138] sm:$0xff] %v323
  %388 = vst [vmem:[%s3 + $0x140] sm:$0xff] %v324
  %389 = vst [vmem:[%s3 + $0x148] sm:$0xff] %v325
  %390 = vst [vmem:[%s3 + $0x150] sm:$0xff] %v326
  %391 = vst [vmem:[%s3 + $0x158] sm:$0xff] %v327
  %392 = vst [vmem:[%s3 + $0x160] sm:$0xff] %v328
  %393 = vst [vmem:[%s3 + $0x168] sm:$0xff] %v329
  %394 = vst [vmem:[%s3 + $0x170] sm:$0xff] %v330
  %395 = vst [vmem:[%s3 + $0x178] sm:$0xff] %v331
  %396 = vst [vmem:[%s3 + $0x180] sm:$0xff] %v332
  %397 = vst [vmem:[%s3 + $0x188] sm:$0xff] %v333
  %398 = vst [vmem:[%s3 + $0x190] sm:$0xff] %v334
  %399 = vst [vmem:[%s3 + $0x198] sm:$0xff] %v335
  %400 = vst [vmem:[%s3 + $0x1a0] sm:$0xff] %v336
  %401 = vst [vmem:[%s3 + $0x1a8] sm:$0xff] %v337
  %402 = vst [vmem:[%s3 + $0x1b0] sm:$0xff] %v338
  %403 = vst [vmem:[%s3 + $0x1b8] sm:$0xff] %v339
  %404 = vst [vmem:[%s3 + $0x1c0] sm:$0xff] %v340
  %405 = vst [vmem:[%s3 + $0x1c8] sm:$0xff] %v341
  %406 = vst [vmem:[%s3 + $0x1d0] sm:$0xff] %v342
  %407 = vst [vmem:[%s3 + $0x1d8] sm:$0xff] %v343
  %408 = vst [vmem:[%s3 + $0x1e0] sm:$0xff] %v344
  %409 = vst [vmem:[%s3 + $0x1e8] sm:$0xff] %v345
  %410 = vst [vmem:[%s3 + $0x1f0] sm:$0xff] %v346
  %411 = vst [vmem:[%s3 + $0x1f8] sm:$0xff] %v347
  // Predicated region
  $region14: #{double_conv2_forward.7} parent=0 // pred_check
    _
  $region15: #{double_conv2_forward.7} parent=0 // pred_check_branch
    %413 = sbr.rel (0) target = $region17
  $region16: #{double_conv2_forward.7} parent=0 // pred_region
    _
  $region17: #{double_conv2_forward.7} parent=0 // pred_fallthru
    _
  // Predicated region
  $region18: #{double_conv2_forward.7} parent=0 // pred_check
    _
  $region19: #{double_conv2_forward.7} parent=0 // pred_check_branch
    %415 = sbr.rel (0) target = $region21
  $region20: #{double_conv2_forward.7} parent=0 // pred_region
    _
  $region21: #{double_conv2_forward.7} parent=0 // pred_fallthru
    _

// kernel: double_conv2_forward.6
$region0: #{double_conv2_forward.6}
  #allocation0 [shape = 'u32[]', space=smem, size = 0x4, offset = 0x4, fixed_abs, tag = 'smem constant byte address 0x4 - core index']
  #allocation1 [shape = 'u32[144,128]{1,0:T(1,128)}', space=vmem, size = 0x12000, scoped, tag = 'internal scratch']
  %s0 = inlined_call_operand.vmem [shape: bf16[2,22,16,384], index: 0, kind: input, shape index: {}]
  %s1 = inlined_call_operand.vmem [shape: bf16[3,384,128], index: 1, kind: input, shape index: {}]
  %s2 = inlined_call_operand.vmem [shape: bf16[2,16,16,128], index: 2, kind: output, shape index: {0}]
  %s3 = inlined_call_operand.vmem [shape: f32[2,2,2,128], index: 3, kind: output, shape index: {1}]
  %4 = xla_tuple %s2, %s3
  %s5 = sld [smem:[#allocation0]]
  $region49: #{double_conv2_forward.6} parent=0
    _
  %s7 = ssub.s32 1, %s5
  %s8 = scalar_select 0, %s7, %s5
  loop: start=0, step=1, limit=6
  $region2: #{double_conv2_forward.6} parent=0 // loop_pre_header
    _
  $region3: #{double_conv2_forward.6} parent=0 // loop_header
    %s10 = sphi 0, %s14
    %p11 = scmp.ge.s32.totalorder %s10, 6
    %s17 = sphi 0, %s36
    %s18 = sphi 0, %s32
    %s19 = sphi 0, %s28
    %s20 = sphi 0, %s17
    %s21 = sphi 0, %s18
    %s22 = sphi 0, %s19
    %s23 = sphi 0, %s20
    %s24 = sphi 0, %s21
    %s25 = sphi 0, %s22
    %s39 = sphi 0, %s41
    %s42 = sphi 0, %s39
    %s43 = sphi 0, %s42
    %s59 = sphi 0, %s43
    %s65 = sphi 0, %s67
    %s68 = sphi 0, %s65
    %s69 = sphi 0, %s68
    %s85 = sphi 0, %s69
    %s95 = sphi 0, %s97
    %s98 = sphi 0, %s95
    %s99 = sphi 0, %s98
    %s115 = sphi 0, %s99
    %s125 = sphi 0, %s127
    %s128 = sphi 0, %s125
    %s129 = sphi 0, %s128
    %s145 = sphi 0, %s129
  $region4: #{double_conv2_forward.6} parent=0 // loop_header_branch
    %13 = sbr.rel (%p11) target = $region8
  $region5: #{double_conv2_forward.6} parent=0 // loop_body
    %s15 = ssub.s32 %s10, 1
    %s16 = ssub.s32 %s10, 2
    %s26 = sadd.s32 1, %s19
    %p27 = scmp.ge.s32.totalorder %s26, 1
    %s28 = scalar_select %p27, 0, %s26
    %s29 = sadd.s32 1, %s18
    %s30 = scalar_select %p27, %s29, %s18
    %p31 = scmp.ge.s32.totalorder %s30, 2
    %s32 = scalar_select %p31, 0, %s30
    %s33 = sadd.s32 1, %s17
    %s34 = scalar_select %p31, %s33, %s17
    %p35 = scmp.ge.s32.totalorder %s34, 2
    %s36 = scalar_select %p35, 0, %s34
    %s37 = ssub.s32 %s17, %s36
    %p38 = scmp.eq.s32.totalorder %s37, 0
    %s40 = sadd.s32 %s39, 1
    %s41 = scalar_select %p38, %s39, %s40
    %p44 = pneg %p38
    %p45 = scmp.eq.s32.totalorder %s10, 3
    %p46 = por %p44, %p45
    %p47 = scmp.ne.s32.totalorder %s39, %s42
    %p48 = scmp.eq.s32.totalorder %s10, 0
    %p49 = por %p47, %p48
    %p50 = scmp.ne.s32.totalorder %s39, %s42
    %p51 = scmp.eq.s32.totalorder %s15, 3
    %p52 = por %p50, %p51
    %p53 = scmp.ne.s32.totalorder %s42, %s43
    %p54 = scmp.eq.s32.totalorder %s15, 0
    %p55 = por %p53, %p54
    %p56 = scmp.ne.s32.totalorder %s42, %s43
    %p57 = scmp.eq.s32.totalorder %s16, 3
    %p58 = por %p56, %p57
    %p60 = scmp.ne.s32.totalorder %s43, %s59
    %p61 = scmp.eq.s32.totalorder %s16, 0
    %p62 = por %p60, %p61
    %s63 = ssub.s32 %s19, %s28
    %p64 = scmp.eq.s32.totalorder %s63, 0
    %s66 = sadd.s32 %s65, 1
    %s67 = scalar_select %p64, %s65, %s66
    %p70 = pneg %p64
    %p71 = scmp.eq.s32.totalorder %s10, 3
    %p72 = por %p70, %p71
    %p73 = scmp.ne.s32.totalorder %s65, %s68
    %p74 = scmp.eq.s32.totalorder %s10, 0
    %p75 = por %p73, %p74
    %p76 = scmp.ne.s32.totalorder %s65, %s68
    %p77 = scmp.eq.s32.totalorder %s15, 3
    %p78 = por %p76, %p77
    %p79 = scmp.ne.s32.totalorder %s68, %s69
    %p80 = scmp.eq.s32.totalorder %s15, 0
    %p81 = por %p79, %p80
    %p82 = scmp.ne.s32.totalorder %s68, %s69
    %p83 = scmp.eq.s32.totalorder %s16, 3
    %p84 = por %p82, %p83
    %p86 = scmp.ne.s32.totalorder %s69, %s85
    %p87 = scmp.eq.s32.totalorder %s16, 0
    %p88 = por %p86, %p87
    %s89 = ssub.s32 %s17, %s36
    %s90 = ssub.s32 %s18, %s32
    %s91 = sor.u32 %s89, %s90
    %s92 = ssub.s32 %s19, %s28
    %s93 = sor.u32 %s91, %s92
    %p94 = scmp.eq.s32.totalorder %s93, 0
    %s96 = sadd.s32 %s95, 1
    %s97 = scalar_select %p94, %s95, %s96
    %p100 = pneg %p94
    %p101 = scmp.eq.s32.totalorder %s10, 3
    %p102 = por %p100, %p101
    %p103 = scmp.ne.s32.totalorder %s95, %s98
    %p104 = scmp.eq.s32.totalorder %s10, 0
    %p105 = por %p103, %p104
    %p106 = scmp.ne.s32.totalorder %s95, %s98
    %p107 = scmp.eq.s32.totalorder %s15, 3
    %p108 = por %p106, %p107
    %p109 = scmp.ne.s32.totalorder %s98, %s99
    %p110 = scmp.eq.s32.totalorder %s15, 0
    %p111 = por %p109, %p110
    %p112 = scmp.ne.s32.totalorder %s98, %s99
    %p113 = scmp.eq.s32.totalorder %s16, 3
    %p114 = por %p112, %p113
    %p116 = scmp.ne.s32.totalorder %s99, %s115
    %p117 = scmp.eq.s32.totalorder %s16, 0
    %p118 = por %p116, %p117
    %s119 = ssub.s32 %s17, %s36
    %s120 = ssub.s32 %s18, %s32
    %s121 = sor.u32 %s119, %s120
    %s122 = ssub.s32 %s19, %s28
    %s123 = sor.u32 %s121, %s122
    %p124 = scmp.eq.s32.totalorder %s123, 0
    %s126 = sadd.s32 %s125, 1
    %s127 = scalar_select %p124, %s125, %s126
    %p130 = pneg %p124
    %p131 = scmp.eq.s32.totalorder %s10, 3
    %p132 = por %p130, %p131
    %p133 = scmp.ne.s32.totalorder %s125, %s128
    %p134 = scmp.eq.s32.totalorder %s10, 0
    %p135 = por %p133, %p134
    %p136 = scmp.ne.s32.totalorder %s125, %s128
    %p137 = scmp.eq.s32.totalorder %s15, 3
    %p138 = por %p136, %p137
    %p139 = scmp.ne.s32.totalorder %s128, %s129
    %p140 = scmp.eq.s32.totalorder %s15, 0
    %p141 = por %p139, %p140
    %p142 = scmp.ne.s32.totalorder %s128, %s129
    %p143 = scmp.eq.s32.totalorder %s16, 3
    %p144 = por %p142, %p143
    %p146 = scmp.ne.s32.totalorder %s129, %s145
    %p147 = scmp.eq.s32.totalorder %s16, 0
    %p148 = por %p146, %p147
    %p149 = scmp.le.s32.totalorder 1, %s10
    %p150 = scmp.lt.s32.totalorder %s10, 5
    %p151 = pnand %p149, %p150
    %p152 = pneg %p151
    // Predicated region
    $region9: #{double_conv2_forward.6} parent=5 // pred_check
      _
    $region10: #{double_conv2_forward.6} parent=5 // pred_check_branch
      %154 = sbr.rel (%p151) target = $region12
    $region11: #{double_conv2_forward.6} parent=5 // pred_region
      %s155 = ssub.s32 %s10, 1
      // Predicated region
      $region13: #{double_conv2_forward.6} parent=11 // pred_check
        %p156 = pneg %p81
      $region14: #{double_conv2_forward.6} parent=11 // pred_check_branch
        %158 = sbr.rel (%p156) target = $region16
      $region15: #{double_conv2_forward.6} parent=11 // pred_region
        %p159 = scmp.lt.s32.totalorder %s22, 0
        %s160 = scalar_select %p159, %s22, 0
        %s161 = smul.addr %s160, 4
        %s162 = scalar_lea.vmem %s1, %s161
      $region16: #{double_conv2_forward.6} parent=11 // pred_fallthru
        _
    $region12: #{double_conv2_forward.6} parent=5 // pred_fallthru
      _
    %p163 = scmp.lt.s32.totalorder %s10, 4
    // Predicated region
    $region17: #{double_conv2_forward.6} parent=5 // pred_check
      %p164 = pneg %p163
    $region18: #{double_conv2_forward.6} parent=5 // pred_check_branch
      %166 = sbr.rel (%p164) target = $region20
    $region19: #{double_conv2_forward.6} parent=5 // pred_region
      // Predicated region
      $region21: #{double_conv2_forward.6} parent=19 // pred_check
        %p167 = pneg %p49
      $region22: #{double_conv2_forward.6} parent=19 // pred_check_branch
        %169 = sbr.rel (%p167) target = $region24
      $region23: #{double_conv2_forward.6} parent=19 // pred_region
        %p170 = scmp.lt.s32.totalorder %s17, 1
        %s171 = scalar_select %p170, %s17, 1
        %s172 = smul.addr %s171, 132
        %s173 = smul.addr %s172, 4
        %s174 = scalar_lea.vmem %s0, %s173
      $region24: #{double_conv2_forward.6} parent=19 // pred_fallthru
        _
    $region20: #{double_conv2_forward.6} parent=5 // pred_fallthru
      _
    %p175 = scmp.le.s32.totalorder 1, %s10
    %p176 = scmp.lt.s32.totalorder %s10, 5
    %p177 = pnand %p175, %p176
    %p178 = pneg %p177
    // Predicated region
    $region25: #{double_conv2_forward.6} parent=5 // pred_check
      _
    $region26: #{double_conv2_forward.6} parent=5 // pred_check_branch
      %180 = sbr.rel (%p177) target = $region28
    $region27: #{double_conv2_forward.6} parent=5 // pred_region
      %s181 = ssub.s32 %s10, 1
      %p182 = scmp.lt.s32.totalorder %s20, 1
      %s183 = scalar_select %p182, %s20, 1
      %s184 = smul.addr %s183, 132
      %s185 = smul.addr %s184, 4
      %s186 = scalar_lea.vmem %s0, %s185
      %p187 = pneg %p55
      %p188 = pneg %p52
      %p189 = scmp.lt.s32.totalorder %s22, 0
      %s190 = scalar_select %p189, %s22, 0
      %s191 = smul.addr %s190, 4
      %s192 = scalar_lea.vmem %s1, %s191
      %p193 = pneg %p81
      %p194 = pneg %p78
      %p195 = pneg %p111
      %p196 = pneg %p108
      %s197 = smul.u32 8, %s21
      %p198 = scmp.lt.s32.totalorder %s20, 1
      %s199 = scalar_select %p198, %s20, 1
      %p200 = scmp.lt.s32.totalorder %s197, 15
      %s201 = scalar_select %p200, %s197, 15
      %p202 = scmp.lt.s32.totalorder %s22, 0
      %s203 = scalar_select %p202, %s22, 0
      %s204 = smul.addr %s201, 2
      %s205 = sadd.s32 %s203, %s204
      %s206 = smul.addr %s199, 32
      %s207 = sadd.s32 %s205, %s206
      %s208 = smul.addr %s207, 4
      %s209 = scalar_lea.vmem %s2, %s208
      %p210 = pneg %p141
      %p211 = pneg %p138
      %p212 = scmp.lt.s32.totalorder %s20, 1
      %s213 = scalar_select %p212, %s20, 1
      %p214 = scmp.lt.s32.totalorder %s21, 1
      %s215 = scalar_select %p214, %s21, 1
      %p216 = scmp.lt.s32.totalorder %s22, 0
      %s217 = scalar_select %p216, %s22, 0
      %s218 = sadd.s32 %s217, %s215
      %s219 = smul.addr %s213, 2
      %s220 = sadd.s32 %s218, %s219
      %s221 = smul.addr %s220, 2
      %s222 = scalar_lea.vmem %s3, %s221
      %p223 = scmp.lt.s32.totalorder %s20, 1
      %s224 = scalar_select %p223, %s20, 1
      %s225 = smul.addr %s224, 132
      %s226 = smul.addr %s225, 4
      %s227 = scalar_lea.vmem %s0, %s226
      %p228 = scmp.lt.s32.totalorder %s22, 0
      %s229 = scalar_select %p228, %s22, 0
      %s230 = smul.addr %s229, 4
      %s231 = scalar_lea.vmem %s1, %s230
      %s232 = smul.u32 8, %s21
      %p233 = scmp.lt.s32.totalorder %s20, 1
      %s234 = scalar_select %p233, %s20, 1
      %p235 = scmp.lt.s32.totalorder %s232, 15
      %s236 = scalar_select %p235, %s232, 15
      %p237 = scmp.lt.s32.totalorder %s22, 0
      %s238 = scalar_select %p237, %s22, 0
      %s239 = smul.addr %s236, 2
      %s240 = sadd.s32 %s238, %s239
      %s241 = smul.addr %s234, 32
      %s242 = sadd.s32 %s240, %s241
      %s243 = smul.addr %s242, 4
      %s244 = scalar_lea.vmem %s2, %s243
      %s245 = smul.u32 8, %s21
      %p246 = scmp.lt.s32.totalorder %s20, 1
      %s247 = scalar_select %p246, %s20, 1
      %p248 = scmp.lt.s32.totalorder %s21, 1
      %s249 = scalar_select %p248, %s21, 1
      %p250 = scmp.lt.s32.totalorder %s22, 0
      %s251 = scalar_select %p250, %s22, 0
      %s252 = sadd.s32 %s251, %s249
      %s253 = smul.addr %s247, 2
      %s254 = sadd.s32 %s252, %s253
      %s255 = smul.addr %s254, 2
      %s256 = scalar_lea.vmem %s3, %s255
      %s258 = smul.u32 %s21, 8
      %s259 = smul.u32 %s258, 6
      %s260 = smul.addr %s259, 4
      %s261 = scalar_lea.vmem %s227, %s260
      %v262 = vld [vmem:[%s261] sm:$0xff]
      %v263 = vld [vmem:[%s261 + $0x8] sm:$0xf]
      %v264 = vld [vmem:[%s261 + $0xc] sm:$0xff]
      %v265 = vld [vmem:[%s261 + $0x14] sm:$0xf]
      %v266 = vld [vmem:[%s261 + $0x18] sm:$0xff]
      %v267 = vld [vmem:[%s261 + $0x20] sm:$0xf]
      %v268 = vld [vmem:[%s261 + $0x24] sm:$0xff]
      %v269 = vld [vmem:[%s261 + $0x2c] sm:$0xf]
      %v270 = vld [vmem:[%s261 + $0x30] sm:$0xff]
      %v271 = vld [vmem:[%s261 + $0x38] sm:$0xf]
      %v272 = vld [vmem:[%s261 + $0x3c] sm:$0xff]
      %v273 = vld [vmem:[%s261 + $0x44] sm:$0xf]
      %v274 = vld [vmem:[%s261 + $0x48] sm:$0xff]
      %v275 = vld [vmem:[%s261 + $0x50] sm:$0xf]
      %v276 = vld [vmem:[%s261 + $0x54] sm:$0xff]
      %v277 = vld [vmem:[%s261 + $0x5c] sm:$0xf]
      %v278 = vld [vmem:[%s261 + $0x60] sm:$0xff]
      %v279 = vld [vmem:[%s261 + $0x68] sm:$0xf]
      %v280 = vld [vmem:[%s261 + $0x6c] sm:$0xff]
      %v281 = vld [vmem:[%s261 + $0x74] sm:$0xf]
      %v282 = vld [vmem:[%s261 + $0x78] sm:$0xff]
      %v283 = vld [vmem:[%s261 + $0x80] sm:$0xf]
      %v284 = vld [vmem:[%s261 + $0x84] sm:$0xff]
      %v285 = vld [vmem:[%s261 + $0x8c] sm:$0xf]
      %v286 = vld [vmem:[%s261 + $0x90] sm:$0xff]
      %v287 = vld [vmem:[%s261 + $0x98] sm:$0xf]
      %v288 = vld [vmem:[%s261 + $0x9c] sm:$0xff]
      %v289 = vld [vmem:[%s261 + $0xa4] sm:$0xf]
      %v290 = vld [vmem:[%s261 + $0xa8] sm:$0xff]
      %v291 = vld [vmem:[%s261 + $0xb0] sm:$0xf]
      %v292 = vld [vmem:[%s261 + $0xb4] sm:$0xff]
      %v293 = vld [vmem:[%s261 + $0xbc] sm:$0xf]
      %v294 = vld [vmem:[%s231] sm:$0xf]
      %v295 = vld [vmem:[%s231 + $0x4] sm:$0xf]
      %v296 = vld [vmem:[%s231 + $0x8] sm:$0xf]
      %v297 = vld [vmem:[%s231 + $0xc] sm:$0xf]
      %v298 = vld [vmem:[%s231 + $0x10] sm:$0xf]
      %v299 = vld [vmem:[%s231 + $0x14] sm:$0xf]
      %v300 = vld [vmem:[%s231 + $0x18] sm:$0xf]
      %v301 = vld [vmem:[%s231 + $0x1c] sm:$0xf]
      %v302 = vld [vmem:[%s231 + $0x20] sm:$0xf]
      %v303 = vld [vmem:[%s231 + $0x24] sm:$0xf]
      %v304 = vld [vmem:[%s231 + $0x28] sm:$0xf]
      %v305 = vld [vmem:[%s231 + $0x2c] sm:$0xf]
      %v306 = vld [vmem:[%s231 + $0x30] sm:$0xf]
      %v307 = vld [vmem:[%s231 + $0x34] sm:$0xf]
      %v308 = vld [vmem:[%s231 + $0x38] sm:$0xf]
      %v309 = vld [vmem:[%s231 + $0x3c] sm:$0xf]
      %v310 = vld [vmem:[%s231 + $0x40] sm:$0xf]
      %v311 = vld [vmem:[%s231 + $0x44] sm:$0xf]
      %v312 = vld [vmem:[%s231 + $0x48] sm:$0xf]
      %v313 = vld [vmem:[%s231 + $0x4c] sm:$0xf]
      %v314 = vld [vmem:[%s231 + $0x50] sm:$0xf]
      %v315 = vld [vmem:[%s231 + $0x54] sm:$0xf]
      %v316 = vld [vmem:[%s231 + $0x58] sm:$0xf]
      %v317 = vld [vmem:[%s231 + $0x5c] sm:$0xf]
      %v318 = vld [vmem:[%s231 + $0x60] sm:$0xf]
      %v319 = vld [vmem:[%s231 + $0x64] sm:$0xf]
      %v320 = vld [vmem:[%s231 + $0x68] sm:$0xf]
      %v321 = vld [vmem:[%s231 + $0x6c] sm:$0xf]
      %v322 = vld [vmem:[%s231 + $0x70] sm:$0xf]
      %v323 = vld [vmem:[%s231 + $0x74] sm:$0xf]
      %v324 = vld [vmem:[%s231 + $0x78] sm:$0xf]
      %v325 = vld [vmem:[%s231 + $0x7c] sm:$0xf]
      %v326 = vld [vmem:[%s231 + $0x80] sm:$0xf]
      %v327 = vld [vmem:[%s231 + $0x84] sm:$0xf]
      %v328 = vld [vmem:[%s231 + $0x88] sm:$0xf]
      %v329 = vld [vmem:[%s231 + $0x8c] sm:$0xf]
      %v330 = vld [vmem:[%s231 + $0x90] sm:$0xf]
      %v331 = vld [vmem:[%s231 + $0x94] sm:$0xf]
      %v332 = vld [vmem:[%s231 + $0x98] sm:$0xf]
      %v333 = vld [vmem:[%s231 + $0x9c] sm:$0xf]
      %v334 = vld [vmem:[%s231 + $0xa0] sm:$0xf]
      %v335 = vld [vmem:[%s231 + $0xa4] sm:$0xf]
      %v336 = vld [vmem:[%s231 + $0xa8] sm:$0xf]
      %v337 = vld [vmem:[%s231 + $0xac] sm:$0xf]
      %v338 = vld [vmem:[%s231 + $0xb0] sm:$0xf]
      %v339 = vld [vmem:[%s231 + $0xb4] sm:$0xf]
      %v340 = vld [vmem:[%s231 + $0xb8] sm:$0xf]
      %v341 = vld [vmem:[%s231 + $0xbc] sm:$0xf]
      %s342 = sadd.s32 %s258, 3
      %s343 = smul.u32 %s342, 6
      %s344 = smul.addr %s343, 4
      %s345 = scalar_lea.vmem %s227, %s344
      %v346 = vld [vmem:[%s345] sm:$0xff]
      %v347 = vld [vmem:[%s345 + $0x8] sm:$0xf]
      %v348 = vld [vmem:[%s345 + $0xc] sm:$0xff]
      %v349 = vld [vmem:[%s345 + $0x14] sm:$0xf]
      %v350 = vld [vmem:[%s345 + $0x18] sm:$0xff]
      %v351 = vld [vmem:[%s345 + $0x20] sm:$0xf]
      %v352 = vld [vmem:[%s345 + $0x24] sm:$0xff]
      %v353 = vld [vmem:[%s345 + $0x2c] sm:$0xf]
      %v354 = vld [vmem:[%s345 + $0x30] sm:$0xff]
      %v355 = vld [vmem:[%s345 + $0x38] sm:$0xf]
      %v356 = vld [vmem:[%s345 + $0x3c] sm:$0xff]
      %v357 = vld [vmem:[%s345 + $0x44] sm:$0xf]
      %v358 = vld [vmem:[%s345 + $0x48] sm:$0xff]
      %v359 = vld [vmem:[%s345 + $0x50] sm:$0xf]
      %v360 = vld [vmem:[%s345 + $0x54] sm:$0xff]
      %v361 = vld [vmem:[%s345 + $0x5c] sm:$0xf]
      %v362 = vld [vmem:[%s345 + $0x60] sm:$0xff]
      %v363 = vld [vmem:[%s345 + $0x68] sm:$0xf]
      %v364 = vld [vmem:[%s345 + $0x6c] sm:$0xff]
      %v365 = vld [vmem:[%s345 + $0x74] sm:$0xf]
      %v366 = vld [vmem:[%s345 + $0x78] sm:$0xff]
      %v367 = vld [vmem:[%s345 + $0x80] sm:$0xf]
      %v368 = vld [vmem:[%s345 + $0x84] sm:$0xff]
      %v369 = vld [vmem:[%s345 + $0x8c] sm:$0xf]
      %v370 = vld [vmem:[%s345 + $0x90] sm:$0xff]
      %v371 = vld [vmem:[%s345 + $0x98] sm:$0xf]
      %v372 = vld [vmem:[%s345 + $0x9c] sm:$0xff]
      %v373 = vld [vmem:[%s345 + $0xa4] sm:$0xf]
      %v374 = vld [vmem:[%s345 + $0xa8] sm:$0xff]
      %v375 = vld [vmem:[%s345 + $0xb0] sm:$0xf]
      %v376 = vld [vmem:[%s345 + $0xb4] sm:$0xff]
      %v377 = vld [vmem:[%s345 + $0xbc] sm:$0xf]
      %s378 = scalar_lea.vmem %s231, 192
      %v379 = vld [vmem:[%s378] sm:$0xf]
      %v380 = vld [vmem:[%s378 + $0x4] sm:$0xf]
      %v381 = vld [vmem:[%s378 + $0x8] sm:$0xf]
      %v382 = vld [vmem:[%s378 + $0xc] sm:$0xf]
      %v383 = vld [vmem:[%s378 + $0x10] sm:$0xf]
      %v384 = vld [vmem:[%s378 + $0x14] sm:$0xf]
      %v385 = vld [vmem:[%s378 + $0x18] sm:$0xf]
      %v386 = vld [vmem:[%s378 + $0x1c] sm:$0xf]
      %v387 = vld [vmem:[%s378 + $0x20] sm:$0xf]
      %v388 = vld [vmem:[%s378 + $0x24] sm:$0xf]
      %v389 = vld [vmem:[%s378 + $0x28] sm:$0xf]
      %v390 = vld [vmem:[%s378 + $0x2c] sm:$0xf]
      %v391 = vld [vmem:[%s378 + $0x30] sm:$0xf]
      %v392 = vld [vmem:[%s378 + $0x34] sm:$0xf]
      %v393 = vld [vmem:[%s378 + $0x38] sm:$0xf]
      %v394 = vld [vmem:[%s378 + $0x3c] sm:$0xf]
      %v395 = vld [vmem:[%s378 + $0x40] sm:$0xf]
      %v396 = vld [vmem:[%s378 + $0x44] sm:$0xf]
      %v397 = vld [vmem:[%s378 + $0x48] sm:$0xf]
      %v398 = vld [vmem:[%s378 + $0x4c] sm:$0xf]
      %v399 = vld [vmem:[%s378 + $0x50] sm:$0xf]
      %v400 = vld [vmem:[%s378 + $0x54] sm:$0xf]
      %v401 = vld [vmem:[%s378 + $0x58] sm:$0xf]
      %v402 = vld [vmem:[%s378 + $0x5c] sm:$0xf]
      %v403 = vld [vmem:[%s378 + $0x60] sm:$0xf]
      %v404 = vld [vmem:[%s378 + $0x64] sm:$0xf]
      %v405 = vld [vmem:[%s378 + $0x68] sm:$0xf]
      %v406 = vld [vmem:[%s378 + $0x6c] sm:$0xf]
      %v407 = vld [vmem:[%s378 + $0x70] sm:$0xf]
      %v408 = vld [vmem:[%s378 + $0x74] sm:$0xf]
      %v409 = vld [vmem:[%s378 + $0x78] sm:$0xf]
      %v410 = vld [vmem:[%s378 + $0x7c] sm:$0xf]
      %v411 = vld [vmem:[%s378 + $0x80] sm:$0xf]
      %v412 = vld [vmem:[%s378 + $0x84] sm:$0xf]
      %v413 = vld [vmem:[%s378 + $0x88] sm:$0xf]
      %v414 = vld [vmem:[%s378 + $0x8c] sm:$0xf]
      %v415 = vld [vmem:[%s378 + $0x90] sm:$0xf]
      %v416 = vld [vmem:[%s378 + $0x94] sm:$0xf]
      %v417 = vld [vmem:[%s378 + $0x98] sm:$0xf]
      %v418 = vld [vmem:[%s378 + $0x9c] sm:$0xf]
      %v419 = vld [vmem:[%s378 + $0xa0] sm:$0xf]
      %v420 = vld [vmem:[%s378 + $0xa4] sm:$0xf]
      %v421 = vld [vmem:[%s378 + $0xa8] sm:$0xf]
      %v422 = vld [vmem:[%s378 + $0xac] sm:$0xf]
      %v423 = vld [vmem:[%s378 + $0xb0] sm:$0xf]
      %v424 = vld [vmem:[%s378 + $0xb4] sm:$0xf]
      %v425 = vld [vmem:[%s378 + $0xb8] sm:$0xf]
      %v426 = vld [vmem:[%s378 + $0xbc] sm:$0xf]
      %v459 = vunpack.c.l.b16 %v346
      %v460 = vunpack.c.h.b16 %v346
      %v461 = vunpack.c.l.b16 %v347
      %v462 = vunpack.c.l.b16 %v348
      %v463 = vunpack.c.h.b16 %v348
      %v464 = vunpack.c.l.b16 %v349
      %v465 = vunpack.c.l.b16 %v350
      %v466 = vunpack.c.h.b16 %v350
      %v467 = vunpack.c.l.b16 %v351
      %v468 = vunpack.c.l.b16 %v352
      %v469 = vunpack.c.h.b16 %v352
      %v470 = vunpack.c.l.b16 %v353
      %v471 = vunpack.c.l.b16 %v354
      %v472 = vunpack.c.h.b16 %v354
      %v473 = vunpack.c.l.b16 %v355
      %v474 = vunpack.c.l.b16 %v356
      %v475 = vunpack.c.h.b16 %v356
      %v476 = vunpack.c.l.b16 %v357
      %v477 = vunpack.c.l.b16 %v358
      %v478 = vunpack.c.h.b16 %v358
      %v479 = vunpack.c.l.b16 %v359
      %v480 = vunpack.c.l.b16 %v360
      %v481 = vunpack.c.h.b16 %v360
      %v482 = vunpack.c.l.b16 %v361
      %v483 = vunpack.c.l.b16 %v362
      %v484 = vunpack.c.h.b16 %v362
      %v485 = vunpack.c.l.b16 %v363
      %v486 = vunpack.c.l.b16 %v364
      %v487 = vunpack.c.h.b16 %v364
      %v488 = vunpack.c.l.b16 %v365
      %v489 = vunpack.c.l.b16 %v366
      %v490 = vunpack.c.h.b16 %v366
      %v491 = vunpack.c.l.b16 %v367
      %v492 = vunpack.c.l.b16 %v368
      %v493 = vunpack.c.h.b16 %v368
      %v494 = vunpack.c.l.b16 %v369
      %v495 = vunpack.c.l.b16 %v370
      %v496 = vunpack.c.h.b16 %v370
      %v497 = vunpack.c.l.b16 %v371
      %v498 = vunpack.c.l.b16 %v372
      %v499 = vunpack.c.h.b16 %v372
      %v500 = vunpack.c.l.b16 %v373
      %v501 = vunpack.c.l.b16 %v374
      %v502 = vunpack.c.h.b16 %v374
      %v503 = vunpack.c.l.b16 %v375
      %v504 = vunpack.c.l.b16 %v376
      %v505 = vunpack.c.h.b16 %v376
      %v506 = vunpack.c.l.b16 %v377
      %v507 = vpack.c.b16 %v462, %v459
      %v508 = vpack.c.b16 %v463, %v460
      %v509 = vpack.c.b16 %v464, %v461
      %v510 = vpack.c.b16 %v468, %v465
      %v511 = vpack.c.b16 %v469, %v466
      %v512 = vpack.c.b16 %v470, %v467
      %v513 = vpack.c.b16 %v474, %v471
      %v514 = vpack.c.b16 %v475, %v472
      %v515 = vpack.c.b16 %v476, %v473
      %v516 = vpack.c.b16 %v480, %v477
      %v517 = vpack.c.b16 %v481, %v478
      %v518 = vpack.c.b16 %v482, %v479
      %v519 = vpack.c.b16 %v486, %v483
      %v520 = vpack.c.b16 %v487, %v484
      %v521 = vpack.c.b16 %v488, %v485
      %v522 = vpack.c.b16 %v492, %v489
      %v523 = vpack.c.b16 %v493, %v490
      %v524 = vpack.c.b16 %v494, %v491
      %v525 = vpack.c.b16 %v498, %v495
      %v526 = vpack.c.b16 %v499, %v496
      %v527 = vpack.c.b16 %v500, %v497
      %v528 = vpack.c.b16 %v504, %v501
      %v529 = vpack.c.b16 %v505, %v502
      %v530 = vpack.c.b16 %v506, %v503
      %v603 = vunpack.c.l.b16 %v379
      %v604 = vunpack.c.l.b16 %v380
      %v605 = vunpack.c.l.b16 %v381
      %v606 = vunpack.c.l.b16 %v382
      %v607 = vunpack.c.l.b16 %v383
      %v608 = vunpack.c.l.b16 %v384
      %v609 = vunpack.c.l.b16 %v385
      %v610 = vunpack.c.l.b16 %v386
      %v611 = vunpack.c.l.b16 %v387
      %v612 = vunpack.c.l.b16 %v388
      %v613 = vunpack.c.l.b16 %v389
      %v614 = vunpack.c.l.b16 %v390
      %v615 = vunpack.c.l.b16 %v391
      %v616 = vunpack.c.l.b16 %v392
      %v617 = vunpack.c.l.b16 %v393
      %v618 = vunpack.c.l.b16 %v394
      %v619 = vunpack.c.l.b16 %v395
      %v620 = vunpack.c.l.b16 %v396
      %v621 = vunpack.c.l.b16 %v397
      %v622 = vunpack.c.l.b16 %v398
      %v623 = vunpack.c.l.b16 %v399
      %v624 = vunpack.c.l.b16 %v400
      %v625 = vunpack.c.l.b16 %v401
      %v626 = vunpack.c.l.b16 %v402
      %v627 = vunpack.c.l.b16 %v403
      %v628 = vunpack.c.l.b16 %v404
      %v629 = vunpack.c.l.b16 %v405
      %v630 = vunpack.c.l.b16 %v406
      %v631 = vunpack.c.l.b16 %v407
      %v632 = vunpack.c.l.b16 %v408
      %v633 = vunpack.c.l.b16 %v409
      %v634 = vunpack.c.l.b16 %v410
      %v635 = vunpack.c.l.b16 %v411
      %v636 = vunpack.c.l.b16 %v412
      %v637 = vunpack.c.l.b16 %v413
      %v638 = vunpack.c.l.b16 %v414
      %v639 = vunpack.c.l.b16 %v415
      %v640 = vunpack.c.l.b16 %v416
      %v641 = vunpack.c.l.b16 %v417
      %v642 = vunpack.c.l.b16 %v418
      %v643 = vunpack.c.l.b16 %v419
      %v644 = vunpack.c.l.b16 %v420
      %v645 = vunpack.c.l.b16 %v421
      %v646 = vunpack.c.l.b16 %v422
      %v647 = vunpack.c.l.b16 %v423
      %v648 = vunpack.c.l.b16 %v424
      %v649 = vunpack.c.l.b16 %v425
      %v650 = vunpack.c.l.b16 %v426
      %v651 = vpack.c.b16 %v604, %v603
      %v652 = vpack.c.b16 %v606, %v605
      %v653 = vpack.c.b16 %v608, %v607
      %v654 = vpack.c.b16 %v610, %v609
      %v655 = vpack.c.b16 %v612, %v611
      %v656 = vpack.c.b16 %v614, %v613
      %v657 = vpack.c.b16 %v616, %v615
      %v658 = vpack.c.b16 %v618, %v617
      %v659 = vpack.c.b16 %v620, %v619
      %v660 = vpack.c.b16 %v622, %v621
      %v661 = vpack.c.b16 %v624, %v623
      %v662 = vpack.c.b16 %v626, %v625
      %v663 = vpack.c.b16 %v628, %v627
      %v664 = vpack.c.b16 %v630, %v629
      %v665 = vpack.c.b16 %v632, %v631
      %v666 = vpack.c.b16 %v634, %v633
      %v667 = vpack.c.b16 %v636, %v635
      %v668 = vpack.c.b16 %v638, %v637
      %v669 = vpack.c.b16 %v640, %v639
      %v670 = vpack.c.b16 %v642, %v641
      %v671 = vpack.c.b16 %v644, %v643
      %v672 = vpack.c.b16 %v646, %v645
      %v673 = vpack.c.b16 %v648, %v647
      %v674 = vpack.c.b16 %v650, %v649
      %699 = vmatprep.subr.bf16.mxu0 0
      %700 = vmatpush1.bf16.msra.mxu0 %v651
      %701 = vmatprep.subr.bf16.mxu0 0
      %702 = vmatpush1.bf16.msra.mxu0 %v652
      %703 = vmatprep.subr.bf16.mxu0 0
      %704 = vmatpush1.bf16.msra.mxu0 %v653
      %705 = vmatprep.subr.bf16.mxu0 0
      %706 = vmatpush1.bf16.msra.mxu0 %v654
      %707 = vmatprep.subr.bf16.mxu0 0
      %708 = vmatpush1.bf16.msra.mxu0 %v655
      %709 = vmatprep.subr.bf16.mxu0 0
      %710 = vmatpush1.bf16.msra.mxu0 %v656
      %711 = vmatprep.subr.bf16.mxu0 0
      %712 = vmatpush1.bf16.msra.mxu0 %v657
      %713 = vmatprep.subr.bf16.mxu0 0
      %714 = vmatpush1.bf16.msra.mxu0 %v658
      %715 = vmatprep.subr.bf16.mxu0 0
      %716 = vmatpush1.bf16.msra.mxu0 %v659
      %717 = vmatprep.subr.bf16.mxu0 0
      %718 = vmatpush1.bf16.msra.mxu0 %v660
      %719 = vmatprep.subr.bf16.mxu0 0
      %720 = vmatpush1.bf16.msra.mxu0 %v661
      %721 = vmatprep.subr.bf16.mxu0 0
      %722 = vmatpush1.bf16.msra.mxu0 %v662
      %723 = vmatprep.subr.bf16.mxu0 0
      %724 = vmatpush1.bf16.msra.mxu0 %v663
      %725 = vmatprep.subr.bf16.mxu0 0
      %726 = vmatpush1.bf16.msra.mxu0 %v664
      %727 = vmatprep.subr.bf16.mxu0 0
      %728 = vmatpush1.bf16.msra.mxu0 %v665
      %729 = vmatprep.subr.bf16.mxu0 0
      %730 = vmatpush1.bf16.msra.mxu0 %v666
      %731 = vmatprep.mubr.bf16.mxu0 %v508
      %732 = vmatmul.mubr.bf16.gmra.mrb[0].mxu0 %v507
      %v733 = vpop.f32.mrb[0].mxu0
      %v734 = vadd.f32 0.0, %v733
      %v735 = vpop.f32.mrb[0].mxu0
      %v736 = vpop.f32.mrb[0].mxu0
      %v737 = vadd.f32 0.0, %v736
      %v738 = vpop.f32.mrb[0].mxu0
      %739 = vmatprep.mubr.bf16.mxu0 %v511
      %740 = vmatmul.mubr.bf16.gmra.mrb[0].mxu0 %v510
      %v741 = vpop.f32.mrb[0].mxu0
      %v742 = vadd.f32 0.0, %v741
      %v743 = vpop.f32.mrb[0].mxu0
      %v744 = vpop.f32.mrb[0].mxu0
      %v745 = vadd.f32 0.0, %v744
      %v746 = vpop.f32.mrb[0].mxu0
      %747 = vmatprep.mubr.bf16.mxu0 %v514
      %748 = vmatmul.mubr.bf16.gmra.mrb[0].mxu0 %v513
      %v749 = vpop.f32.mrb[0].mxu0
      %v750 = vadd.f32 0.0, %v749
      %v751 = vpop.f32.mrb[0].mxu0
      %v752 = vpop.f32.mrb[0].mxu0
      %v753 = vadd.f32 0.0, %v752
      %v754 = vpop.f32.mrb[0].mxu0
      %755 = vmatprep.mubr.bf16.mxu0 %v517
      %756 = vmatmul.mubr.bf16.gmra.mrb[0].mxu0 %v516
      %v757 = vpop.f32.mrb[0].mxu0
      %v758 = vadd.f32 0.0, %v757
      %v759 = vpop.f32.mrb[0].mxu0
      %v760 = vpop.f32.mrb[0].mxu0
      %v761 = vadd.f32 0.0, %v760
      %v762 = vpop.f32.mrb[0].mxu0
      %763 = vmatprep.mubr.bf16.mxu0 %v520
      %764 = vmatmul.mubr.bf16.gmra.mrb[0].mxu0 %v519
      %v765 = vpop.f32.mrb[0].mxu0
      %v766 = vadd.f32 0.0, %v765
      %v767 = vpop.f32.mrb[0].mxu0
      %v768 = vpop.f32.mrb[0].mxu0
      %v769 = vadd.f32 0.0, %v768
      %v770 = vpop.f32.mrb[0].mxu0
      %771 = vmatprep.mubr.bf16.mxu0 %v523
      %772 = vmatmul.mubr.bf16.gmra.mrb[0].mxu0 %v522
      %v773 = vpop.f32.mrb[0].mxu0
      %v774 = vadd.f32 0.0, %v773
      %v775 = vpop.f32.mrb[0].mxu0
      %v776 = vpop.f32.mrb[0].mxu0
      %v777 = vadd.f32 0.0, %v776
      %v778 = vpop.f32.mrb[0].mxu0
      %779 = vmatprep.mubr.bf16.mxu0 %v526
      %780 = vmatmul.mubr.bf16.gmra.mrb[0].mxu0 %v525
      %v781 = vpop.f32.mrb[0].mxu0
      %v782 = vadd.f32 0.0, %v781
      %v783 = vpop.f32.mrb[0].mxu0
      %v784 = vpop.f32.mrb[0].mxu0
      %v785 = vadd.f32 0.0, %v784
      %v786 = vpop.f32.mrb[0].mxu0
      %787 = vmatprep.mubr.bf16.mxu0 %v529
      %788 = vmatmul.mubr.bf16.gmra.mrb[0].mxu0 %v528
      %v789 = vpop.f32.mrb[0].mxu0
      %v790 = vadd.f32 0.0, %v789
      %v791 = vpop.f32.mrb[0].mxu0
      %v792 = vpop.f32.mrb[0].mxu0
      %v793 = vadd.f32 0.0, %v792
      %v794 = vpop.f32.mrb[0].mxu0
      %795 = vdwg.mxu0
      %796 = vmatprep.subr.bf16.mxu0 0
      %797 = vmatpush1.bf16.msra.mxu0 %v667
      %798 = vmatprep.subr.bf16.mxu0 0
      %799 = vmatpush1.bf16.msra.mxu0 %v668
      %800 = vmatprep.subr.bf16.mxu0 0
      %801 = vmatpush1.bf16.msra.mxu0 %v669
      %802 = vmatprep.subr.bf16.mxu0 0
      %803 = vmatpush1.bf16.msra.mxu0 %v670
      %804 = vmatprep.subr.bf16.mxu0 0
      %805 = vmatpush1.bf16.msra.mxu0 %v671
      %806 = vmatprep.subr.bf16.mxu0 0
      %807 = vmatpush1.bf16.msra.mxu0 %v672
      %808 = vmatprep.subr.bf16.mxu0 0
      %809 = vmatpush1.bf16.msra.mxu0 %v673
      %810 = vmatprep.subr.bf16.mxu0 0
      %811 = vmatpush1.bf16.msra.mxu0 %v674
      %812 = vmatprep.subr.bf16.mxu0 0
      %813 = vmatpush1.bf16.msra.mxu0 0
      %814 = vmatprep.subr.bf16.mxu0 0
      %815 = vmatpush1.bf16.msra.mxu0 0
      %816 = vmatprep.subr.bf16.mxu0 0
      %817 = vmatpush1.bf16.msra.mxu0 0
      %818 = vmatprep.subr.bf16.mxu0 0
      %819 = vmatpush1.bf16.msra.mxu0 0
      %820 = vmatprep.subr.bf16.mxu0 0
      %821 = vmatpush1.bf16.msra.mxu0 0
      %822 = vmatprep.subr.bf16.mxu0 0
      %823 = vmatpush1.bf16.msra.mxu0 0
      %824 = vmatprep.subr.bf16.mxu0 0
      %825 = vmatpush1.bf16.msra.mxu0 0
      %826 = vmatprep.subr.bf16.mxu0 0
      %827 = vmatpush1.bf16.msra.mxu0 0
      %828 = vmatprep.mubr.bf16.mxu0 0
      %829 = vmatmul.mubr.bf16.gmra.mrb[0].mxu0 %v509
      %v830 = vpop.f32.mrb[0].mxu0
      %v831 = vadd.f32 %v734, %v830
      %v832 = vpop.f32.mrb[0].mxu0
      %v833 = vpop.f32.mrb[0].mxu0
      %v834 = vadd.f32 %v737, %v833
      %v835 = vpop.f32.mrb[0].mxu0
      %836 = vmatprep.mubr.bf16.mxu0 0
      %837 = vmatmul.mubr.bf16.gmra.mrb[0].mxu0 %v512
      %v838 = vpop.f32.mrb[0].mxu0
      %v839 = vadd.f32 %v742, %v838
      %v840 = vpop.f32.mrb[0].mxu0
      %v841 = vpop.f32.mrb[0].mxu0
      %v842 = vadd.f32 %v745, %v841
      %v843 = vpop.f32.mrb[0].mxu0
      %844 = vmatprep.mubr.bf16.mxu0 0
      %845 = vmatmul.mubr.bf16.gmra.mrb[0].mxu0 %v515
      %v846 = vpop.f32.mrb[0].mxu0
      %v847 = vadd.f32 %v750, %v846
      %v848 = vpop.f32.mrb[0].mxu0
      %v849 = vpop.f32.mrb[0].mxu0
      %v850 = vadd.f32 %v753, %v849
      %v851 = vpop.f32.mrb[0].mxu0
      %852 = vmatprep.mubr.bf16.mxu0 0
      %853 = vmatmul.mubr.bf16.gmra.mrb[0].mxu0 %v518
      %v854 = vpop.f32.mrb[0].mxu0
      %v855 = vadd.f32 %v758, %v854
      %v856 = vpop.f32.mrb[0].mxu0
      %v857 = vpop.f32.mrb[0].mxu0
      %v858 = vadd.f32 %v761, %v857
      %v859 = vpop.f32.mrb[0].mxu0
      %860 = vmatprep.mubr.bf16.mxu0 0
      %861 = vmatmul.mubr.bf16.gmra.mrb[0].mxu0 %v521
      %v862 = vpop.f32.mrb[0].mxu0
      %v863 = vadd.f32 %v766, %v862
      %v864 = vpop.f32.mrb[0].mxu0
      %v865 = vpop.f32.mrb[0].mxu0
      %v866 = vadd.f32 %v769, %v865
      %v867 = vpop.f32.mrb[0].mxu0
      %868 = vmatprep.mubr.bf16.mxu0 0
      %869 = vmatmul.mubr.bf16.gmra.mrb[0].mxu0 %v524
      %v870 = vpop.f32.mrb[0].mxu0
      %v871 = vadd.f32 %v774, %v870
      %v872 = vpop.f32.mrb[0].mxu0
      %v873 = vpop.f32.mrb[0].mxu0
      %v874 = vadd.f32 %v777, %v873
      %v875 = vpop.f32.mrb[0].mxu0
      %876 = vmatprep.mubr.bf16.mxu0 0
      %877 = vmatmul.mubr.bf16.gmra.mrb[0].mxu0 %v527
      %v878 = vpop.f32.mrb[0].mxu0
      %v879 = vadd.f32 %v782, %v878
      %v880 = vpop.f32.mrb[0].mxu0
      %v881 = vpop.f32.mrb[0].mxu0
      %v882 = vadd.f32 %v785, %v881
      %v883 = vpop.f32.mrb[0].mxu0
      %884 = vmatprep.mubr.bf16.mxu0 0
      %885 = vmatmul.mubr.bf16.gmra.mrb[0].mxu0 %v530
      %v886 = vpop.f32.mrb[0].mxu0
      %v887 = vadd.f32 %v790, %v886
      %v888 = vpop.f32.mrb[0].mxu0
      %v889 = vpop.f32.mrb[0].mxu0
      %v890 = vadd.f32 %v793, %v889
      %v891 = vpop.f32.mrb[0].mxu0
      %892 = vdwg.mxu0
      %v925 = vunpack.c.l.b16 %v262
      %v926 = vunpack.c.h.b16 %v262
      %v927 = vunpack.c.l.b16 %v263
      %v928 = vunpack.c.l.b16 %v264
      %v929 = vunpack.c.h.b16 %v264
      %v930 = vunpack.c.l.b16 %v265
      %v931 = vunpack.c.l.b16 %v266
      %v932 = vunpack.c.h.b16 %v266
      %v933 = vunpack.c.l.b16 %v267
      %v934 = vunpack.c.l.b16 %v268
      %v935 = vunpack.c.h.b16 %v268
      %v936 = vunpack.c.l.b16 %v269
      %v937 = vunpack.c.l.b16 %v270
      %v938 = vunpack.c.h.b16 %v270
      %v939 = vunpack.c.l.b16 %v271
      %v940 = vunpack.c.l.b16 %v272
      %v941 = vunpack.c.h.b16 %v272
      %v942 = vunpack.c.l.b16 %v273
      %v943 = vunpack.c.l.b16 %v274
      %v944 = vunpack.c.h.b16 %v274
      %v945 = vunpack.c.l.b16 %v275
      %v946 = vunpack.c.l.b16 %v276
      %v947 = vunpack.c.h.b16 %v276
      %v948 = vunpack.c.l.b16 %v277
      %v949 = vunpack.c.l.b16 %v278
      %v950 = vunpack.c.h.b16 %v278
      %v951 = vunpack.c.l.b16 %v279
      %v952 = vunpack.c.l.b16 %v280
      %v953 = vunpack.c.h.b16 %v280
      %v954 = vunpack.c.l.b16 %v281
      %v955 = vunpack.c.l.b16 %v282
      %v956 = vunpack.c.h.b16 %v282
      %v957 = vunpack.c.l.b16 %v283
      %v958 = vunpack.c.l.b16 %v284
      %v959 = vunpack.c.h.b16 %v284
      %v960 = vunpack.c.l.b16 %v285
      %v961 = vunpack.c.l.b16 %v286
      %v962 = vunpack.c.h.b16 %v286
      %v963 = vunpack.c.l.b16 %v287
      %v964 = vunpack.c.l.b16 %v288
      %v965 = vunpack.c.h.b16 %v288
      %v966 = vunpack.c.l.b16 %v289
      %v967 = vunpack.c.l.b16 %v290
      %v968 = vunpack.c.h.b16 %v290
      %v969 = vunpack.c.l.b16 %v291
      %v970 = vunpack.c.l.b16 %v292
      %v971 = vunpack.c.h.b16 %v292
      %v972 = vunpack.c.l.b16 %v293
      %v973 = vpack.c.b16 %v928, %v925
      %v974 = vpack.c.b16 %v929, %v926
      %v975 = vpack.c.b16 %v930, %v927
      %v976 = vpack.c.b16 %v934, %v931
      %v977 = vpack.c.b16 %v935, %v932
      %v978 = vpack.c.b16 %v936, %v933
      %v979 = vpack.c.b16 %v940, %v937
      %v980 = vpack.c.b16 %v941, %v938
      %v981 = vpack.c.b16 %v942, %v939
      %v982 = vpack.c.b16 %v946, %v943
      %v983 = vpack.c.b16 %v947, %v944
      %v984 = vpack.c.b16 %v948, %v945
      %v985 = vpack.c.b16 %v952, %v949
      %v986 = vpack.c.b16 %v953, %v950
      %v987 = vpack.c.b16 %v954, %v951
      %v988 = vpack.c.b16 %v958, %v955
      %v989 = vpack.c.b16 %v959, %v956
      %v990 = vpack.c.b16 %v960, %v957
      %v991 = vpack.c.b16 %v964, %v961
      %v992 = vpack.c.b16 %v965, %v962
      %v993 = vpack.c.b16 %v966, %v963
      %v994 = vpack.c.b16 %v970, %v967
      %v995 = vpack.c.b16 %v971, %v968
      %v996 = vpack.c.b16 %v972, %v969
      %v1069 = vunpack.c.l.b16 %v294
      %v1070 = vunpack.c.l.b16 %v295
      %v1071 = vunpack.c.l.b16 %v296
      %v1072 = vunpack.c.l.b16 %v297
      %v1073 = vunpack.c.l.b16 %v298
      %v1074 = vunpack.c.l.b16 %v299
      %v1075 = vunpack.c.l.b16 %v300
      %v1076 = vunpack.c.l.b16 %v301
      %v1077 = vunpack.c.l.b16 %v302
      %v1078 = vunpack.c.l.b16 %v303
      %v1079 = vunpack.c.l.b16 %v304
      %v1080 = vunpack.c.l.b16 %v305
      %v1081 = vunpack.c.l.b16 %v306
      %v1082 = vunpack.c.l.b16 %v307
      %v1083 = vunpack.c.l.b16 %v308
      %v1084 = vunpack.c.l.b16 %v309
      %v1085 = vunpack.c.l.b16 %v310
      %v1086 = vunpack.c.l.b16 %v311
      %v1087 = vunpack.c.l.b16 %v312
      %v1088 = vunpack.c.l.b16 %v313
      %v1089 = vunpack.c.l.b16 %v314
      %v1090 = vunpack.c.l.b16 %v315
      %v1091 = vunpack.c.l.b16 %v316
      %v1092 = vunpack.c.l.b16 %v317
      %v1093 = vunpack.c.l.b16 %v318
      %v1094 = vunpack.c.l.b16 %v319
      %v1095 = vunpack.c.l.b16 %v320
      %v1096 = vunpack.c.l.b16 %v321
      %v1097 = vunpack.c.l.b16 %v322
      %v1098 = vunpack.c.l.b16 %v323
      %v1099 = vunpack.c.l.b16 %v324
      %v1100 = vunpack.c.l.b16 %v325
      %v1101 = vunpack.c.l.b16 %v326
      %v1102 = vunpack.c.l.b16 %v327
      %v1103 = vunpack.c.l.b16 %v328
      %v1104 = vunpack.c.l.b16 %v329
      %v1105 = vunpack.c.l.b16 %v330
      %v1106 = vunpack.c.l.b16 %v331
      %v1107 = vunpack.c.l.b16 %v332
      %v1108 = vunpack.c.l.b16 %v333
      %v1109 = vunpack.c.l.b16 %v334
      %v1110 = vunpack.c.l.b16 %v335
      %v1111 = vunpack.c.l.b16 %v336
      %v1112 = vunpack.c.l.b16 %v337
      %v1113 = vunpack.c.l.b16 %v338
      %v1114 = vunpack.c.l.b16 %v339
      %v1115 = vunpack.c.l.b16 %v340
      %v1116 = vunpack.c.l.b16 %v341
      %v1117 = vpack.c.b16 %v1070, %v1069
      %v1118 = vpack.c.b16 %v1072, %v1071
      %v1119 = vpack.c.b16 %v1074, %v1073
      %v1120 = vpack.c.b16 %v1076, %v1075
      %v1121 = vpack.c.b16 %v1078, %v1077
      %v1122 = vpack.c.b16 %v1080, %v1079
      %v1123 = vpack.c.b16 %v1082, %v1081
      %v1124 = vpack.c.b16 %v1084, %v1083
      %v1125 = vpack.c.b16 %v1086, %v1085
      %v1126 = vpack.c.b16 %v1088, %v1087
      %v1127 = vpack.c.b16 %v1090, %v1089
      %v1128 = vpack.c.b16 %v1092, %v1091
      %v1129 = vpack.c.b16 %v1094, %v1093
      %v1130 = vpack.c.b16 %v1096, %v1095
      %v1131 = vpack.c.b16 %v1098, %v1097
      %v1132 = vpack.c.b16 %v1100, %v1099
      %v1133 = vpack.c.b16 %v1102, %v1101
      %v1134 = vpack.c.b16 %v1104, %v1103
      %v1135 = vpack.c.b16 %v1106, %v1105
      %v1136 = vpack.c.b16 %v1108, %v1107
      %v1137 = vpack.c.b16 %v1110, %v1109
      %v1138 = vpack.c.b16 %v1112, %v1111
      %v1139 = vpack.c.b16 %v1114, %v1113
      %v1140 = vpack.c.b16 %v1116, %v1115
      %1165 = vmatprep.subr.bf16.mxu0 0
      %1166 = vmatpush1.bf16.msra.mxu0 %v1117
      %1167 = vmatprep.subr.bf16.mxu0 0
      %1168 = vmatpush1.bf16.msra.mxu0 %v1118
      %1169 = vmatprep.subr.bf16.mxu0 0
      %1170 = vmatpush1.bf16.msra.mxu0 %v1119
      %1171 = vmatprep.subr.bf16.mxu0 0
      %1172 = vmatpush1.bf16.msra.mxu0 %v1120
      %1173 = vmatprep.subr.bf16.mxu0 0
      %1174 = vmatpush1.bf16.msra.mxu0 %v1121
      %1175 = vmatprep.subr.bf16.mxu0 0
      %1176 = vmatpush1.bf16.msra.mxu0 %v1122
      %1177 = vmatprep.subr.bf16.mxu0 0
      %1178 = vmatpush1.bf16.msra.mxu0 %v1123
      %1179 = vmatprep.subr.bf16.mxu0 0
      %1180 = vmatpush1.bf16.msra.mxu0 %v1124
      %1181 = vmatprep.subr.bf16.mxu0 0
      %1182 = vmatpush1.bf16.msra.mxu0 %v1125
      %1183 = vmatprep.subr.bf16.mxu0 0
      %1184 = vmatpush1.bf16.msra.mxu0 %v1126
      %1185 = vmatprep.subr.bf16.mxu0 0
      %1186 = vmatpush1.bf16.msra.mxu0 %v1127
      %1187 = vmatprep.subr.bf16.mxu0 0
      %1188 = vmatpush1.bf16.msra.mxu0 %v1128
      %1189 = vmatprep.subr.bf16.mxu0 0
      %1190 = vmatpush1.bf16.msra.mxu0 %v1129
      %1191 = vmatprep.subr.bf16.mxu0 0
      %1192 = vmatpush1.bf16.msra.mxu0 %v1130
      %1193 = vmatprep.subr.bf16.mxu0 0
      %1194 = vmatpush1.bf16.msra.mxu0 %v1131
      %1195 = vmatprep.subr.bf16.mxu0 0
      %1196 = vmatpush1.bf16.msra.mxu0 %v1132
      %1197 = vmatprep.mubr.bf16.mxu0 %v974
      %1198 = vmatmul.mubr.bf16.gmra.mrb[0].mxu0 %v973
      %v1199 = vpop.f32.mrb[0].mxu0
      %v1200 = vadd.f32 %v831, %v1199
      %v1201 = vpop.f32.mrb[0].mxu0
      %v1202 = vpop.f32.mrb[0].mxu0
      %v1203 = vadd.f32 %v834, %v1202
      %v1204 = vpop.f32.mrb[0].mxu0
      %1205 = vmatprep.mubr.bf16.mxu0 %v977
      %1206 = vmatmul.mubr.bf16.gmra.mrb[0].mxu0 %v976
      %v1207 = vpop.f32.mrb[0].mxu0
      %v1208 = vadd.f32 %v839, %v1207
      %v1209 = vpop.f32.mrb[0].mxu0
      %v1210 = vpop.f32.mrb[0].mxu0
      %v1211 = vadd.f32 %v842, %v1210
      %v1212 = vpop.f32.mrb[0].mxu0
      %1213 = vmatprep.mubr.bf16.mxu0 %v980
      %1214 = vmatmul.mubr.bf16.gmra.mrb[0].mxu0 %v979
      %v1215 = vpop.f32.mrb[0].mxu0
      %v1216 = vadd.f32 %v847, %v1215
      %v1217 = vpop.f32.mrb[0].mxu0
      %v1218 = vpop.f32.mrb[0].mxu0
      %v1219 = vadd.f32 %v850, %v1218
      %v1220 = vpop.f32.mrb[0].mxu0
      %1221 = vmatprep.mubr.bf16.mxu0 %v983
      %1222 = vmatmul.mubr.bf16.gmra.mrb[0].mxu0 %v982
      %v1223 = vpop.f32.mrb[0].mxu0
      %v1224 = vadd.f32 %v855, %v1223
      %v1225 = vpop.f32.mrb[0].mxu0
      %v1226 = vpop.f32.mrb[0].mxu0
      %v1227 = vadd.f32 %v858, %v1226
      %v1228 = vpop.f32.mrb[0].mxu0
      %1229 = vmatprep.mubr.bf16.mxu0 %v986
      %1230 = vmatmul.mubr.bf16.gmra.mrb[0].mxu0 %v985
      %v1231 = vpop.f32.mrb[0].mxu0
      %v1232 = vadd.f32 %v863, %v1231
      %v1233 = vpop.f32.mrb[0].mxu0
      %v1234 = vpop.f32.mrb[0].mxu0
      %v1235 = vadd.f32 %v866, %v1234
      %v1236 = vpop.f32.mrb[0].mxu0
      %1237 = vmatprep.mubr.bf16.mxu0 %v989
      %1238 = vmatmul.mubr.bf16.gmra.mrb[0].mxu0 %v988
      %v1239 = vpop.f32.mrb[0].mxu0
      %v1240 = vadd.f32 %v871, %v1239
      %v1241 = vpop.f32.mrb[0].mxu0
      %v1242 = vpop.f32.mrb[0].mxu0
      %v1243 = vadd.f32 %v874, %v1242
      %v1244 = vpop.f32.mrb[0].mxu0
      %1245 = vmatprep.mubr.bf16.mxu0 %v992
      %1246 = vmatmul.mubr.bf16.gmra.mrb[0].mxu0 %v991
      %v1247 = vpop.f32.mrb[0].mxu0
      %v1248 = vadd.f32 %v879, %v1247
      %v1249 = vpop.f32.mrb[0].mxu0
      %v1250 = vpop.f32.mrb[0].mxu0
      %v1251 = vadd.f32 %v882, %v1250
      %v1252 = vpop.f32.mrb[0].mxu0
      %1253 = vmatprep.mubr.bf16.mxu0 %v995
      %1254 = vmatmul.mubr.bf16.gmra.mrb[0].mxu0 %v994
      %v1255 = vpop.f32.mrb[0].mxu0
      %v1256 = vadd.f32 %v887, %v1255
      %v1257 = vpop.f32.mrb[0].mxu0
      %v1258 = vpop.f32.mrb[0].mxu0
      %v1259 = vadd.f32 %v890, %v1258
      %v1260 = vpop.f32.mrb[0].mxu0
      %1261 = vdwg.mxu0
      %1262 = vmatprep.subr.bf16.mxu0 0
      %1263 = vmatpush1.bf16.msra.mxu0 %v1133
      %1264 = vmatprep.subr.bf16.mxu0 0
      %1265 = vmatpush1.bf16.msra.mxu0 %v1134
      %1266 = vmatprep.subr.bf16.mxu0 0
      %1267 = vmatpush1.bf16.msra.mxu0 %v1135
      %1268 = vmatprep.subr.bf16.mxu0 0
      %1269 = vmatpush1.bf16.msra.mxu0 %v1136
      %1270 = vmatprep.subr.bf16.mxu0 0
      %1271 = vmatpush1.bf16.msra.mxu0 %v1137
      %1272 = vmatprep.subr.bf16.mxu0 0
      %1273 = vmatpush1.bf16.msra.mxu0 %v1138
      %1274 = vmatprep.subr.bf16.mxu0 0
      %1275 = vmatpush1.bf16.msra.mxu0 %v1139
      %1276 = vmatprep.subr.bf16.mxu0 0
      %1277 = vmatpush1.bf16.msra.mxu0 %v1140
      %1278 = vmatprep.subr.bf16.mxu0 0
      %1279 = vmatpush1.bf16.msra.mxu0 0
      %1280 = vmatprep.subr.bf16.mxu0 0
      %1281 = vmatpush1.bf16.msra.mxu0 0
      %1282 = vmatprep.subr.bf16.mxu0 0
      %1283 = vmatpush1.bf16.msra.mxu0 0
      %1284 = vmatprep.subr.bf16.mxu0 0
      %1285 = vmatpush1.bf16.msra.mxu0 0
      %1286 = vmatprep.subr.bf16.mxu0 0
      %1287 = vmatpush1.bf16.msra.mxu0 0
      %1288 = vmatprep.subr.bf16.mxu0 0
      %1289 = vmatpush1.bf16.msra.mxu0 0
      %1290 = vmatprep.subr.bf16.mxu0 0
      %1291 = vmatpush1.bf16.msra.mxu0 0
      %1292 = vmatprep.subr.bf16.mxu0 0
      %1293 = vmatpush1.bf16.msra.mxu0 0
      %1294 = vmatprep.mubr.bf16.mxu0 0
      %1295 = vmatmul.mubr.bf16.gmra.mrb[0].mxu0 %v975
      %v1296 = vpop.f32.mrb[0].mxu0
      %v1297 = vadd.f32 %v1200, %v1296
      %v1298 = vpop.f32.mrb[0].mxu0
      %v1299 = vpop.f32.mrb[0].mxu0
      %v1300 = vadd.f32 %v1203, %v1299
      %v1301 = vpop.f32.mrb[0].mxu0
      %1302 = vmatprep.mubr.bf16.mxu0 0
      %1303 = vmatmul.mubr.bf16.gmra.mrb[0].mxu0 %v978
      %v1304 = vpop.f32.mrb[0].mxu0
      %v1305 = vadd.f32 %v1208, %v1304
      %v1306 = vpop.f32.mrb[0].mxu0
      %v1307 = vpop.f32.mrb[0].mxu0
      %v1308 = vadd.f32 %v1211, %v1307
      %v1309 = vpop.f32.mrb[0].mxu0
      %1310 = vmatprep.mubr.bf16.mxu0 0
      %1311 = vmatmul.mubr.bf16.gmra.mrb[0].mxu0 %v981
      %v1312 = vpop.f32.mrb[0].mxu0
      %v1313 = vadd.f32 %v1216, %v1312
      %v1314 = vpop.f32.mrb[0].mxu0
      %v1315 = vpop.f32.mrb[0].mxu0
      %v1316 = vadd.f32 %v1219, %v1315
      %v1317 = vpop.f32.mrb[0].mxu0
      %1318 = vmatprep.mubr.bf16.mxu0 0
      %1319 = vmatmul.mubr.bf16.gmra.mrb[0].mxu0 %v984
      %v1320 = vpop.f32.mrb[0].mxu0
      %v1321 = vadd.f32 %v1224, %v1320
      %v1322 = vpop.f32.mrb[0].mxu0
      %v1323 = vpop.f32.mrb[0].mxu0
      %v1324 = vadd.f32 %v1227, %v1323
      %v1325 = vpop.f32.mrb[0].mxu0
      %1326 = vmatprep.mubr.bf16.mxu0 0
      %1327 = vmatmul.mubr.bf16.gmra.mrb[0].mxu0 %v987
      %v1328 = vpop.f32.mrb[0].mxu0
      %v1329 = vadd.f32 %v1232, %v1328
      %v1330 = vpop.f32.mrb[0].mxu0
      %v1331 = vpop.f32.mrb[0].mxu0
      %v1332 = vadd.f32 %v1235, %v1331
      %v1333 = vpop.f32.mrb[0].mxu0
      %1334 = vmatprep.mubr.bf16.mxu0 0
      %1335 = vmatmul.mubr.bf16.gmra.mrb[0].mxu0 %v990
      %v1336 = vpop.f32.mrb[0].mxu0
      %v1337 = vadd.f32 %v1240, %v1336
      %v1338 = vpop.f32.mrb[0].mxu0
      %v1339 = vpop.f32.mrb[0].mxu0
      %v1340 = vadd.f32 %v1243, %v1339
      %v1341 = vpop.f32.mrb[0].mxu0
      %1342 = vmatprep.mubr.bf16.mxu0 0
      %1343 = vmatmul.mubr.bf16.gmra.mrb[0].mxu0 %v993
      %v1344 = vpop.f32.mrb[0].mxu0
      %v1345 = vadd.f32 %v1248, %v1344
      %v1346 = vpop.f32.mrb[0].mxu0
      %v1347 = vpop.f32.mrb[0].mxu0
      %v1348 = vadd.f32 %v1251, %v1347
      %v1349 = vpop.f32.mrb[0].mxu0
      %1350 = vmatprep.mubr.bf16.mxu0 0
      %1351 = vmatmul.mubr.bf16.gmra.mrb[0].mxu0 %v996
      %v1352 = vpop.f32.mrb[0].mxu0
      %v1353 = vadd.f32 %v1256, %v1352
      %v1354 = vpop.f32.mrb[0].mxu0
      %v1355 = vpop.f32.mrb[0].mxu0
      %v1356 = vadd.f32 %v1259, %v1355
      %v1357 = vpop.f32.mrb[0].mxu0
      %1358 = vdwg.mxu0
      %s1359 = sadd.s32 %s258, 6
      %s1360 = smul.u32 %s1359, 6
      %s1361 = smul.addr %s1360, 4
      %s1362 = scalar_lea.vmem %s227, %s1361
      %v1363 = vld [vmem:[%s1362] sm:$0xff]
      %v1364 = vld [vmem:[%s1362 + $0x8] sm:$0xf]
      %v1365 = vld [vmem:[%s1362 + $0xc] sm:$0xff]
      %v1366 = vld [vmem:[%s1362 + $0x14] sm:$0xf]
      %v1367 = vld [vmem:[%s1362 + $0x18] sm:$0xff]
      %v1368 = vld [vmem:[%s1362 + $0x20] sm:$0xf]
      %v1369 = vld [vmem:[%s1362 + $0x24] sm:$0xff]
      %v1370 = vld [vmem:[%s1362 + $0x2c] sm:$0xf]
      %v1371 = vld [vmem:[%s1362 + $0x30] sm:$0xff]
      %v1372 = vld [vmem:[%s1362 + $0x38] sm:$0xf]
      %v1373 = vld [vmem:[%s1362 + $0x3c] sm:$0xff]
      %v1374 = vld [vmem:[%s1362 + $0x44] sm:$0xf]
      %v1375 = vld [vmem:[%s1362 + $0x48] sm:$0xff]
      %v1376 = vld [vmem:[%s1362 + $0x50] sm:$0xf]
      %v1377 = vld [vmem:[%s1362 + $0x54] sm:$0xff]
      %v1378 = vld [vmem:[%s1362 + $0x5c] sm:$0xf]
      %v1379 = vld [vmem:[%s1362 + $0x60] sm:$0xff]
      %v1380 = vld [vmem:[%s1362 + $0x68] sm:$0xf]
      %v1381 = vld [vmem:[%s1362 + $0x6c] sm:$0xff]
      %v1382 = vld [vmem:[%s1362 + $0x74] sm:$0xf]
      %v1383 = vld [vmem:[%s1362 + $0x78] sm:$0xff]
      %v1384 = vld [vmem:[%s1362 + $0x80] sm:$0xf]
      %v1385 = vld [vmem:[%s1362 + $0x84] sm:$0xff]
      %v1386 = vld [vmem:[%s1362 + $0x8c] sm:$0xf]
      %v1387 = vld [vmem:[%s1362 + $0x90] sm:$0xff]
      %v1388 = vld [vmem:[%s1362 + $0x98] sm:$0xf]
      %v1389 = vld [vmem:[%s1362 + $0x9c] sm:$0xff]
      %v1390 = vld [vmem:[%s1362 + $0xa4] sm:$0xf]
      %v1391 = vld [vmem:[%s1362 + $0xa8] sm:$0xff]
      %v1392 = vld [vmem:[%s1362 + $0xb0] sm:$0xf]
      %v1393 = vld [vmem:[%s1362 + $0xb4] sm:$0xff]
      %v1394 = vld [vmem:[%s1362 + $0xbc] sm:$0xf]
      %s1395 = scalar_lea.vmem %s231, 384
      %v1396 = vld [vmem:[%s1395] sm:$0xf]
      %v1397 = vld [vmem:[%s1395 + $0x4] sm:$0xf]
      %v1398 = vld [vmem:[%s1395 + $0x8] sm:$0xf]
      %v1399 = vld [vmem:[%s1395 + $0xc] sm:$0xf]
      %v1400 = vld [vmem:[%s1395 + $0x10] sm:$0xf]
      %v1401 = vld [vmem:[%s1395 + $0x14] sm:$0xf]
      %v1402 = vld [vmem:[%s1395 + $0x18] sm:$0xf]
      %v1403 = vld [vmem:[%s1395 + $0x1c] sm:$0xf]
      %v1404 = vld [vmem:[%s1395 + $0x20] sm:$0xf]
      %v1405 = vld [vmem:[%s1395 + $0x24] sm:$0xf]
      %v1406 = vld [vmem:[%s1395 + $0x28] sm:$0xf]
      %v1407 = vld [vmem:[%s1395 + $0x2c] sm:$0xf]
      %v1408 = vld [vmem:[%s1395 + $0x30] sm:$0xf]
      %v1409 = vld [vmem:[%s1395 + $0x34] sm:$0xf]
      %v1410 = vld [vmem:[%s1395 + $0x38] sm:$0xf]
      %v1411 = vld [vmem:[%s1395 + $0x3c] sm:$0xf]
      %v1412 = vld [vmem:[%s1395 + $0x40] sm:$0xf]
      %v1413 = vld [vmem:[%s1395 + $0x44] sm:$0xf]
      %v1414 = vld [vmem:[%s1395 + $0x48] sm:$0xf]
      %v1415 = vld [vmem:[%s1395 + $0x4c] sm:$0xf]
      %v1416 = vld [vmem:[%s1395 + $0x50] sm:$0xf]
      %v1417 = vld [vmem:[%s1395 + $0x54] sm:$0xf]
      %v1418 = vld [vmem:[%s1395 + $0x58] sm:$0xf]
      %v1419 = vld [vmem:[%s1395 + $0x5c] sm:$0xf]
      %v1420 = vld [vmem:[%s1395 + $0x60] sm:$0xf]
      %v1421 = vld [vmem:[%s1395 + $0x64] sm:$0xf]
      %v1422 = vld [vmem:[%s1395 + $0x68] sm:$0xf]
      %v1423 = vld [vmem:[%s1395 + $0x6c] sm:$0xf]
      %v1424 = vld [vmem:[%s1395 + $0x70] sm:$0xf]
      %v1425 = vld [vmem:[%s1395 + $0x74] sm:$0xf]
      %v1426 = vld [vmem:[%s1395 + $0x78] sm:$0xf]
      %v1427 = vld [vmem:[%s1395 + $0x7c] sm:$0xf]
      %v1428 = vld [vmem:[%s1395 + $0x80] sm:$0xf]
      %v1429 = vld [vmem:[%s1395 + $0x84] sm:$0xf]
      %v1430 = vld [vmem:[%s1395 + $0x88] sm:$0xf]
      %v1431 = vld [vmem:[%s1395 + $0x8c] sm:$0xf]
      %v1432 = vld [vmem:[%s1395 + $0x90] sm:$0xf]
      %v1433 = vld [vmem:[%s1395 + $0x94] sm:$0xf]
      %v1434 = vld [vmem:[%s1395 + $0x98] sm:$0xf]
      %v1435 = vld [vmem:[%s1395 + $0x9c] sm:$0xf]
      %v1436 = vld [vmem:[%s1395 + $0xa0] sm:$0xf]
      %v1437 = vld [vmem:[%s1395 + $0xa4] sm:$0xf]
      %v1438 = vld [vmem:[%s1395 + $0xa8] sm:$0xf]
      %v1439 = vld [vmem:[%s1395 + $0xac] sm:$0xf]
      %v1440 = vld [vmem:[%s1395 + $0xb0] sm:$0xf]
      %v1441 = vld [vmem:[%s1395 + $0xb4] sm:$0xf]
      %v1442 = vld [vmem:[%s1395 + $0xb8] sm:$0xf]
      %v1443 = vld [vmem:[%s1395 + $0xbc] sm:$0xf]
      %v1476 = vunpack.c.l.b16 %v1363
      %v1477 = vunpack.c.h.b16 %v1363
      %v1478 = vunpack.c.l.b16 %v1364
      %v1479 = vunpack.c.l.b16 %v1365
      %v1480 = vunpack.c.h.b16 %v1365
      %v1481 = vunpack.c.l.b16 %v1366
      %v1482 = vunpack.c.l.b16 %v1367
      %v1483 = vunpack.c.h.b16 %v1367
      %v1484 = vunpack.c.l.b16 %v1368
      %v1485 = vunpack.c.l.b16 %v1369
      %v1486 = vunpack.c.h.b16 %v1369
      %v1487 = vunpack.c.l.b16 %v1370
      %v1488 = vunpack.c.l.b16 %v1371
      %v1489 = vunpack.c.h.b16 %v1371
      %v1490 = vunpack.c.l.b16 %v1372
      %v1491 = vunpack.c.l.b16 %v1373
      %v1492 = vunpack.c.h.b16 %v1373
      %v1493 = vunpack.c.l.b16 %v1374
      %v1494 = vunpack.c.l.b16 %v1375
      %v1495 = vunpack.c.h.b16 %v1375
      %v1496 = vunpack.c.l.b16 %v1376
      %v1497 = vunpack.c.l.b16 %v1377
      %v1498 = vunpack.c.h.b16 %v1377
      %v1499 = vunpack.c.l.b16 %v1378
      %v1500 = vunpack.c.l.b16 %v1379
      %v1501 = vunpack.c.h.b16 %v1379
      %v1502 = vunpack.c.l.b16 %v1380
      %v1503 = vunpack.c.l.b16 %v1381
      %v1504 = vunpack.c.h.b16 %v1381
      %v1505 = vunpack.c.l.b16 %v1382
      %v1506 = vunpack.c.l.b16 %v1383
      %v1507 = vunpack.c.h.b16 %v1383
      %v1508 = vunpack.c.l.b16 %v1384
      %v1509 = vunpack.c.l.b16 %v1385
      %v1510 = vunpack.c.h.b16 %v1385
      %v1511 = vunpack.c.l.b16 %v1386
      %v1512 = vunpack.c.l.b16 %v1387
      %v1513 = vunpack.c.h.b16 %v1387
      %v1514 = vunpack.c.l.b16 %v1388
      %v1515 = vunpack.c.l.b16 %v1389
      %v1516 = vunpack.c.h.b16 %v1389
      %v1517 = vunpack.c.l.b16 %v1390
      %v1518 = vunpack.c.l.b16 %v1391
      %v1519 = vunpack.c.h.b16 %v1391
      %v1520 = vunpack.c.l.b16 %v1392
      %v1521 = vunpack.c.l.b16 %v1393
      %v1522 = vunpack.c.h.b16 %v1393
      %v1523 = vunpack.c.l.b16 %v1394
      %v1524 = vpack.c.b16 %v1479, %v1476
      %v1525 = vpack.c.b16 %v1480, %v1477
      %v1526 = vpack.c.b16 %v1481, %v1478
      %v1527 = vpack.c.b16 %v1485, %v1482
      %v1528 = vpack.c.b16 %v1486, %v1483
      %v1529 = vpack.c.b16 %v1487, %v1484
      %v1530 = vpack.c.b16 %v1491, %v1488
      %v1531 = vpack.c.b16 %v1492, %v1489
      %v1532 = vpack.c.b16 %v1493, %v1490
      %v1533 = vpack.c.b16 %v1497, %v1494
      %v1534 = vpack.c.b16 %v1498, %v1495
      %v1535 = vpack.c.b16 %v1499, %v1496
      %v1536 = vpack.c.b16 %v1503, %v1500
      %v1537 = vpack.c.b16 %v1504, %v1501
      %v1538 = vpack.c.b16 %v1505, %v1502
      %v1539 = vpack.c.b16 %v1509, %v1506
      %v1540 = vpack.c.b16 %v1510, %v1507
      %v1541 = vpack.c.b16 %v1511, %v1508
      %v1542 = vpack.c.b16 %v1515, %v1512
      %v1543 = vpack.c.b16 %v1516, %v1513
      %v1544 = vpack.c.b16 %v1517, %v1514
      %v1545 = vpack.c.b16 %v1521, %v1518
      %v1546 = vpack.c.b16 %v1522, %v1519
      %v1547 = vpack.c.b16 %v1523, %v1520
      %v1620 = vunpack.c.l.b16 %v1396
      %v1621 = vunpack.c.l.b16 %v1397
      %v1622 = vunpack.c.l.b16 %v1398
      %v1623 = vunpack.c.l.b16 %v1399
      %v1624 = vunpack.c.l.b16 %v1400
      %v1625 = vunpack.c.l.b16 %v1401
      %v1626 = vunpack.c.l.b16 %v1402
      %v1627 = vunpack.c.l.b16 %v1403
      %v1628 = vunpack.c.l.b16 %v1404
      %v1629 = vunpack.c.l.b16 %v1405
      %v1630 = vunpack.c.l.b16 %v1406
      %v1631 = vunpack.c.l.b16 %v1407
      %v1632 = vunpack.c.l.b16 %v1408
      %v1633 = vunpack.c.l.b16 %v1409
      %v1634 = vunpack.c.l.b16 %v1410
      %v1635 = vunpack.c.l.b16 %v1411
      %v1636 = vunpack.c.l.b16 %v1412
      %v1637 = vunpack.c.l.b16 %v1413
      %v1638 = vunpack.c.l.b16 %v1414
      %v1639 = vunpack.c.l.b16 %v1415
      %v1640 = vunpack.c.l.b16 %v1416
      %v1641 = vunpack.c.l.b16 %v1417
      %v1642 = vunpack.c.l.b16 %v1418
      %v1643 = vunpack.c.l.b16 %v1419
      %v1644 = vunpack.c.l.b16 %v1420
      %v1645 = vunpack.c.l.b16 %v1421
      %v1646 = vunpack.c.l.b16 %v1422
      %v1647 = vunpack.c.l.b16 %v1423
      %v1648 = vunpack.c.l.b16 %v1424
      %v1649 = vunpack.c.l.b16 %v1425
      %v1650 = vunpack.c.l.b16 %v1426
      %v1651 = vunpack.c.l.b16 %v1427
      %v1652 = vunpack.c.l.b16 %v1428
      %v1653 = vunpack.c.l.b16 %v1429
      %v1654 = vunpack.c.l.b16 %v1430
      %v1655 = vunpack.c.l.b16 %v1431
      %v1656 = vunpack.c.l.b16 %v1432
      %v1657 = vunpack.c.l.b16 %v1433
      %v1658 = vunpack.c.l.b16 %v1434
      %v1659 = vunpack.c.l.b16 %v1435
      %v1660 = vunpack.c.l.b16 %v1436
      %v1661 = vunpack.c.l.b16 %v1437
      %v1662 = vunpack.c.l.b16 %v1438
      %v1663 = vunpack.c.l.b16 %v1439
      %v1664 = vunpack.c.l.b16 %v1440
      %v1665 = vunpack.c.l.b16 %v1441
      %v1666 = vunpack.c.l.b16 %v1442
      %v1667 = vunpack.c.l.b16 %v1443
      %v1668 = vpack.c.b16 %v1621, %v1620
      %v1669 = vpack.c.b16 %v1623, %v1622
      %v1670 = vpack.c.b16 %v1625, %v1624
      %v1671 = vpack.c.b16 %v1627, %v1626
      %v1672 = vpack.c.b16 %v1629, %v1628
      %v1673 = vpack.c.b16 %v1631, %v1630
      %v1674 = vpack.c.b16 %v1633, %v1632
      %v1675 = vpack.c.b16 %v1635, %v1634
      %v1676 = vpack.c.b16 %v1637, %v1636
      %v1677 = vpack.c.b16 %v1639, %v1638
      %v1678 = vpack.c.b16 %v1641, %v1640
      %v1679 = vpack.c.b16 %v1643, %v1642
      %v1680 = vpack.c.b16 %v1645, %v1644
      %v1681 = vpack.c.b16 %v1647, %v1646
      %v1682 = vpack.c.b16 %v1649, %v1648
      %v1683 = vpack.c.b16 %v1651, %v1650
      %v1684 = vpack.c.b16 %v1653, %v1652
      %v1685 = vpack.c.b16 %v1655, %v1654
      %v1686 = vpack.c.b16 %v1657, %v1656
      %v1687 = vpack.c.b16 %v1659, %v1658
      %v1688 = vpack.c.b16 %v1661, %v1660
      %v1689 = vpack.c.b16 %v1663, %v1662
      %v1690 = vpack.c.b16 %v1665, %v1664
      %v1691 = vpack.c.b16 %v1667, %v1666
      %1716 = vmatprep.subr.bf16.mxu0 0
      %1717 = vmatpush1.bf16.msra.mxu0 %v1668
      %1718 = vmatprep.subr.bf16.mxu0 0
      %1719 = vmatpush1.bf16.msra.mxu0 %v1669
      %1720 = vmatprep.subr.bf16.mxu0 0
      %1721 = vmatpush1.bf16.msra.mxu0 %v1670
      %1722 = vmatprep.subr.bf16.mxu0 0
      %1723 = vmatpush1.bf16.msra.mxu0 %v1671
      %1724 = vmatprep.subr.bf16.mxu0 0
      %1725 = vmatpush1.bf16.msra.mxu0 %v1672
      %1726 = vmatprep.subr.bf16.mxu0 0
      %1727 = vmatpush1.bf16.msra.mxu0 %v1673
      %1728 = vmatprep.subr.bf16.mxu0 0
      %1729 = vmatpush1.bf16.msra.mxu0 %v1674
      %1730 = vmatprep.subr.bf16.mxu0 0
      %1731 = vmatpush1.bf16.msra.mxu0 %v1675
      %1732 = vmatprep.subr.bf16.mxu0 0
      %1733 = vmatpush1.bf16.msra.mxu0 %v1676
      %1734 = vmatprep.subr.bf16.mxu0 0
      %1735 = vmatpush1.bf16.msra.mxu0 %v1677
      %1736 = vmatprep.subr.bf16.mxu0 0
      %1737 = vmatpush1.bf16.msra.mxu0 %v1678
      %1738 = vmatprep.subr.bf16.mxu0 0
      %1739 = vmatpush1.bf16.msra.mxu0 %v1679
      %1740 = vmatprep.subr.bf16.mxu0 0
      %1741 = vmatpush1.bf16.msra.mxu0 %v1680
      %1742 = vmatprep.subr.bf16.mxu0 0
      %1743 = vmatpush1.bf16.msra.mxu0 %v1681
      %1744 = vmatprep.subr.bf16.mxu0 0
      %1745 = vmatpush1.bf16.msra.mxu0 %v1682
      %1746 = vmatprep.subr.bf16.mxu0 0
      %1747 = vmatpush1.bf16.msra.mxu0 %v1683
      %1748 = vmatprep.mubr.bf16.mxu0 %v1525
      %1749 = vmatmul.mubr.bf16.gmra.mrb[0].mxu0 %v1524
      %v1750 = vpop.f32.mrb[0].mxu0
      %v1751 = vadd.f32 0.0, %v1750
      %v1752 = vpop.f32.mrb[0].mxu0
      %v1753 = vpop.f32.mrb[0].mxu0
      %v1754 = vadd.f32 0.0, %v1753
      %v1755 = vpop.f32.mrb[0].mxu0
      %1756 = vmatprep.mubr.bf16.mxu0 %v1528
      %1757 = vmatmul.mubr.bf16.gmra.mrb[0].mxu0 %v1527
      %v1758 = vpop.f32.mrb[0].mxu0
      %v1759 = vadd.f32 0.0, %v1758
      %v1760 = vpop.f32.mrb[0].mxu0
      %v1761 = vpop.f32.mrb[0].mxu0
      %v1762 = vadd.f32 0.0, %v1761
      %v1763 = vpop.f32.mrb[0].mxu0
      %1764 = vmatprep.mubr.bf16.mxu0 %v1531
      %1765 = vmatmul.mubr.bf16.gmra.mrb[0].mxu0 %v1530
      %v1766 = vpop.f32.mrb[0].mxu0
      %v1767 = vadd.f32 0.0, %v1766
      %v1768 = vpop.f32.mrb[0].mxu0
      %v1769 = vpop.f32.mrb[0].mxu0
      %v1770 = vadd.f32 0.0, %v1769
      %v1771 = vpop.f32.mrb[0].mxu0
      %1772 = vmatprep.mubr.bf16.mxu0 %v1534
      %1773 = vmatmul.mubr.bf16.gmra.mrb[0].mxu0 %v1533
      %v1774 = vpop.f32.mrb[0].mxu0
      %v1775 = vadd.f32 0.0, %v1774
      %v1776 = vpop.f32.mrb[0].mxu0
      %v1777 = vpop.f32.mrb[0].mxu0
      %v1778 = vadd.f32 0.0, %v1777
      %v1779 = vpop.f32.mrb[0].mxu0
      %1780 = vmatprep.mubr.bf16.mxu0 %v1537
      %1781 = vmatmul.mubr.bf16.gmra.mrb[0].mxu0 %v1536
      %v1782 = vpop.f32.mrb[0].mxu0
      %v1783 = vadd.f32 0.0, %v1782
      %v1784 = vpop.f32.mrb[0].mxu0
      %v1785 = vpop.f32.mrb[0].mxu0
      %v1786 = vadd.f32 0.0, %v1785
      %v1787 = vpop.f32.mrb[0].mxu0
      %1788 = vmatprep.mubr.bf16.mxu0 %v1540
      %1789 = vmatmul.mubr.bf16.gmra.mrb[0].mxu0 %v1539
      %v1790 = vpop.f32.mrb[0].mxu0
      %v1791 = vadd.f32 0.0, %v1790
      %v1792 = vpop.f32.mrb[0].mxu0
      %v1793 = vpop.f32.mrb[0].mxu0
      %v1794 = vadd.f32 0.0, %v1793
      %v1795 = vpop.f32.mrb[0].mxu0
      %1796 = vmatprep.mubr.bf16.mxu0 %v1543
      %1797 = vmatmul.mubr.bf16.gmra.mrb[0].mxu0 %v1542
      %v1798 = vpop.f32.mrb[0].mxu0
      %v1799 = vadd.f32 0.0, %v1798
      %v1800 = vpop.f32.mrb[0].mxu0
      %v1801 = vpop.f32.mrb[0].mxu0
      %v1802 = vadd.f32 0.0, %v1801
      %v1803 = vpop.f32.mrb[0].mxu0
      %1804 = vmatprep.mubr.bf16.mxu0 %v1546
      %1805 = vmatmul.mubr.bf16.gmra.mrb[0].mxu0 %v1545
      %v1806 = vpop.f32.mrb[0].mxu0
      %v1807 = vadd.f32 0.0, %v1806
      %v1808 = vpop.f32.mrb[0].mxu0
      %v1809 = vpop.f32.mrb[0].mxu0
      %v1810 = vadd.f32 0.0, %v1809
      %v1811 = vpop.f32.mrb[0].mxu0
      %1812 = vdwg.mxu0
      %1813 = vmatprep.subr.bf16.mxu0 0
      %1814 = vmatpush1.bf16.msra.mxu0 %v1684
      %1815 = vmatprep.subr.bf16.mxu0 0
      %1816 = vmatpush1.bf16.msra.mxu0 %v1685
      %1817 = vmatprep.subr.bf16.mxu0 0
      %1818 = vmatpush1.bf16.msra.mxu0 %v1686
      %1819 = vmatprep.subr.bf16.mxu0 0
      %1820 = vmatpush1.bf16.msra.mxu0 %v1687
      %1821 = vmatprep.subr.bf16.mxu0 0
      %1822 = vmatpush1.bf16.msra.mxu0 %v1688
      %1823 = vmatprep.subr.bf16.mxu0 0
      %1824 = vmatpush1.bf16.msra.mxu0 %v1689
      %1825 = vmatprep.subr.bf16.mxu0 0
      %1826 = vmatpush1.bf16.msra.mxu0 %v1690
      %1827 = vmatprep.subr.bf16.mxu0 0
      %1828 = vmatpush1.bf16.msra.mxu0 %v1691
      %1829 = vmatprep.subr.bf16.mxu0 0
      %1830 = vmatpush1.bf16.msra.mxu0 0
      %1831 = vmatprep.subr.bf16.mxu0 0
      %1832 = vmatpush1.bf16.msra.mxu0 0
      %1833 = vmatprep.subr.bf16.mxu0 0
      %1834 = vmatpush1.bf16.msra.mxu0 0
      %1835 = vmatprep.subr.bf16.mxu0 0
      %1836 = vmatpush1.bf16.msra.mxu0 0
      %1837 = vmatprep.subr.bf16.mxu0 0
      %1838 = vmatpush1.bf16.msra.mxu0 0
      %1839 = vmatprep.subr.bf16.mxu0 0
      %1840 = vmatpush1.bf16.msra.mxu0 0
      %1841 = vmatprep.subr.bf16.mxu0 0
      %1842 = vmatpush1.bf16.msra.mxu0 0
      %1843 = vmatprep.subr.bf16.mxu0 0
      %1844 = vmatpush1.bf16.msra.mxu0 0
      %1845 = vmatprep.mubr.bf16.mxu0 0
      %1846 = vmatmul.mubr.bf16.gmra.mrb[0].mxu0 %v1526
      %v1847 = vpop.f32.mrb[0].mxu0
      %v1848 = vadd.f32 %v1751, %v1847
      %v1849 = vpop.f32.mrb[0].mxu0
      %v1850 = vpop.f32.mrb[0].mxu0
      %v1851 = vadd.f32 %v1754, %v1850
      %v1852 = vpop.f32.mrb[0].mxu0
      %1853 = vmatprep.mubr.bf16.mxu0 0
      %1854 = vmatmul.mubr.bf16.gmra.mrb[0].mxu0 %v1529
      %v1855 = vpop.f32.mrb[0].mxu0
      %v1856 = vadd.f32 %v1759, %v1855
      %v1857 = vpop.f32.mrb[0].mxu0
      %v1858 = vpop.f32.mrb[0].mxu0
      %v1859 = vadd.f32 %v1762, %v1858
      %v1860 = vpop.f32.mrb[0].mxu0
      %1861 = vmatprep.mubr.bf16.mxu0 0
      %1862 = vmatmul.mubr.bf16.gmra.mrb[0].mxu0 %v1532
      %v1863 = vpop.f32.mrb[0].mxu0
      %v1864 = vadd.f32 %v1767, %v1863
      %v1865 = vpop.f32.mrb[0].mxu0
      %v1866 = vpop.f32.mrb[0].mxu0
      %v1867 = vadd.f32 %v1770, %v1866
      %v1868 = vpop.f32.mrb[0].mxu0
      %1869 = vmatprep.mubr.bf16.mxu0 0
      %1870 = vmatmul.mubr.bf16.gmra.mrb[0].mxu0 %v1535
      %v1871 = vpop.f32.mrb[0].mxu0
      %v1872 = vadd.f32 %v1775, %v1871
      %v1873 = vpop.f32.mrb[0].mxu0
      %v1874 = vpop.f32.mrb[0].mxu0
      %v1875 = vadd.f32 %v1778, %v1874
      %v1876 = vpop.f32.mrb[0].mxu0
      %1877 = vmatprep.mubr.bf16.mxu0 0
      %1878 = vmatmul.mubr.bf16.gmra.mrb[0].mxu0 %v1538
      %v1879 = vpop.f32.mrb[0].mxu0
      %v1880 = vadd.f32 %v1783, %v1879
      %v1881 = vpop.f32.mrb[0].mxu0
      %v1882 = vpop.f32.mrb[0].mxu0
      %v1883 = vadd.f32 %v1786, %v1882
      %v1884 = vpop.f32.mrb[0].mxu0
      %1885 = vmatprep.mubr.bf16.mxu0 0
      %1886 = vmatmul.mubr.bf16.gmra.mrb[0].mxu0 %v1541
      %v1887 = vpop.f32.mrb[0].mxu0
      %v1888 = vadd.f32 %v1791, %v1887
      %v1889 = vpop.f32.mrb[0].mxu0
      %v1890 = vpop.f32.mrb[0].mxu0
      %v1891 = vadd.f32 %v1794, %v1890
      %v1892 = vpop.f32.mrb[0].mxu0
      %1893 = vmatprep.mubr.bf16.mxu0 0
      %1894 = vmatmul.mubr.bf16.gmra.mrb[0].mxu0 %v1544
      %v1895 = vpop.f32.mrb[0].mxu0
      %v1896 = vadd.f32 %v1799, %v1895
      %v1897 = vpop.f32.mrb[0].mxu0
      %v1898 = vpop.f32.mrb[0].mxu0
      %v1899 = vadd.f32 %v1802, %v1898
      %v1900 = vpop.f32.mrb[0].mxu0
      %1901 = vmatprep.mubr.bf16.mxu0 0
      %1902 = vmatmul.mubr.bf16.gmra.mrb[0].mxu0 %v1547
      %v1903 = vpop.f32.mrb[0].mxu0
      %v1904 = vadd.f32 %v1807, %v1903
      %v1905 = vpop.f32.mrb[0].mxu0
      %v1906 = vpop.f32.mrb[0].mxu0
      %v1907 = vadd.f32 %v1810, %v1906
      %v1908 = vpop.f32.mrb[0].mxu0
      %1909 = vdwg.mxu0
      %v1910 = vadd.f32 %v1297, %v1848
      %v1911 = vadd.f32 %v1300, %v1851
      %v1912 = vadd.f32 %v1305, %v1856
      %v1913 = vadd.f32 %v1308, %v1859
      %v1914 = vadd.f32 %v1313, %v1864
      %v1915 = vadd.f32 %v1316, %v1867
      %v1916 = vadd.f32 %v1321, %v1872
      %v1917 = vadd.f32 %v1324, %v1875
      %v1918 = vadd.f32 %v1329, %v1880
      %v1919 = vadd.f32 %v1332, %v1883
      %v1920 = vadd.f32 %v1337, %v1888
      %v1921 = vadd.f32 %v1340, %v1891
      %v1922 = vadd.f32 %v1345, %v1896
      %v1923 = vadd.f32 %v1348, %v1899
      %v1924 = vadd.f32 %v1353, %v1904
      %v1925 = vadd.f32 %v1356, %v1907
      %v1926 = vpack.c.bf16 %v1911, %v1910
      %v1927 = vpack.c.bf16 %v1913, %v1912
      %v1928 = vpack.c.bf16 %v1915, %v1914
      %v1929 = vpack.c.bf16 %v1917, %v1916
      %v1930 = vpack.c.bf16 %v1919, %v1918
      %v1931 = vpack.c.bf16 %v1921, %v1920
      %v1932 = vpack.c.bf16 %v1923, %v1922
      %v1933 = vpack.c.bf16 %v1925, %v1924
      %v1942 = vunpack.c.l.b16 %v1926
      %v1943 = vunpack.c.h.b16 %v1926
      %v1944 = vunpack.c.l.b16 %v1927
      %v1945 = vunpack.c.h.b16 %v1927
      %v1946 = vunpack.c.l.b16 %v1928
      %v1947 = vunpack.c.h.b16 %v1928
      %v1948 = vunpack.c.l.b16 %v1929
      %v1949 = vunpack.c.h.b16 %v1929
      %v1950 = vunpack.c.l.b16 %v1930
      %v1951 = vunpack.c.h.b16 %v1930
      %v1952 = vunpack.c.l.b16 %v1931
      %v1953 = vunpack.c.h.b16 %v1931
      %v1954 = vunpack.c.l.b16 %v1932
      %v1955 = vunpack.c.h.b16 %v1932
      %v1956 = vunpack.c.l.b16 %v1933
      %v1957 = vunpack.c.h.b16 %v1933
      %v1958 = vpack.c.b16 %v1942, %v1942
      %v1959 = vpack.c.b16 %v1943, %v1943
      %v1960 = vpack.c.b16 %v1944, %v1944
      %v1961 = vpack.c.b16 %v1945, %v1945
      %v1962 = vpack.c.b16 %v1946, %v1946
      %v1963 = vpack.c.b16 %v1947, %v1947
      %v1964 = vpack.c.b16 %v1948, %v1948
      %v1965 = vpack.c.b16 %v1949, %v1949
      %v1966 = vpack.c.b16 %v1950, %v1950
      %v1967 = vpack.c.b16 %v1951, %v1951
      %v1968 = vpack.c.b16 %v1952, %v1952
      %v1969 = vpack.c.b16 %v1953, %v1953
      %v1970 = vpack.c.b16 %v1954, %v1954
      %v1971 = vpack.c.b16 %v1955, %v1955
      %v1972 = vpack.c.b16 %v1956, %v1956
      %v1973 = vpack.c.b16 %v1957, %v1957
      %1990 = vst [vmem:[%s244] sm:$0xf] %v1958
      %1991 = vst [vmem:[%s244 + $0x4] sm:$0xf] %v1959
      %1992 = vst [vmem:[%s244 + $0x8] sm:$0xf] %v1960
      %1993 = vst [vmem:[%s244 + $0xc] sm:$0xf] %v1961
      %1994 = vst [vmem:[%s244 + $0x10] sm:$0xf] %v1962
      %1995 = vst [vmem:[%s244 + $0x14] sm:$0xf] %v1963
      %1996 = vst [vmem:[%s244 + $0x18] sm:$0xf] %v1964
      %1997 = vst [vmem:[%s244 + $0x1c] sm:$0xf] %v1965
      %1998 = vst [vmem:[%s244 + $0x20] sm:$0xf] %v1966
      %1999 = vst [vmem:[%s244 + $0x24] sm:$0xf] %v1967
      %2000 = vst [vmem:[%s244 + $0x28] sm:$0xf] %v1968
      %2001 = vst [vmem:[%s244 + $0x2c] sm:$0xf] %v1969
      %2002 = vst [vmem:[%s244 + $0x30] sm:$0xf] %v1970
      %2003 = vst [vmem:[%s244 + $0x34] sm:$0xf] %v1971
      %2004 = vst [vmem:[%s244 + $0x38] sm:$0xf] %v1972
      %2005 = vst [vmem:[%s244 + $0x3c] sm:$0xf] %v1973
      %v2006 = vadd.f32 %v1910, %v1911
      %v2007 = vadd.f32 %v2006, %v1912
      %v2008 = vadd.f32 %v2007, %v1913
      %v2009 = vadd.f32 %v2008, %v1914
      %v2010 = vadd.f32 %v2009, %v1915
      %v2011 = vadd.f32 %v2010, %v1916
      %v2012 = vadd.f32 %v2011, %v1917
      %v2013 = vadd.f32 %v2012, %v1918
      %v2014 = vadd.f32 %v2013, %v1919
      %v2015 = vadd.f32 %v2014, %v1920
      %v2016 = vadd.f32 %v2015, %v1921
      %v2017 = vadd.f32 %v2016, %v1922
      %v2018 = vadd.f32 %v2017, %v1923
      %v2019 = vadd.f32 %v2018, %v1924
      %v2020 = vadd.f32 %v2019, %v1925
      %v2021 = vrot.slane %v2020, 4
      %v2022 = vadd.f32 %v2020, %v2021
      %v2023 = vrot.slane %v2022, 2
      %v2024 = vadd.f32 %v2022, %v2023
      %v2025 = vrot.slane %v2024, 1
      %v2026 = vadd.f32 %v2024, %v2025
      %2027 = vst [vmem:[%s256] sm:$0x1] %v2026
      %v2028 = vmul.f32 %v1910, %v1910
      %v2029 = vmul.f32 %v1911, %v1911
      %v2030 = vmul.f32 %v1912, %v1912
      %v2031 = vmul.f32 %v1913, %v1913
      %v2032 = vmul.f32 %v1914, %v1914
      %v2033 = vmul.f32 %v1915, %v1915
      %v2034 = vmul.f32 %v1916, %v1916
      %v2035 = vmul.f32 %v1917, %v1917
      %v2036 = vmul.f32 %v1918, %v1918
      %v2037 = vmul.f32 %v1919, %v1919
      %v2038 = vmul.f32 %v1920, %v1920
      %v2039 = vmul.f32 %v1921, %v1921
      %v2040 = vmul.f32 %v1922, %v1922
      %v2041 = vmul.f32 %v1923, %v1923
      %v2042 = vmul.f32 %v1924, %v1924
      %v2043 = vmul.f32 %v1925, %v1925
      %v2044 = vadd.f32 %v2028, %v2029
      %v2045 = vadd.f32 %v2044, %v2030
      %v2046 = vadd.f32 %v2045, %v2031
      %v2047 = vadd.f32 %v2046, %v2032
      %v2048 = vadd.f32 %v2047, %v2033
      %v2049 = vadd.f32 %v2048, %v2034
      %v2050 = vadd.f32 %v2049, %v2035
      %v2051 = vadd.f32 %v2050, %v2036
      %v2052 = vadd.f32 %v2051, %v2037
      %v2053 = vadd.f32 %v2052, %v2038
      %v2054 = vadd.f32 %v2053, %v2039
      %v2055 = vadd.f32 %v2054, %v2040
      %v2056 = vadd.f32 %v2055, %v2041
      %v2057 = vadd.f32 %v2056, %v2042
      %v2058 = vadd.f32 %v2057, %v2043
      %v2059 = vrot.slane %v2058, 4
      %v2060 = vadd.f32 %v2058, %v2059
      %v2061 = vrot.slane %v2060, 2
      %v2062 = vadd.f32 %v2060, %v2061
      %v2063 = vrot.slane %v2062, 1
      %v2064 = vadd.f32 %v2062, %v2063
      %2065 = vst [vmem:[%s256 + $0x1] sm:$0x1] %v2064
      %s2066 = smul.u32 8, %s21
      %p2067 = scmp.lt.s32.totalorder %s20, 1
      %s2068 = scalar_select %p2067, %s20, 1
      %p2069 = scmp.lt.s32.totalorder %s2066, 15
      %s2070 = scalar_select %p2069, %s2066, 15
      %p2071 = scmp.lt.s32.totalorder %s22, 0
      %s2072 = scalar_select %p2071, %s22, 0
      %s2073 = smul.addr %s2070, 2
      %s2074 = sadd.s32 %s2072, %s2073
      %s2075 = smul.addr %s2068, 32
      %s2076 = sadd.s32 %s2074, %s2075
      %s2077 = smul.addr %s2076, 4
      %s2078 = scalar_lea.vmem %s2, %s2077
      %p2079 = scmp.lt.s32.totalorder %s20, 1
      %s2080 = scalar_select %p2079, %s20, 1
      %p2081 = scmp.lt.s32.totalorder %s21, 1
      %s2082 = scalar_select %p2081, %s21, 1
      %p2083 = scmp.lt.s32.totalorder %s22, 0
      %s2084 = scalar_select %p2083, %s22, 0
      %s2085 = sadd.s32 %s2084, %s2082
      %s2086 = smul.addr %s2080, 2
      %s2087 = sadd.s32 %s2085, %s2086
      %s2088 = smul.addr %s2087, 2
      %s2089 = scalar_lea.vmem %s3, %s2088
      // Predicated region
      $region29: #{double_conv2_forward.6} parent=27 // pred_check
        %p2090 = pneg %p108
      $region30: #{double_conv2_forward.6} parent=27 // pred_check_branch
        %2092 = sbr.rel (%p2090) target = $region32
      $region31: #{double_conv2_forward.6} parent=27 // pred_region
        %s2093 = smul.u32 8, %s21
      $region32: #{double_conv2_forward.6} parent=27 // pred_fallthru
        _
      // Predicated region
      $region33: #{double_conv2_forward.6} parent=27 // pred_check
        %p2094 = pneg %p138
      $region34: #{double_conv2_forward.6} parent=27 // pred_check_branch
        %2096 = sbr.rel (%p2094) target = $region36
      $region35: #{double_conv2_forward.6} parent=27 // pred_region
        _
      $region36: #{double_conv2_forward.6} parent=27 // pred_fallthru
        _
    $region28: #{double_conv2_forward.6} parent=5 // pred_fallthru
      _
    %p2097 = scmp.le.s32.totalorder 2, %s10
    // Predicated region
    $region37: #{double_conv2_forward.6} parent=5 // pred_check
      %p2098 = pneg %p2097
    $region38: #{double_conv2_forward.6} parent=5 // pred_check_branch
      %2100 = sbr.rel (%p2098) target = $region40
    $region39: #{double_conv2_forward.6} parent=5 // pred_region
      %s2101 = ssub.s32 %s10, 2
      // Predicated region
      $region41: #{double_conv2_forward.6} parent=39 // pred_check
        %p2102 = pneg %p114
      $region42: #{double_conv2_forward.6} parent=39 // pred_check_branch
        %2104 = sbr.rel (%p2102) target = $region44
      $region43: #{double_conv2_forward.6} parent=39 // pred_region
        %s2105 = smul.u32 8, %s24
        %p2106 = scmp.lt.s32.totalorder %s23, 1
        %s2107 = scalar_select %p2106, %s23, 1
        %p2108 = scmp.lt.s32.totalorder %s2105, 15
        %s2109 = scalar_select %p2108, %s2105, 15
        %p2110 = scmp.lt.s32.totalorder %s25, 0
        %s2111 = scalar_select %p2110, %s25, 0
        %s2112 = smul.addr %s2109, 2
        %s2113 = sadd.s32 %s2111, %s2112
        %s2114 = smul.addr %s2107, 32
        %s2115 = sadd.s32 %s2113, %s2114
        %s2116 = smul.addr %s2115, 4
        %s2117 = scalar_lea.vmem %s2, %s2116
      $region44: #{double_conv2_forward.6} parent=39 // pred_fallthru
        _
      // Predicated region
      $region45: #{double_conv2_forward.6} parent=39 // pred_check
        %p2118 = pneg %p144
      $region46: #{double_conv2_forward.6} parent=39 // pred_check_branch
        %2120 = sbr.rel (%p2118) target = $region48
      $region47: #{double_conv2_forward.6} parent=39 // pred_region
        %p2121 = scmp.lt.s32.totalorder %s23, 1
        %s2122 = scalar_select %p2121, %s23, 1
        %p2123 = scmp.lt.s32.totalorder %s24, 1
        %s2124 = scalar_select %p2123, %s24, 1
        %p2125 = scmp.lt.s32.totalorder %s25, 0
        %s2126 = scalar_select %p2125, %s25, 0
        %s2127 = sadd.s32 %s2126, %s2124
        %s2128 = smul.addr %s2122, 2
        %s2129 = sadd.s32 %s2127, %s2128
        %s2130 = smul.addr %s2129, 2
        %s2131 = scalar_lea.vmem %s3, %s2130
      $region48: #{double_conv2_forward.6} parent=39 // pred_fallthru
        _
    $region40: #{double_conv2_forward.6} parent=5 // pred_fallthru
      _
  $region6: #{double_conv2_forward.6} parent=0 // loop_footer
    %s14 = sadd.s32 1, %s10
  $region7: #{double_conv2_forward.6} parent=0 // loop_footer_branch
    %9 = sbr.rel target = $region3
  $region8: #{double_conv2_forward.6} parent=0 // loop_exit
    _

</llo_original>
